<compile_context>
chip_gen: v7x
topology: tpu7x:2x2x1
jax: 0.10.0
libtpu: 0.0.40
codegen_flags: <defaults>
</compile_context>

<pallas_src>
import functools

import jax
import jax.numpy as jnp
from jax.experimental import pallas as pl
from jax.experimental.pallas import tpu as pltpu


# (out_channels, kernel, stride) for the three convs of the torch module.
CONV_CFGS = ((32, 8, 4), (64, 4, 2), (64, 3, 1))


def _round_up(x, m):
    return -(-x // m) * m


def _conv_output_hw(h, w):
    for _, k, s in CONV_CFGS:
        h = (h - k) // s + 1
        w = (w - k) // s + 1
    return h, w


# ----------------------------------------------------------------------------
# Pallas kernels
# ----------------------------------------------------------------------------
def _matmul_bias_act_kernel(x_ref, w_ref, b_ref, o_ref, *, relu):
    # bf16 operands on the MXU, f32 accumulation, f32 epilogue.
    acc = jnp.dot(x_ref[...], w_ref[...], preferred_element_type=jnp.float32)
    acc = acc + b_ref[...]                     # (1, Np) broadcasts over rows
    if relu:
        acc = jnp.maximum(acc, 0.0)
    o_ref[...] = acc.astype(o_ref.dtype)


def _fc_chain_kernel(x_ref, w1_ref, b1_ref, w2_ref, b2_ref, w3_ref, b3_ref, o_ref):
    # fc1 -> ReLU -> fc2 -> ReLU -> fc3 fully fused; intermediates never leave
    # VMEM/vregs (no HBM round-trips between layers).
    h = jnp.dot(x_ref[...], w1_ref[...], preferred_element_type=jnp.float32)
    h = jnp.maximum(h + b1_ref[...], 0.0).astype(jnp.bfloat16)
    h = jnp.dot(h, w2_ref[...], preferred_element_type=jnp.float32)
    h = jnp.maximum(h + b2_ref[...], 0.0).astype(jnp.bfloat16)
    h = jnp.dot(h, w3_ref[...], preferred_element_type=jnp.float32)
    o_ref[...] = (h + b3_ref[...]).astype(o_ref.dtype)


# ----------------------------------------------------------------------------
# Pallas wrappers
# ----------------------------------------------------------------------------
def matmul_bias_act(x, w, b, *, relu, out_dtype):
    """x: (M, K); w: (Kp, Np) pre-padded bf16; b: (1, Np) f32. Returns (Mp, Np)."""
    M, K = x.shape
    Kp, Np = w.shape
    Mp = _round_up(M, 16)                      # bf16 sublane packing
    xp = x.astype(jnp.bfloat16)
    if (Mp, Kp) != (M, K):
        xp = jnp.pad(xp, ((0, Mp - M), (0, Kp - K)))

    kernel = functools.partial(_matmul_bias_act_kernel, relu=relu)
    return pl.pallas_call(
        kernel,
        out_shape=jax.ShapeDtypeStruct((Mp, Np), out_dtype),
        grid=(1,),
        in_specs=[
            pl.BlockSpec((Mp, Kp), lambda i: (0, 0)),
            pl.BlockSpec((Kp, Np), lambda i: (0, 0)),
            pl.BlockSpec((1, Np), lambda i: (0, 0)),
        ],
        out_specs=pl.BlockSpec((Mp, Np), lambda i: (0, 0)),
        compiler_params=pltpu.CompilerParams(dimension_semantics=("arbitrary",)),
    )(xp, w, b)


def conv2d_relu(x, w_mat, b_row, *, cout, k, stride):
    """x: (B, H, W, Cin) bf16 (channels-last); w_mat: (Kp, 128) bf16; valid pad."""
    B, H, W, C = x.shape
    oh = (H - k) // stride + 1
    ow = (W - k) // stride + 1
    # Single XLA op extracting all patches; output feature order is
    # (cin slowest, kh, kw fastest) -- identical to torch weight.view(cout, -1).
    patches = jax.lax.conv_general_dilated_patches(
        x, filter_shape=(k, k), window_strides=(stride, stride),
        padding="VALID", dimension_numbers=("NHWC", "HWIO", "NHWC"))
    M = B * oh * ow
    cols = patches.reshape(M, C * k * k)
    out = matmul_bias_act(cols, w_mat, b_row, relu=True, out_dtype=jnp.bfloat16)
    return out[:M, :cout].reshape(B, oh, ow, cout)


def fc_chain(flat, w1, b1, w2, b2, w3, b3):
    """Fused MLP: one pallas_call for fc1/fc2/fc3. flat: (B, K) bf16."""
    B, K = flat.shape
    Kp, N1 = w1.shape
    N2 = w2.shape[1]
    N3 = w3.shape[1]
    Mp = _round_up(B, 16)
    x = flat.astype(jnp.bfloat16)
    if (Mp, Kp) != (B, K):
        x = jnp.pad(x, ((0, Mp - B), (0, Kp - K)))

    return pl.pallas_call(
        _fc_chain_kernel,
        out_shape=jax.ShapeDtypeStruct((Mp, N3), jnp.float32),
        grid=(1,),
        in_specs=[
            pl.BlockSpec((Mp, Kp), lambda i: (0, 0)),
            pl.BlockSpec((Kp, N1), lambda i: (0, 0)),
            pl.BlockSpec((1, N1), lambda i: (0, 0)),
            pl.BlockSpec((N1, N2), lambda i: (0, 0)),
            pl.BlockSpec((1, N2), lambda i: (0, 0)),
            pl.BlockSpec((N2, N3), lambda i: (0, 0)),
            pl.BlockSpec((1, N3), lambda i: (0, 0)),
        ],
        out_specs=pl.BlockSpec((Mp, N3), lambda i: (0, 0)),
        compiler_params=pltpu.CompilerParams(dimension_semantics=("arbitrary",)),
    )(x, w1, b1, w2, b2, w3, b3)


# ----------------------------------------------------------------------------
# Deterministic parameter construction (synthetic; no checkpoint loading) in
# the exact torch layouts, then one-time preparation for the Pallas kernels.
# ----------------------------------------------------------------------------
def init_params(key, n_actions, conv_flat_dim):
    def dense(key, fan_in, shape):
        return jax.random.normal(key, shape, jnp.float32) / jnp.sqrt(fan_in)

    ks = jax.random.split(key, 12)
    return {
        "conv1_w": dense(ks[0], 3 * 8 * 8, (32, 3, 8, 8)),
        "conv1_b": dense(ks[1], 3 * 8 * 8, (32,)),
        "conv2_w": dense(ks[2], 32 * 4 * 4, (64, 32, 4, 4)),
        "conv2_b": dense(ks[3], 32 * 4 * 4, (64,)),
        "conv3_w": dense(ks[4], 64 * 3 * 3, (64, 64, 3, 3)),
        "conv3_b": dense(ks[5], 64 * 3 * 3, (64,)),
        "fc1_w": dense(ks[6], conv_flat_dim, (1024, conv_flat_dim)),  # torch (out, in)
        "fc1_b": dense(ks[7], conv_flat_dim, (1024,)),
        "fc2_w": dense(ks[8], 1024, (1024, 1024)),
        "fc2_b": dense(ks[9], 1024, (1024,)),
        "fc3_w": dense(ks[10], 1024, (n_actions, 1024)),
        "fc3_b": dense(ks[11], 1024, (n_actions,)),
    }


def prepare_params(params, input_dims):
    """One-time: flatten/transpose/pad/cast all weights into kernel-ready form."""
    H, W, _ = input_dims
    prepped = {}

    # Conv weights -> (Kp, 128) bf16 column-major GEMM form; biases -> (1, 128) f32.
    for idx, (cout, k, _) in enumerate(CONV_CFGS, start=1):
        w = params[f"conv{idx}_w"]          # (cout, cin, k, k), torch layout
        b = params[f"conv{idx}_b"]
        cin = w.shape[1]
        Kdim = cin * k * k
        Kp = _round_up(Kdim, 128)
        Np = _round_up(cout, 128)
        w_mat = w.reshape(cout, Kdim).T.astype(jnp.bfloat16)
        prepped[f"conv{idx}_w"] = jnp.pad(w_mat, ((0, Kp - Kdim), (0, Np - cout)))
        prepped[f"conv{idx}_b"] = jnp.pad(
            b.astype(jnp.float32), (0, Np - cout)).reshape(1, Np)

    # fc1: absorb torch's NCHW flatten into a column permutation (NCHW -> NHWC).
    oh, ow = _conv_output_hw(H, W)
    c_last = CONV_CFGS[-1][0]
    fc1_w = params["fc1_w"]                  # (1024, c_last*oh*ow), NCHW columns
    n1 = fc1_w.shape[0]
    fc1_w = fc1_w.reshape(n1, c_last, oh, ow).transpose(0, 2, 3, 1).reshape(n1, -1)
    K1 = fc1_w.shape[1]
    K1p = _round_up(K1, 128)
    prepped["fc1_w"] = jnp.pad(fc1_w.T.astype(jnp.bfloat16), ((0, K1p - K1), (0, 0)))
    prepped["fc1_b"] = params["fc1_b"].astype(jnp.float32).reshape(1, n1)

    prepped["fc2_w"] = params["fc2_w"].T.astype(jnp.bfloat16)
    prepped["fc2_b"] = params["fc2_b"].astype(jnp.float32).reshape(1, -1)

    n_actions = params["fc3_w"].shape[0]
    n3p = _round_up(n_actions, 128)
    prepped["fc3_w"] = jnp.pad(params["fc3_w"].T.astype(jnp.bfloat16),
                               ((0, 0), (0, n3p - n_actions)))
    prepped["fc3_b"] = jnp.pad(params["fc3_b"].astype(jnp.float32),
                               (0, n3p - n_actions)).reshape(1, n3p)
    return prepped


# ----------------------------------------------------------------------------
# Forward pass (mirrors DeepQNetwork.forward)
# ----------------------------------------------------------------------------
@functools.partial(jax.jit, static_argnames=("n_actions",))
def deep_q_forward(prepped, state, *, n_actions):
    B, H, W, C = state.shape
    # torch: state.view(B, C, H, W)  -- a reinterpreting reshape, NOT a transpose.
    x = state.reshape(B, C, H, W)
    # One-time relayout to channels-last (lane dim = channels) + bf16 cast;
    # all conv activations stay NHWC from here on (no per-layer transposes).
    x = jnp.transpose(x, (0, 2, 3, 1)).astype(jnp.bfloat16)

    for idx, (cout, k, s) in enumerate(CONV_CFGS, start=1):
        x = conv2d_relu(x, prepped[f"conv{idx}_w"], prepped[f"conv{idx}_b"],
                        cout=cout, k=k, stride=s)

    # NHWC flatten; fc1 weight columns were pre-permuted to match torch's
    # NCHW .view(B, -1) flatten.
    flat = x.reshape(B, -1)

    out = fc_chain(flat,
                   prepped["fc1_w"], prepped["fc1_b"],
                   prepped["fc2_w"], prepped["fc2_b"],
                   prepped["fc3_w"], prepped["fc3_b"])
    return out[:B, :n_actions]

# TODO(synk): RMSprop optimizer / MSELoss / checkpoint save-load are training &
#             IO machinery, not part of the forward pass; not implemented.


if __name__ == "__main__":
    key = jax.random.PRNGKey(0)
    k_state, k_params = jax.random.split(key)

    # Small shapes consistent with the module: input_dims = (H, W, C=3), batch=2
    B, H, W, C = 2, 44, 44, 3
    n_actions = 6

    # Conv output dims (valid padding): 44 -> 10 -> 4 -> 2, channels 64
    oh, ow = _conv_output_hw(H, W)
    conv_flat_dim = CONV_CFGS[-1][0] * oh * ow          # 64 * 2 * 2 = 256

    state = jax.random.normal(k_state, (B, H, W, C), jnp.float32)
    params = init_params(k_params, n_actions, conv_flat_dim)
    prepped = prepare_params(params, (H, W, C))         # one-time weight prep

    actions = deep_q_forward(prepped, state, n_actions=n_actions)
    actions = jax.block_until_ready(actions)

    assert actions.shape == (B, n_actions), actions.shape
    assert actions.dtype == jnp.float32
    print("KERNEL_OK")
</pallas_src>

<mosaic_0001>
module attributes {stable_mosaic.version = 11 : i64} {
  func.func @_matmul_bias_act_kernel(%arg0: i32, %arg1: memref<208x256xbf16, #tpu.memory_space<vmem>>, %arg2: memref<256x128xbf16, #tpu.memory_space<vmem>>, %arg3: memref<1x128xf32, #tpu.memory_space<vmem>>, %arg4: memref<208x128xbf16, #tpu.memory_space<vmem>>) attributes {dimension_semantics = [#tpu.dimension_semantics<arbitrary>], iteration_bounds = array<i64: 1>, scalar_prefetch = 0 : i64, scratch_operands = 0 : i64, tpu.core_type = #tpu.core_type<tc>, window_params = [{pipeline_mode = #tpu.pipeline_mode<synchronous>, transform_indices = @transform_0, window_bounds = array<i64: 208, 256>}, {pipeline_mode = #tpu.pipeline_mode<synchronous>, transform_indices = @transform_1, window_bounds = array<i64: 256, 128>}, {pipeline_mode = #tpu.pipeline_mode<synchronous>, transform_indices = @transform_2, window_bounds = array<i64: 1, 128>}, {pipeline_mode = #tpu.pipeline_mode<synchronous>, transform_indices = @transform_3, window_bounds = array<i64: 208, 128>}]} {
    %c0 = arith.constant 0 : index
    %c0_0 = arith.constant 0 : index
    %0 = vector.load %arg1[%c0, %c0_0] : memref<208x256xbf16, #tpu.memory_space<vmem>>, vector<208x256xbf16>
    %c0_1 = arith.constant 0 : index
    %c0_2 = arith.constant 0 : index
    %1 = vector.load %arg2[%c0_1, %c0_2] : memref<256x128xbf16, #tpu.memory_space<vmem>>, vector<256x128xbf16>
    %cst = arith.constant dense<0.000000e+00> : vector<208x128xf32>
    %2 = tpu.matmul %0, %1, %cst {dimension_numbers = #tpu.dot_dimension_numbers<[1], [0], [0], [1], [0, 0, 1, 1], [], []>} : vector<208x256xbf16>, vector<256x128xbf16>, vector<208x128xf32> -> vector<208x128xf32>
    %c0_3 = arith.constant 0 : index
    %c0_4 = arith.constant 0 : index
    %3 = vector.load %arg3[%c0_3, %c0_4] : memref<1x128xf32, #tpu.memory_space<vmem>>, vector<1x128xf32>
    %4 = vector.broadcast %3 : vector<1x128xf32> to vector<208x128xf32>
    %5 = arith.addf %2, %4 : vector<208x128xf32>
    %cst_5 = arith.constant 0.000000e+00 : f32
    %6 = vector.broadcast %cst_5 : f32 to vector<208x128xf32>
    %7 = arith.maximumf %5, %6 : vector<208x128xf32>
    %8 = arith.truncf %7 : vector<208x128xf32> to vector<208x128xbf16>
    %c0_6 = arith.constant 0 : index
    %c0_7 = arith.constant 0 : index
    %9 = vector.load %arg4[%c0_6, %c0_7] : memref<208x128xbf16, #tpu.memory_space<vmem>>, vector<208x128xbf16>
    tpu.vector_store %arg4[%c0_6, %c0_7], %8 {strides = array<i32>} : memref<208x128xbf16, #tpu.memory_space<vmem>>, vector<208x128xbf16>,
    return
  }
  func.func @transform_0(%arg0: i32) -> (i32, i32) {
    %c0_i32 = arith.constant 0 : i32
    %c0_i32_0 = arith.constant 0 : i32
    %c0_i32_1 = arith.constant 0 : i32
    return %c0_i32, %c0_i32_0 : i32, i32
  }
  func.func @transform_1(%arg0: i32) -> (i32, i32) {
    %c0_i32 = arith.constant 0 : i32
    %c0_i32_0 = arith.constant 0 : i32
    %c0_i32_1 = arith.constant 0 : i32
    return %c0_i32, %c0_i32_0 : i32, i32
  }
  func.func @transform_2(%arg0: i32) -> (i32, i32) {
    %c0_i32 = arith.constant 0 : i32
    %c0_i32_0 = arith.constant 0 : i32
    %c0_i32_1 = arith.constant 0 : i32
    return %c0_i32, %c0_i32_0 : i32, i32
  }
  func.func @transform_3(%arg0: i32) -> (i32, i32) {
    %c0_i32 = arith.constant 0 : i32
    %c0_i32_0 = arith.constant 0 : i32
    %c0_i32_1 = arith.constant 0 : i32
    return %c0_i32, %c0_i32_0 : i32, i32
  }
}

module attributes {stable_mosaic.version = 11 : i64} {
  func.func @_matmul_bias_act_kernel(%arg0: i32, %arg1: memref<32x512xbf16, #tpu.memory_space<vmem>>, %arg2: memref<512x128xbf16, #tpu.memory_space<vmem>>, %arg3: memref<1x128xf32, #tpu.memory_space<vmem>>, %arg4: memref<32x128xbf16, #tpu.memory_space<vmem>>) attributes {dimension_semantics = [#tpu.dimension_semantics<arbitrary>], iteration_bounds = array<i64: 1>, scalar_prefetch = 0 : i64, scratch_operands = 0 : i64, tpu.core_type = #tpu.core_type<tc>, window_params = [{pipeline_mode = #tpu.pipeline_mode<synchronous>, transform_indices = @transform_0, window_bounds = array<i64: 32, 512>}, {pipeline_mode = #tpu.pipeline_mode<synchronous>, transform_indices = @transform_1, window_bounds = array<i64: 512, 128>}, {pipeline_mode = #tpu.pipeline_mode<synchronous>, transform_indices = @transform_2, window_bounds = array<i64: 1, 128>}, {pipeline_mode = #tpu.pipeline_mode<synchronous>, transform_indices = @transform_3, window_bounds = array<i64: 32, 128>}]} {
    %c0 = arith.constant 0 : index
    %c0_0 = arith.constant 0 : index
    %0 = vector.load %arg1[%c0, %c0_0] : memref<32x512xbf16, #tpu.memory_space<vmem>>, vector<32x512xbf16>
    %c0_1 = arith.constant 0 : index
    %c0_2 = arith.constant 0 : index
    %1 = vector.load %arg2[%c0_1, %c0_2] : memref<512x128xbf16, #tpu.memory_space<vmem>>, vector<512x128xbf16>
    %cst = arith.constant dense<0.000000e+00> : vector<32x128xf32>
    %2 = tpu.matmul %0, %1, %cst {dimension_numbers = #tpu.dot_dimension_numbers<[1], [0], [0], [1], [0, 0, 1, 1], [], []>} : vector<32x512xbf16>, vector<512x128xbf16>, vector<32x128xf32> -> vector<32x128xf32>
    %c0_3 = arith.constant 0 : index
    %c0_4 = arith.constant 0 : index
    %3 = vector.load %arg3[%c0_3, %c0_4] : memref<1x128xf32, #tpu.memory_space<vmem>>, vector<1x128xf32>
    %4 = vector.broadcast %3 : vector<1x128xf32> to vector<32x128xf32>
    %5 = arith.addf %2, %4 : vector<32x128xf32>
    %cst_5 = arith.constant 0.000000e+00 : f32
    %6 = vector.broadcast %cst_5 : f32 to vector<32x128xf32>
    %7 = arith.maximumf %5, %6 : vector<32x128xf32>
    %8 = arith.truncf %7 : vector<32x128xf32> to vector<32x128xbf16>
    %c0_6 = arith.constant 0 : index
    %c0_7 = arith.constant 0 : index
    %9 = vector.load %arg4[%c0_6, %c0_7] : memref<32x128xbf16, #tpu.memory_space<vmem>>, vector<32x128xbf16>
    tpu.vector_store %arg4[%c0_6, %c0_7], %8 {strides = array<i32>} : memref<32x128xbf16, #tpu.memory_space<vmem>>, vector<32x128xbf16>,
    return
  }
  func.func @transform_0(%arg0: i32) -> (i32, i32) {
    %c0_i32 = arith.constant 0 : i32
    %c0_i32_0 = arith.constant 0 : i32
    %c0_i32_1 = arith.constant 0 : i32
    return %c0_i32, %c0_i32_0 : i32, i32
  }
  func.func @transform_1(%arg0: i32) -> (i32, i32) {
    %c0_i32 = arith.constant 0 : i32
    %c0_i32_0 = arith.constant 0 : i32
    %c0_i32_1 = arith.constant 0 : i32
    return %c0_i32, %c0_i32_0 : i32, i32
  }
  func.func @transform_2(%arg0: i32) -> (i32, i32) {
    %c0_i32 = arith.constant 0 : i32
    %c0_i32_0 = arith.constant 0 : i32
    %c0_i32_1 = arith.constant 0 : i32
    return %c0_i32, %c0_i32_0 : i32, i32
  }
  func.func @transform_3(%arg0: i32) -> (i32, i32) {
    %c0_i32 = arith.constant 0 : i32
    %c0_i32_0 = arith.constant 0 : i32
    %c0_i32_1 = arith.constant 0 : i32
    return %c0_i32, %c0_i32_0 : i32, i32
  }
}

module attributes {stable_mosaic.version = 11 : i64} {
  func.func @_matmul_bias_act_kernel(%arg0: i32, %arg1: memref<16x640xbf16, #tpu.memory_space<vmem>>, %arg2: memref<640x128xbf16, #tpu.memory_space<vmem>>, %arg3: memref<1x128xf32, #tpu.memory_space<vmem>>, %arg4: memref<16x128xbf16, #tpu.memory_space<vmem>>) attributes {dimension_semantics = [#tpu.dimension_semantics<arbitrary>], iteration_bounds = array<i64: 1>, scalar_prefetch = 0 : i64, scratch_operands = 0 : i64, tpu.core_type = #tpu.core_type<tc>, window_params = [{pipeline_mode = #tpu.pipeline_mode<synchronous>, transform_indices = @transform_0, window_bounds = array<i64: 16, 640>}, {pipeline_mode = #tpu.pipeline_mode<synchronous>, transform_indices = @transform_1, window_bounds = array<i64: 640, 128>}, {pipeline_mode = #tpu.pipeline_mode<synchronous>, transform_indices = @transform_2, window_bounds = array<i64: 1, 128>}, {pipeline_mode = #tpu.pipeline_mode<synchronous>, transform_indices = @transform_3, window_bounds = array<i64: 16, 128>}]} {
    %c0 = arith.constant 0 : index
    %c0_0 = arith.constant 0 : index
    %0 = vector.load %arg1[%c0, %c0_0] : memref<16x640xbf16, #tpu.memory_space<vmem>>, vector<16x640xbf16>
    %c0_1 = arith.constant 0 : index
    %c0_2 = arith.constant 0 : index
    %1 = vector.load %arg2[%c0_1, %c0_2] : memref<640x128xbf16, #tpu.memory_space<vmem>>, vector<640x128xbf16>
    %cst = arith.constant dense<0.000000e+00> : vector<16x128xf32>
    %2 = tpu.matmul %0, %1, %cst {dimension_numbers = #tpu.dot_dimension_numbers<[1], [0], [0], [1], [0, 0, 1, 1], [], []>} : vector<16x640xbf16>, vector<640x128xbf16>, vector<16x128xf32> -> vector<16x128xf32>
    %c0_3 = arith.constant 0 : index
    %c0_4 = arith.constant 0 : index
    %3 = vector.load %arg3[%c0_3, %c0_4] : memref<1x128xf32, #tpu.memory_space<vmem>>, vector<1x128xf32>
    %4 = vector.broadcast %3 : vector<1x128xf32> to vector<16x128xf32>
    %5 = arith.addf %2, %4 : vector<16x128xf32>
    %cst_5 = arith.constant 0.000000e+00 : f32
    %6 = vector.broadcast %cst_5 : f32 to vector<16x128xf32>
    %7 = arith.maximumf %5, %6 : vector<16x128xf32>
    %8 = arith.truncf %7 : vector<16x128xf32> to vector<16x128xbf16>
    %c0_6 = arith.constant 0 : index
    %c0_7 = arith.constant 0 : index
    %9 = vector.load %arg4[%c0_6, %c0_7] : memref<16x128xbf16, #tpu.memory_space<vmem>>, vector<16x128xbf16>
    tpu.vector_store %arg4[%c0_6, %c0_7], %8 {strides = array<i32>} : memref<16x128xbf16, #tpu.memory_space<vmem>>, vector<16x128xbf16>,
    return
  }
  func.func @transform_0(%arg0: i32) -> (i32, i32) {
    %c0_i32 = arith.constant 0 : i32
    %c0_i32_0 = arith.constant 0 : i32
    %c0_i32_1 = arith.constant 0 : i32
    return %c0_i32, %c0_i32_0 : i32, i32
  }
  func.func @transform_1(%arg0: i32) -> (i32, i32) {
    %c0_i32 = arith.constant 0 : i32
    %c0_i32_0 = arith.constant 0 : i32
    %c0_i32_1 = arith.constant 0 : i32
    return %c0_i32, %c0_i32_0 : i32, i32
  }
  func.func @transform_2(%arg0: i32) -> (i32, i32) {
    %c0_i32 = arith.constant 0 : i32
    %c0_i32_0 = arith.constant 0 : i32
    %c0_i32_1 = arith.constant 0 : i32
    return %c0_i32, %c0_i32_0 : i32, i32
  }
  func.func @transform_3(%arg0: i32) -> (i32, i32) {
    %c0_i32 = arith.constant 0 : i32
    %c0_i32_0 = arith.constant 0 : i32
    %c0_i32_1 = arith.constant 0 : i32
    return %c0_i32, %c0_i32_0 : i32, i32
  }
}

module attributes {stable_mosaic.version = 11 : i64} {
  func.func @_fc_chain_kernel(%arg0: i32, %arg1: memref<16x256xbf16, #tpu.memory_space<vmem>>, %arg2: memref<256x1024xbf16, #tpu.memory_space<vmem>>, %arg3: memref<1x1024xf32, #tpu.memory_space<vmem>>, %arg4: memref<1024x1024xbf16, #tpu.memory_space<vmem>>, %arg5: memref<1x1024xf32, #tpu.memory_space<vmem>>, %arg6: memref<1024x128xbf16, #tpu.memory_space<vmem>>, %arg7: memref<1x128xf32, #tpu.memory_space<vmem>>, %arg8: memref<16x128xf32, #tpu.memory_space<vmem>>) attributes {dimension_semantics = [#tpu.dimension_semantics<arbitrary>], iteration_bounds = array<i64: 1>, scalar_prefetch = 0 : i64, scratch_operands = 0 : i64, tpu.core_type = #tpu.core_type<tc>, window_params = [{pipeline_mode = #tpu.pipeline_mode<synchronous>, transform_indices = @transform_0, window_bounds = array<i64: 16, 256>}, {pipeline_mode = #tpu.pipeline_mode<synchronous>, transform_indices = @transform_1, window_bounds = array<i64: 256, 1024>}, {pipeline_mode = #tpu.pipeline_mode<synchronous>, transform_indices = @transform_2, window_bounds = array<i64: 1, 1024>}, {pipeline_mode = #tpu.pipeline_mode<synchronous>, transform_indices = @transform_3, window_bounds = array<i64: 1024, 1024>}, {pipeline_mode = #tpu.pipeline_mode<synchronous>, transform_indices = @transform_4, window_bounds = array<i64: 1, 1024>}, {pipeline_mode = #tpu.pipeline_mode<synchronous>, transform_indices = @transform_5, window_bounds = array<i64: 1024, 128>}, {pipeline_mode = #tpu.pipeline_mode<synchronous>, transform_indices = @transform_6, window_bounds = array<i64: 1, 128>}, {pipeline_mode = #tpu.pipeline_mode<synchronous>, transform_indices = @transform_7, window_bounds = array<i64: 16, 128>}]} {
    %c0 = arith.constant 0 : index
    %c0_0 = arith.constant 0 : index
    %0 = vector.load %arg1[%c0, %c0_0] : memref<16x256xbf16, #tpu.memory_space<vmem>>, vector<16x256xbf16>
    %c0_1 = arith.constant 0 : index
    %c0_2 = arith.constant 0 : index
    %1 = vector.load %arg2[%c0_1, %c0_2] : memref<256x1024xbf16, #tpu.memory_space<vmem>>, vector<256x1024xbf16>
    %cst = arith.constant dense<0.000000e+00> : vector<16x1024xf32>
    %2 = tpu.matmul %0, %1, %cst {dimension_numbers = #tpu.dot_dimension_numbers<[1], [0], [0], [1], [0, 0, 1, 1], [], []>} : vector<16x256xbf16>, vector<256x1024xbf16>, vector<16x1024xf32> -> vector<16x1024xf32>
    %c0_3 = arith.constant 0 : index
    %c0_4 = arith.constant 0 : index
    %3 = vector.load %arg3[%c0_3, %c0_4] : memref<1x1024xf32, #tpu.memory_space<vmem>>, vector<1x1024xf32>
    %4 = vector.broadcast %3 : vector<1x1024xf32> to vector<16x1024xf32>
    %5 = arith.addf %2, %4 : vector<16x1024xf32>
    %cst_5 = arith.constant 0.000000e+00 : f32
    %6 = vector.broadcast %cst_5 : f32 to vector<16x1024xf32>
    %7 = arith.maximumf %5, %6 : vector<16x1024xf32>
    %8 = arith.truncf %7 : vector<16x1024xf32> to vector<16x1024xbf16>
    %c0_6 = arith.constant 0 : index
    %c0_7 = arith.constant 0 : index
    %9 = vector.load %arg4[%c0_6, %c0_7] : memref<1024x1024xbf16, #tpu.memory_space<vmem>>, vector<1024x1024xbf16>
    %cst_8 = arith.constant dense<0.000000e+00> : vector<16x1024xf32>
    %10 = tpu.matmul %8, %9, %cst_8 {dimension_numbers = #tpu.dot_dimension_numbers<[1], [0], [0], [1], [0, 0, 1, 1], [], []>} : vector<16x1024xbf16>, vector<1024x1024xbf16>, vector<16x1024xf32> -> vector<16x1024xf32>
    %c0_9 = arith.constant 0 : index
    %c0_10 = arith.constant 0 : index
    %11 = vector.load %arg5[%c0_9, %c0_10] : memref<1x1024xf32, #tpu.memory_space<vmem>>, vector<1x1024xf32>
    %12 = vector.broadcast %11 : vector<1x1024xf32> to vector<16x1024xf32>
    %13 = arith.addf %10, %12 : vector<16x1024xf32>
    %cst_11 = arith.constant 0.000000e+00 : f32
    %14 = vector.broadcast %cst_11 : f32 to vector<16x1024xf32>
    %15 = arith.maximumf %13, %14 : vector<16x1024xf32>
    %16 = arith.truncf %15 : vector<16x1024xf32> to vector<16x1024xbf16>
    %c0_12 = arith.constant 0 : index
    %c0_13 = arith.constant 0 : index
    %17 = vector.load %arg6[%c0_12, %c0_13] : memref<1024x128xbf16, #tpu.memory_space<vmem>>, vector<1024x128xbf16>
    %cst_14 = arith.constant dense<0.000000e+00> : vector<16x128xf32>
    %18 = tpu.matmul %16, %17, %cst_14 {dimension_numbers = #tpu.dot_dimension_numbers<[1], [0], [0], [1], [0, 0, 1, 1], [], []>} : vector<16x1024xbf16>, vector<1024x128xbf16>, vector<16x128xf32> -> vector<16x128xf32>
    %c0_15 = arith.constant 0 : index
    %c0_16 = arith.constant 0 : index
    %19 = vector.load %arg7[%c0_15, %c0_16] : memref<1x128xf32, #tpu.memory_space<vmem>>, vector<1x128xf32>
    %20 = vector.broadcast %19 : vector<1x128xf32> to vector<16x128xf32>
    %21 = arith.addf %18, %20 : vector<16x128xf32>
    %c0_17 = arith.constant 0 : index
    %c0_18 = arith.constant 0 : index
    %22 = vector.load %arg8[%c0_17, %c0_18] : memref<16x128xf32, #tpu.memory_space<vmem>>, vector<16x128xf32>
    tpu.vector_store %arg8[%c0_17, %c0_18], %21 {strides = array<i32>} : memref<16x128xf32, #tpu.memory_space<vmem>>, vector<16x128xf32>,
    return
  }
  func.func @transform_0(%arg0: i32) -> (i32, i32) {
    %c0_i32 = arith.constant 0 : i32
    %c0_i32_0 = arith.constant 0 : i32
    %c0_i32_1 = arith.constant 0 : i32
    return %c0_i32, %c0_i32_0 : i32, i32
  }
  func.func @transform_1(%arg0: i32) -> (i32, i32) {
    %c0_i32 = arith.constant 0 : i32
    %c0_i32_0 = arith.constant 0 : i32
    %c0_i32_1 = arith.constant 0 : i32
    return %c0_i32, %c0_i32_0 : i32, i32
  }
  func.func @transform_2(%arg0: i32) -> (i32, i32) {
    %c0_i32 = arith.constant 0 : i32
    %c0_i32_0 = arith.constant 0 : i32
    %c0_i32_1 = arith.constant 0 : i32
    return %c0_i32, %c0_i32_0 : i32, i32
  }
  func.func @transform_3(%arg0: i32) -> (i32, i32) {
    %c0_i32 = arith.constant 0 : i32
    %c0_i32_0 = arith.constant 0 : i32
    %c0_i32_1 = arith.constant 0 : i32
    return %c0_i32, %c0_i32_0 : i32, i32
  }
  func.func @transform_4(%arg0: i32) -> (i32, i32) {
    %c0_i32 = arith.constant 0 : i32
    %c0_i32_0 = arith.constant 0 : i32
    %c0_i32_1 = arith.constant 0 : i32
    return %c0_i32, %c0_i32_0 : i32, i32
  }
  func.func @transform_5(%arg0: i32) -> (i32, i32) {
    %c0_i32 = arith.constant 0 : i32
    %c0_i32_0 = arith.constant 0 : i32
    %c0_i32_1 = arith.constant 0 : i32
    return %c0_i32, %c0_i32_0 : i32, i32
  }
  func.func @transform_6(%arg0: i32) -> (i32, i32) {
    %c0_i32 = arith.constant 0 : i32
    %c0_i32_0 = arith.constant 0 : i32
    %c0_i32_1 = arith.constant 0 : i32
    return %c0_i32, %c0_i32_0 : i32, i32
  }
  func.func @transform_7(%arg0: i32) -> (i32, i32) {
    %c0_i32 = arith.constant 0 : i32
    %c0_i32_0 = arith.constant 0 : i32
    %c0_i32_1 = arith.constant 0 : i32
    return %c0_i32, %c0_i32_0 : i32, i32
  }
}

</mosaic_0001>

<llo_original>
// kernel: deep_q_forward.4
$region0: #{deep_q_forward.4}
  #allocation0 [shape = 'u32[]', space=smem, size = 0x4, offset = 0x4, fixed_abs, tag = 'smem constant byte address 0x4 - core index']
  #allocation1 [shape = 'u32[144,128]{1,0:T(1,128)}', space=vmem, size = 0x12000, scoped, tag = 'internal scratch']
  %s0 = inlined_call_operand.vmem [shape: bf16[208,256], index: 0, kind: input, shape index: {}]
  %s1 = inlined_call_operand.vmem [shape: bf16[256,128], index: 1, kind: input, shape index: {}]
  %s2 = inlined_call_operand.vmem [shape: f32[1,128], index: 2, kind: input, shape index: {}]
  %s3 = inlined_call_operand.vmem [shape: bf16[208,128], index: 3, kind: output, shape index: {}]
  %s4 = sld [smem:[#allocation0]]
  $region22: #{deep_q_forward.4} parent=0
    _
  %s6 = ssub.s32 1, %s4
  %s7 = scalar_select 0, %s6, %s4
  // Predicated region
  $region2: #{deep_q_forward.4} parent=0 // pred_check
    _
  $region3: #{deep_q_forward.4} parent=0 // pred_check_branch
    %9 = sbr.rel (0) target = $region5
  $region4: #{deep_q_forward.4} parent=0 // pred_region
    _
  $region5: #{deep_q_forward.4} parent=0 // pred_fallthru
    _
  // Predicated region
  $region6: #{deep_q_forward.4} parent=0 // pred_check
    _
  $region7: #{deep_q_forward.4} parent=0 // pred_check_branch
    %11 = sbr.rel (0) target = $region9
  $region8: #{deep_q_forward.4} parent=0 // pred_region
    _
  $region9: #{deep_q_forward.4} parent=0 // pred_fallthru
    _
  // Predicated region
  $region10: #{deep_q_forward.4} parent=0 // pred_check
    _
  $region11: #{deep_q_forward.4} parent=0 // pred_check_branch
    %13 = sbr.rel (0) target = $region13
  $region12: #{deep_q_forward.4} parent=0 // pred_region
    _
  $region13: #{deep_q_forward.4} parent=0 // pred_fallthru
    _
  %v15 = vld [vmem:[%s0] sm:$0xff]
  %v16 = vld [vmem:[%s0 + $0x8] sm:$0xff]
  %v17 = vld [vmem:[%s0 + $0x10] sm:$0xff]
  %v18 = vld [vmem:[%s0 + $0x18] sm:$0xff]
  %v19 = vld [vmem:[%s0 + $0x20] sm:$0xff]
  %v20 = vld [vmem:[%s0 + $0x28] sm:$0xff]
  %v21 = vld [vmem:[%s0 + $0x30] sm:$0xff]
  %v22 = vld [vmem:[%s0 + $0x38] sm:$0xff]
  %v23 = vld [vmem:[%s0 + $0x40] sm:$0xff]
  %v24 = vld [vmem:[%s0 + $0x48] sm:$0xff]
  %v25 = vld [vmem:[%s0 + $0x50] sm:$0xff]
  %v26 = vld [vmem:[%s0 + $0x58] sm:$0xff]
  %v27 = vld [vmem:[%s0 + $0x60] sm:$0xff]
  %v28 = vld [vmem:[%s0 + $0x68] sm:$0xff]
  %v29 = vld [vmem:[%s0 + $0x70] sm:$0xff]
  %v30 = vld [vmem:[%s0 + $0x78] sm:$0xff]
  %v31 = vld [vmem:[%s0 + $0x80] sm:$0xff]
  %v32 = vld [vmem:[%s0 + $0x88] sm:$0xff]
  %v33 = vld [vmem:[%s0 + $0x90] sm:$0xff]
  %v34 = vld [vmem:[%s0 + $0x98] sm:$0xff]
  %v35 = vld [vmem:[%s0 + $0xa0] sm:$0xff]
  %v36 = vld [vmem:[%s0 + $0xa8] sm:$0xff]
  %v37 = vld [vmem:[%s0 + $0xb0] sm:$0xff]
  %v38 = vld [vmem:[%s0 + $0xb8] sm:$0xff]
  %v39 = vld [vmem:[%s0 + $0xc0] sm:$0xff]
  %v40 = vld [vmem:[%s0 + $0xc8] sm:$0xff]
  %v41 = vld [vmem:[%s1] sm:$0xf]
  %v42 = vld [vmem:[%s1 + $0x4] sm:$0xf]
  %v43 = vld [vmem:[%s1 + $0x8] sm:$0xf]
  %v44 = vld [vmem:[%s1 + $0xc] sm:$0xf]
  %v45 = vld [vmem:[%s1 + $0x10] sm:$0xf]
  %v46 = vld [vmem:[%s1 + $0x14] sm:$0xf]
  %v47 = vld [vmem:[%s1 + $0x18] sm:$0xf]
  %v48 = vld [vmem:[%s1 + $0x1c] sm:$0xf]
  %v49 = vld [vmem:[%s1 + $0x20] sm:$0xf]
  %v50 = vld [vmem:[%s1 + $0x24] sm:$0xf]
  %v51 = vld [vmem:[%s1 + $0x28] sm:$0xf]
  %v52 = vld [vmem:[%s1 + $0x2c] sm:$0xf]
  %v53 = vld [vmem:[%s1 + $0x30] sm:$0xf]
  %v54 = vld [vmem:[%s1 + $0x34] sm:$0xf]
  %v55 = vld [vmem:[%s1 + $0x38] sm:$0xf]
  %v56 = vld [vmem:[%s1 + $0x3c] sm:$0xf]
  %v57 = vld [vmem:[%s1 + $0x40] sm:$0xf]
  %v58 = vld [vmem:[%s1 + $0x44] sm:$0xf]
  %v59 = vld [vmem:[%s1 + $0x48] sm:$0xf]
  %v60 = vld [vmem:[%s1 + $0x4c] sm:$0xf]
  %v61 = vld [vmem:[%s1 + $0x50] sm:$0xf]
  %v62 = vld [vmem:[%s1 + $0x54] sm:$0xf]
  %v63 = vld [vmem:[%s1 + $0x58] sm:$0xf]
  %v64 = vld [vmem:[%s1 + $0x5c] sm:$0xf]
  %v65 = vld [vmem:[%s1 + $0x60] sm:$0xf]
  %v66 = vld [vmem:[%s1 + $0x64] sm:$0xf]
  %v67 = vld [vmem:[%s1 + $0x68] sm:$0xf]
  %v68 = vld [vmem:[%s1 + $0x6c] sm:$0xf]
  %v69 = vld [vmem:[%s1 + $0x70] sm:$0xf]
  %v70 = vld [vmem:[%s1 + $0x74] sm:$0xf]
  %v71 = vld [vmem:[%s1 + $0x78] sm:$0xf]
  %v72 = vld [vmem:[%s1 + $0x7c] sm:$0xf]
  %v73 = vld [vmem:[%s2] sm:$0x1]
  %v75 = vlaneseq
  %v76 = vshrl.u32 %v75, 7
  %v77 = vsub.s32 0, %v76
  %v78 = vrot.slane %v73, %v77
  %v106 = vunpack.c.l.b16 %v15
  %v107 = vunpack.c.h.b16 %v15
  %v108 = vunpack.c.l.b16 %v16
  %v109 = vunpack.c.h.b16 %v16
  %v110 = vunpack.c.l.b16 %v17
  %v111 = vunpack.c.h.b16 %v17
  %v112 = vunpack.c.l.b16 %v18
  %v113 = vunpack.c.h.b16 %v18
  %v114 = vunpack.c.l.b16 %v19
  %v115 = vunpack.c.h.b16 %v19
  %v116 = vunpack.c.l.b16 %v20
  %v117 = vunpack.c.h.b16 %v20
  %v118 = vunpack.c.l.b16 %v21
  %v119 = vunpack.c.h.b16 %v21
  %v120 = vunpack.c.l.b16 %v22
  %v121 = vunpack.c.h.b16 %v22
  %v122 = vunpack.c.l.b16 %v23
  %v123 = vunpack.c.h.b16 %v23
  %v124 = vunpack.c.l.b16 %v24
  %v125 = vunpack.c.h.b16 %v24
  %v126 = vunpack.c.l.b16 %v25
  %v127 = vunpack.c.h.b16 %v25
  %v128 = vunpack.c.l.b16 %v26
  %v129 = vunpack.c.h.b16 %v26
  %v130 = vunpack.c.l.b16 %v27
  %v131 = vunpack.c.h.b16 %v27
  %v132 = vunpack.c.l.b16 %v28
  %v133 = vunpack.c.h.b16 %v28
  %v134 = vunpack.c.l.b16 %v29
  %v135 = vunpack.c.h.b16 %v29
  %v136 = vunpack.c.l.b16 %v30
  %v137 = vunpack.c.h.b16 %v30
  %v138 = vunpack.c.l.b16 %v31
  %v139 = vunpack.c.h.b16 %v31
  %v140 = vunpack.c.l.b16 %v32
  %v141 = vunpack.c.h.b16 %v32
  %v142 = vunpack.c.l.b16 %v33
  %v143 = vunpack.c.h.b16 %v33
  %v144 = vunpack.c.l.b16 %v34
  %v145 = vunpack.c.h.b16 %v34
  %v146 = vunpack.c.l.b16 %v35
  %v147 = vunpack.c.h.b16 %v35
  %v148 = vunpack.c.l.b16 %v36
  %v149 = vunpack.c.h.b16 %v36
  %v150 = vunpack.c.l.b16 %v37
  %v151 = vunpack.c.h.b16 %v37
  %v152 = vunpack.c.l.b16 %v38
  %v153 = vunpack.c.h.b16 %v38
  %v154 = vunpack.c.l.b16 %v39
  %v155 = vunpack.c.h.b16 %v39
  %v156 = vunpack.c.l.b16 %v40
  %v157 = vunpack.c.h.b16 %v40
  %v158 = vpack.c.b16 %v108, %v106
  %v159 = vpack.c.b16 %v109, %v107
  %v160 = vpack.c.b16 %v112, %v110
  %v161 = vpack.c.b16 %v113, %v111
  %v162 = vpack.c.b16 %v116, %v114
  %v163 = vpack.c.b16 %v117, %v115
  %v164 = vpack.c.b16 %v120, %v118
  %v165 = vpack.c.b16 %v121, %v119
  %v166 = vpack.c.b16 %v124, %v122
  %v167 = vpack.c.b16 %v125, %v123
  %v168 = vpack.c.b16 %v128, %v126
  %v169 = vpack.c.b16 %v129, %v127
  %v170 = vpack.c.b16 %v132, %v130
  %v171 = vpack.c.b16 %v133, %v131
  %v172 = vpack.c.b16 %v136, %v134
  %v173 = vpack.c.b16 %v137, %v135
  %v174 = vpack.c.b16 %v140, %v138
  %v175 = vpack.c.b16 %v141, %v139
  %v176 = vpack.c.b16 %v144, %v142
  %v177 = vpack.c.b16 %v145, %v143
  %v178 = vpack.c.b16 %v148, %v146
  %v179 = vpack.c.b16 %v149, %v147
  %v180 = vpack.c.b16 %v152, %v150
  %v181 = vpack.c.b16 %v153, %v151
  %v182 = vpack.c.b16 %v156, %v154
  %v183 = vpack.c.b16 %v157, %v155
  %v242 = vunpack.c.l.b16 %v41
  %v243 = vunpack.c.l.b16 %v42
  %v244 = vunpack.c.l.b16 %v43
  %v245 = vunpack.c.l.b16 %v44
  %v246 = vunpack.c.l.b16 %v45
  %v247 = vunpack.c.l.b16 %v46
  %v248 = vunpack.c.l.b16 %v47
  %v249 = vunpack.c.l.b16 %v48
  %v250 = vunpack.c.l.b16 %v49
  %v251 = vunpack.c.l.b16 %v50
  %v252 = vunpack.c.l.b16 %v51
  %v253 = vunpack.c.l.b16 %v52
  %v254 = vunpack.c.l.b16 %v53
  %v255 = vunpack.c.l.b16 %v54
  %v256 = vunpack.c.l.b16 %v55
  %v257 = vunpack.c.l.b16 %v56
  %v258 = vunpack.c.l.b16 %v57
  %v259 = vunpack.c.l.b16 %v58
  %v260 = vunpack.c.l.b16 %v59
  %v261 = vunpack.c.l.b16 %v60
  %v262 = vunpack.c.l.b16 %v61
  %v263 = vunpack.c.l.b16 %v62
  %v264 = vunpack.c.l.b16 %v63
  %v265 = vunpack.c.l.b16 %v64
  %v266 = vunpack.c.l.b16 %v65
  %v267 = vunpack.c.l.b16 %v66
  %v268 = vunpack.c.l.b16 %v67
  %v269 = vunpack.c.l.b16 %v68
  %v270 = vunpack.c.l.b16 %v69
  %v271 = vunpack.c.l.b16 %v70
  %v272 = vunpack.c.l.b16 %v71
  %v273 = vunpack.c.l.b16 %v72
  %v274 = vpack.c.b16 %v243, %v242
  %v275 = vpack.c.b16 %v245, %v244
  %v276 = vpack.c.b16 %v247, %v246
  %v277 = vpack.c.b16 %v249, %v248
  %v278 = vpack.c.b16 %v251, %v250
  %v279 = vpack.c.b16 %v253, %v252
  %v280 = vpack.c.b16 %v255, %v254
  %v281 = vpack.c.b16 %v257, %v256
  %v282 = vpack.c.b16 %v259, %v258
  %v283 = vpack.c.b16 %v261, %v260
  %v284 = vpack.c.b16 %v263, %v262
  %v285 = vpack.c.b16 %v265, %v264
  %v286 = vpack.c.b16 %v267, %v266
  %v287 = vpack.c.b16 %v269, %v268
  %v288 = vpack.c.b16 %v271, %v270
  %v289 = vpack.c.b16 %v273, %v272
  %306 = vmatprep.subr.bf16.mxu0 0
  %307 = vmatpush1.bf16.msra.mxu0 %v274
  %308 = vmatprep.subr.bf16.mxu0 0
  %309 = vmatpush1.bf16.msra.mxu0 %v275
  %310 = vmatprep.subr.bf16.mxu0 0
  %311 = vmatpush1.bf16.msra.mxu0 %v276
  %312 = vmatprep.subr.bf16.mxu0 0
  %313 = vmatpush1.bf16.msra.mxu0 %v277
  %314 = vmatprep.subr.bf16.mxu0 0
  %315 = vmatpush1.bf16.msra.mxu0 %v278
  %316 = vmatprep.subr.bf16.mxu0 0
  %317 = vmatpush1.bf16.msra.mxu0 %v279
  %318 = vmatprep.subr.bf16.mxu0 0
  %319 = vmatpush1.bf16.msra.mxu0 %v280
  %320 = vmatprep.subr.bf16.mxu0 0
  %321 = vmatpush1.bf16.msra.mxu0 %v281
  %322 = vmatprep.subr.bf16.mxu0 0
  %323 = vmatpush1.bf16.msra.mxu0 %v282
  %324 = vmatprep.subr.bf16.mxu0 0
  %325 = vmatpush1.bf16.msra.mxu0 %v283
  %326 = vmatprep.subr.bf16.mxu0 0
  %327 = vmatpush1.bf16.msra.mxu0 %v284
  %328 = vmatprep.subr.bf16.mxu0 0
  %329 = vmatpush1.bf16.msra.mxu0 %v285
  %330 = vmatprep.subr.bf16.mxu0 0
  %331 = vmatpush1.bf16.msra.mxu0 %v286
  %332 = vmatprep.subr.bf16.mxu0 0
  %333 = vmatpush1.bf16.msra.mxu0 %v287
  %334 = vmatprep.subr.bf16.mxu0 0
  %335 = vmatpush1.bf16.msra.mxu0 %v288
  %336 = vmatprep.subr.bf16.mxu0 0
  %337 = vmatpush1.bf16.msra.mxu0 %v289
  %338 = vmatprep.mubr.bf16.mxu0 %v159
  %339 = vmatmul.mubr.bf16.gmra.mrb[0].mxu0 %v158
  %v340 = vpop.f32.mrb[0].mxu0
  %v341 = vadd.f32 %v78, %v340
  %v342 = vpop.f32.mrb[0].mxu0
  %v343 = vpop.f32.mrb[0].mxu0
  %v344 = vadd.f32 %v78, %v343
  %v345 = vpop.f32.mrb[0].mxu0
  %346 = vmatprep.mubr.bf16.mxu0 %v161
  %347 = vmatmul.mubr.bf16.gmra.mrb[0].mxu0 %v160
  %v348 = vpop.f32.mrb[0].mxu0
  %v349 = vadd.f32 %v78, %v348
  %v350 = vpop.f32.mrb[0].mxu0
  %v351 = vpop.f32.mrb[0].mxu0
  %v352 = vadd.f32 %v78, %v351
  %v353 = vpop.f32.mrb[0].mxu0
  %354 = vmatprep.mubr.bf16.mxu0 %v163
  %355 = vmatmul.mubr.bf16.gmra.mrb[0].mxu0 %v162
  %v356 = vpop.f32.mrb[0].mxu0
  %v357 = vadd.f32 %v78, %v356
  %v358 = vpop.f32.mrb[0].mxu0
  %v359 = vpop.f32.mrb[0].mxu0
  %v360 = vadd.f32 %v78, %v359
  %v361 = vpop.f32.mrb[0].mxu0
  %362 = vmatprep.mubr.bf16.mxu0 %v165
  %363 = vmatmul.mubr.bf16.gmra.mrb[0].mxu0 %v164
  %v364 = vpop.f32.mrb[0].mxu0
  %v365 = vadd.f32 %v78, %v364
  %v366 = vpop.f32.mrb[0].mxu0
  %v367 = vpop.f32.mrb[0].mxu0
  %v368 = vadd.f32 %v78, %v367
  %v369 = vpop.f32.mrb[0].mxu0
  %370 = vmatprep.mubr.bf16.mxu0 %v167
  %371 = vmatmul.mubr.bf16.gmra.mrb[0].mxu0 %v166
  %v372 = vpop.f32.mrb[0].mxu0
  %v373 = vadd.f32 %v78, %v372
  %v374 = vpop.f32.mrb[0].mxu0
  %v375 = vpop.f32.mrb[0].mxu0
  %v376 = vadd.f32 %v78, %v375
  %v377 = vpop.f32.mrb[0].mxu0
  %378 = vmatprep.mubr.bf16.mxu0 %v169
  %379 = vmatmul.mubr.bf16.gmra.mrb[0].mxu0 %v168
  %v380 = vpop.f32.mrb[0].mxu0
  %v381 = vadd.f32 %v78, %v380
  %v382 = vpop.f32.mrb[0].mxu0
  %v383 = vpop.f32.mrb[0].mxu0
  %v384 = vadd.f32 %v78, %v383
  %v385 = vpop.f32.mrb[0].mxu0
  %386 = vmatprep.mubr.bf16.mxu0 %v171
  %387 = vmatmul.mubr.bf16.gmra.mrb[0].mxu0 %v170
  %v388 = vpop.f32.mrb[0].mxu0
  %v389 = vadd.f32 %v78, %v388
  %v390 = vpop.f32.mrb[0].mxu0
  %v391 = vpop.f32.mrb[0].mxu0
  %v392 = vadd.f32 %v78, %v391
  %v393 = vpop.f32.mrb[0].mxu0
  %394 = vmatprep.mubr.bf16.mxu0 %v173
  %395 = vmatmul.mubr.bf16.gmra.mrb[0].mxu0 %v172
  %v396 = vpop.f32.mrb[0].mxu0
  %v397 = vadd.f32 %v78, %v396
  %v398 = vpop.f32.mrb[0].mxu0
  %v399 = vpop.f32.mrb[0].mxu0
  %v400 = vadd.f32 %v78, %v399
  %v401 = vpop.f32.mrb[0].mxu0
  %402 = vmatprep.mubr.bf16.mxu0 %v175
  %403 = vmatmul.mubr.bf16.gmra.mrb[0].mxu0 %v174
  %v404 = vpop.f32.mrb[0].mxu0
  %v405 = vadd.f32 %v78, %v404
  %v406 = vpop.f32.mrb[0].mxu0
  %v407 = vpop.f32.mrb[0].mxu0
  %v408 = vadd.f32 %v78, %v407
  %v409 = vpop.f32.mrb[0].mxu0
  %410 = vmatprep.mubr.bf16.mxu0 %v177
  %411 = vmatmul.mubr.bf16.gmra.mrb[0].mxu0 %v176
  %v412 = vpop.f32.mrb[0].mxu0
  %v413 = vadd.f32 %v78, %v412
  %v414 = vpop.f32.mrb[0].mxu0
  %v415 = vpop.f32.mrb[0].mxu0
  %v416 = vadd.f32 %v78, %v415
  %v417 = vpop.f32.mrb[0].mxu0
  %418 = vmatprep.mubr.bf16.mxu0 %v179
  %419 = vmatmul.mubr.bf16.gmra.mrb[0].mxu0 %v178
  %v420 = vpop.f32.mrb[0].mxu0
  %v421 = vadd.f32 %v78, %v420
  %v422 = vpop.f32.mrb[0].mxu0
  %v423 = vpop.f32.mrb[0].mxu0
  %v424 = vadd.f32 %v78, %v423
  %v425 = vpop.f32.mrb[0].mxu0
  %426 = vmatprep.mubr.bf16.mxu0 %v181
  %427 = vmatmul.mubr.bf16.gmra.mrb[0].mxu0 %v180
  %v428 = vpop.f32.mrb[0].mxu0
  %v429 = vadd.f32 %v78, %v428
  %v430 = vpop.f32.mrb[0].mxu0
  %v431 = vpop.f32.mrb[0].mxu0
  %v432 = vadd.f32 %v78, %v431
  %v433 = vpop.f32.mrb[0].mxu0
  %434 = vmatprep.mubr.bf16.mxu0 %v183
  %435 = vmatmul.mubr.bf16.gmra.mrb[0].mxu0 %v182
  %v436 = vpop.f32.mrb[0].mxu0
  %v437 = vadd.f32 %v78, %v436
  %v438 = vpop.f32.mrb[0].mxu0
  %v439 = vpop.f32.mrb[0].mxu0
  %v440 = vadd.f32 %v78, %v439
  %v441 = vpop.f32.mrb[0].mxu0
  %442 = vdwg.mxu0
  %v443 = vmax.f32 %v341, 0.0
  %v444 = vmax.f32 %v344, 0.0
  %v445 = vmax.f32 %v349, 0.0
  %v446 = vmax.f32 %v352, 0.0
  %v447 = vmax.f32 %v357, 0.0
  %v448 = vmax.f32 %v360, 0.0
  %v449 = vmax.f32 %v365, 0.0
  %v450 = vmax.f32 %v368, 0.0
  %v451 = vmax.f32 %v373, 0.0
  %v452 = vmax.f32 %v376, 0.0
  %v453 = vmax.f32 %v381, 0.0
  %v454 = vmax.f32 %v384, 0.0
  %v455 = vmax.f32 %v389, 0.0
  %v456 = vmax.f32 %v392, 0.0
  %v457 = vmax.f32 %v397, 0.0
  %v458 = vmax.f32 %v400, 0.0
  %v459 = vmax.f32 %v405, 0.0
  %v460 = vmax.f32 %v408, 0.0
  %v461 = vmax.f32 %v413, 0.0
  %v462 = vmax.f32 %v416, 0.0
  %v463 = vmax.f32 %v421, 0.0
  %v464 = vmax.f32 %v424, 0.0
  %v465 = vmax.f32 %v429, 0.0
  %v466 = vmax.f32 %v432, 0.0
  %v467 = vmax.f32 %v437, 0.0
  %v468 = vmax.f32 %v440, 0.0
  %v469 = vpack.c.bf16 %v444, %v443
  %v470 = vpack.c.bf16 %v446, %v445
  %v471 = vpack.c.bf16 %v448, %v447
  %v472 = vpack.c.bf16 %v450, %v449
  %v473 = vpack.c.bf16 %v452, %v451
  %v474 = vpack.c.bf16 %v454, %v453
  %v475 = vpack.c.bf16 %v456, %v455
  %v476 = vpack.c.bf16 %v458, %v457
  %v477 = vpack.c.bf16 %v460, %v459
  %v478 = vpack.c.bf16 %v462, %v461
  %v479 = vpack.c.bf16 %v464, %v463
  %v480 = vpack.c.bf16 %v466, %v465
  %v481 = vpack.c.bf16 %v468, %v467
  %v495 = vunpack.c.l.b16 %v469
  %v496 = vunpack.c.h.b16 %v469
  %v497 = vunpack.c.l.b16 %v470
  %v498 = vunpack.c.h.b16 %v470
  %v499 = vunpack.c.l.b16 %v471
  %v500 = vunpack.c.h.b16 %v471
  %v501 = vunpack.c.l.b16 %v472
  %v502 = vunpack.c.h.b16 %v472
  %v503 = vunpack.c.l.b16 %v473
  %v504 = vunpack.c.h.b16 %v473
  %v505 = vunpack.c.l.b16 %v474
  %v506 = vunpack.c.h.b16 %v474
  %v507 = vunpack.c.l.b16 %v475
  %v508 = vunpack.c.h.b16 %v475
  %v509 = vunpack.c.l.b16 %v476
  %v510 = vunpack.c.h.b16 %v476
  %v511 = vunpack.c.l.b16 %v477
  %v512 = vunpack.c.h.b16 %v477
  %v513 = vunpack.c.l.b16 %v478
  %v514 = vunpack.c.h.b16 %v478
  %v515 = vunpack.c.l.b16 %v479
  %v516 = vunpack.c.h.b16 %v479
  %v517 = vunpack.c.l.b16 %v480
  %v518 = vunpack.c.h.b16 %v480
  %v519 = vunpack.c.l.b16 %v481
  %v520 = vunpack.c.h.b16 %v481
  %v521 = vpack.c.b16 %v495, %v495
  %v522 = vpack.c.b16 %v496, %v496
  %v523 = vpack.c.b16 %v497, %v497
  %v524 = vpack.c.b16 %v498, %v498
  %v525 = vpack.c.b16 %v499, %v499
  %v526 = vpack.c.b16 %v500, %v500
  %v527 = vpack.c.b16 %v501, %v501
  %v528 = vpack.c.b16 %v502, %v502
  %v529 = vpack.c.b16 %v503, %v503
  %v530 = vpack.c.b16 %v504, %v504
  %v531 = vpack.c.b16 %v505, %v505
  %v532 = vpack.c.b16 %v506, %v506
  %v533 = vpack.c.b16 %v507, %v507
  %v534 = vpack.c.b16 %v508, %v508
  %v535 = vpack.c.b16 %v509, %v509
  %v536 = vpack.c.b16 %v510, %v510
  %v537 = vpack.c.b16 %v511, %v511
  %v538 = vpack.c.b16 %v512, %v512
  %v539 = vpack.c.b16 %v513, %v513
  %v540 = vpack.c.b16 %v514, %v514
  %v541 = vpack.c.b16 %v515, %v515
  %v542 = vpack.c.b16 %v516, %v516
  %v543 = vpack.c.b16 %v517, %v517
  %v544 = vpack.c.b16 %v518, %v518
  %v545 = vpack.c.b16 %v519, %v519
  %v546 = vpack.c.b16 %v520, %v520
  %573 = vst [vmem:[%s3] sm:$0xf] %v521
  %574 = vst [vmem:[%s3 + $0x4] sm:$0xf] %v522
  %575 = vst [vmem:[%s3 + $0x8] sm:$0xf] %v523
  %576 = vst [vmem:[%s3 + $0xc] sm:$0xf] %v524
  %577 = vst [vmem:[%s3 + $0x10] sm:$0xf] %v525
  %578 = vst [vmem:[%s3 + $0x14] sm:$0xf] %v526
  %579 = vst [vmem:[%s3 + $0x18] sm:$0xf] %v527
  %580 = vst [vmem:[%s3 + $0x1c] sm:$0xf] %v528
  %581 = vst [vmem:[%s3 + $0x20] sm:$0xf] %v529
  %582 = vst [vmem:[%s3 + $0x24] sm:$0xf] %v530
  %583 = vst [vmem:[%s3 + $0x28] sm:$0xf] %v531
  %584 = vst [vmem:[%s3 + $0x2c] sm:$0xf] %v532
  %585 = vst [vmem:[%s3 + $0x30] sm:$0xf] %v533
  %586 = vst [vmem:[%s3 + $0x34] sm:$0xf] %v534
  %587 = vst [vmem:[%s3 + $0x38] sm:$0xf] %v535
  %588 = vst [vmem:[%s3 + $0x3c] sm:$0xf] %v536
  %589 = vst [vmem:[%s3 + $0x40] sm:$0xf] %v537
  %590 = vst [vmem:[%s3 + $0x44] sm:$0xf] %v538
  %591 = vst [vmem:[%s3 + $0x48] sm:$0xf] %v539
  %592 = vst [vmem:[%s3 + $0x4c] sm:$0xf] %v540
  %593 = vst [vmem:[%s3 + $0x50] sm:$0xf] %v541
  %594 = vst [vmem:[%s3 + $0x54] sm:$0xf] %v542
  %595 = vst [vmem:[%s3 + $0x58] sm:$0xf] %v543
  %596 = vst [vmem:[%s3 + $0x5c] sm:$0xf] %v544
  %597 = vst [vmem:[%s3 + $0x60] sm:$0xf] %v545
  %598 = vst [vmem:[%s3 + $0x64] sm:$0xf] %v546
  // Predicated region
  $region14: #{deep_q_forward.4} parent=0 // pred_check
    _
  $region15: #{deep_q_forward.4} parent=0 // pred_check_branch
    %600 = sbr.rel (0) target = $region17
  $region16: #{deep_q_forward.4} parent=0 // pred_region
    _
  $region17: #{deep_q_forward.4} parent=0 // pred_fallthru
    _
  // Predicated region
  $region18: #{deep_q_forward.4} parent=0 // pred_check
    _
  $region19: #{deep_q_forward.4} parent=0 // pred_check_branch
    %602 = sbr.rel (0) target = $region21
  $region20: #{deep_q_forward.4} parent=0 // pred_region
    _
  $region21: #{deep_q_forward.4} parent=0 // pred_fallthru
    _

// kernel: deep_q_forward.5
$region0: #{deep_q_forward.5}
  #allocation0 [shape = 'u32[]', space=smem, size = 0x4, offset = 0x4, fixed_abs, tag = 'smem constant byte address 0x4 - core index']
  #allocation1 [shape = 'u32[144,128]{1,0:T(1,128)}', space=vmem, size = 0x12000, scoped, tag = 'internal scratch']
  %s0 = inlined_call_operand.vmem [shape: bf16[32,512], index: 0, kind: input, shape index: {}]
  %s1 = inlined_call_operand.vmem [shape: bf16[512,128], index: 1, kind: input, shape index: {}]
  %s2 = inlined_call_operand.vmem [shape: f32[1,128], index: 2, kind: input, shape index: {}]
  %s3 = inlined_call_operand.vmem [shape: bf16[32,128], index: 3, kind: output, shape index: {}]
  %s4 = sld [smem:[#allocation0]]
  $region22: #{deep_q_forward.5} parent=0
    _
  %s6 = ssub.s32 1, %s4
  %s7 = scalar_select 0, %s6, %s4
  // Predicated region
  $region2: #{deep_q_forward.5} parent=0 // pred_check
    _
  $region3: #{deep_q_forward.5} parent=0 // pred_check_branch
    %9 = sbr.rel (0) target = $region5
  $region4: #{deep_q_forward.5} parent=0 // pred_region
    _
  $region5: #{deep_q_forward.5} parent=0 // pred_fallthru
    _
  // Predicated region
  $region6: #{deep_q_forward.5} parent=0 // pred_check
    _
  $region7: #{deep_q_forward.5} parent=0 // pred_check_branch
    %11 = sbr.rel (0) target = $region9
  $region8: #{deep_q_forward.5} parent=0 // pred_region
    _
  $region9: #{deep_q_forward.5} parent=0 // pred_fallthru
    _
  // Predicated region
  $region10: #{deep_q_forward.5} parent=0 // pred_check
    _
  $region11: #{deep_q_forward.5} parent=0 // pred_check_branch
    %13 = sbr.rel (0) target = $region13
  $region12: #{deep_q_forward.5} parent=0 // pred_region
    _
  $region13: #{deep_q_forward.5} parent=0 // pred_fallthru
    _
  %v15 = vld [vmem:[%s0] sm:$0xff]
  %v16 = vld [vmem:[%s0 + $0x8] sm:$0xff]
  %v17 = vld [vmem:[%s0 + $0x10] sm:$0xff]
  %v18 = vld [vmem:[%s0 + $0x18] sm:$0xff]
  %v19 = vld [vmem:[%s0 + $0x20] sm:$0xff]
  %v20 = vld [vmem:[%s0 + $0x28] sm:$0xff]
  %v21 = vld [vmem:[%s0 + $0x30] sm:$0xff]
  %v22 = vld [vmem:[%s0 + $0x38] sm:$0xff]
  %v23 = vld [vmem:[%s1] sm:$0xf]
  %v24 = vld [vmem:[%s1 + $0x4] sm:$0xf]
  %v25 = vld [vmem:[%s1 + $0x8] sm:$0xf]
  %v26 = vld [vmem:[%s1 + $0xc] sm:$0xf]
  %v27 = vld [vmem:[%s1 + $0x10] sm:$0xf]
  %v28 = vld [vmem:[%s1 + $0x14] sm:$0xf]
  %v29 = vld [vmem:[%s1 + $0x18] sm:$0xf]
  %v30 = vld [vmem:[%s1 + $0x1c] sm:$0xf]
  %v31 = vld [vmem:[%s1 + $0x20] sm:$0xf]
  %v32 = vld [vmem:[%s1 + $0x24] sm:$0xf]
  %v33 = vld [vmem:[%s1 + $0x28] sm:$0xf]
  %v34 = vld [vmem:[%s1 + $0x2c] sm:$0xf]
  %v35 = vld [vmem:[%s1 + $0x30] sm:$0xf]
  %v36 = vld [vmem:[%s1 + $0x34] sm:$0xf]
  %v37 = vld [vmem:[%s1 + $0x38] sm:$0xf]
  %v38 = vld [vmem:[%s1 + $0x3c] sm:$0xf]
  %v39 = vld [vmem:[%s1 + $0x40] sm:$0xf]
  %v40 = vld [vmem:[%s1 + $0x44] sm:$0xf]
  %v41 = vld [vmem:[%s1 + $0x48] sm:$0xf]
  %v42 = vld [vmem:[%s1 + $0x4c] sm:$0xf]
  %v43 = vld [vmem:[%s1 + $0x50] sm:$0xf]
  %v44 = vld [vmem:[%s1 + $0x54] sm:$0xf]
  %v45 = vld [vmem:[%s1 + $0x58] sm:$0xf]
  %v46 = vld [vmem:[%s1 + $0x5c] sm:$0xf]
  %v47 = vld [vmem:[%s1 + $0x60] sm:$0xf]
  %v48 = vld [vmem:[%s1 + $0x64] sm:$0xf]
  %v49 = vld [vmem:[%s1 + $0x68] sm:$0xf]
  %v50 = vld [vmem:[%s1 + $0x6c] sm:$0xf]
  %v51 = vld [vmem:[%s1 + $0x70] sm:$0xf]
  %v52 = vld [vmem:[%s1 + $0x74] sm:$0xf]
  %v53 = vld [vmem:[%s1 + $0x78] sm:$0xf]
  %v54 = vld [vmem:[%s1 + $0x7c] sm:$0xf]
  %v55 = vld [vmem:[%s1 + $0x80] sm:$0xf]
  %v56 = vld [vmem:[%s1 + $0x84] sm:$0xf]
  %v57 = vld [vmem:[%s1 + $0x88] sm:$0xf]
  %v58 = vld [vmem:[%s1 + $0x8c] sm:$0xf]
  %v59 = vld [vmem:[%s1 + $0x90] sm:$0xf]
  %v60 = vld [vmem:[%s1 + $0x94] sm:$0xf]
  %v61 = vld [vmem:[%s1 + $0x98] sm:$0xf]
  %v62 = vld [vmem:[%s1 + $0x9c] sm:$0xf]
  %v63 = vld [vmem:[%s1 + $0xa0] sm:$0xf]
  %v64 = vld [vmem:[%s1 + $0xa4] sm:$0xf]
  %v65 = vld [vmem:[%s1 + $0xa8] sm:$0xf]
  %v66 = vld [vmem:[%s1 + $0xac] sm:$0xf]
  %v67 = vld [vmem:[%s1 + $0xb0] sm:$0xf]
  %v68 = vld [vmem:[%s1 + $0xb4] sm:$0xf]
  %v69 = vld [vmem:[%s1 + $0xb8] sm:$0xf]
  %v70 = vld [vmem:[%s1 + $0xbc] sm:$0xf]
  %v71 = vld [vmem:[%s1 + $0xc0] sm:$0xf]
  %v72 = vld [vmem:[%s1 + $0xc4] sm:$0xf]
  %v73 = vld [vmem:[%s1 + $0xc8] sm:$0xf]
  %v74 = vld [vmem:[%s1 + $0xcc] sm:$0xf]
  %v75 = vld [vmem:[%s1 + $0xd0] sm:$0xf]
  %v76 = vld [vmem:[%s1 + $0xd4] sm:$0xf]
  %v77 = vld [vmem:[%s1 + $0xd8] sm:$0xf]
  %v78 = vld [vmem:[%s1 + $0xdc] sm:$0xf]
  %v79 = vld [vmem:[%s1 + $0xe0] sm:$0xf]
  %v80 = vld [vmem:[%s1 + $0xe4] sm:$0xf]
  %v81 = vld [vmem:[%s1 + $0xe8] sm:$0xf]
  %v82 = vld [vmem:[%s1 + $0xec] sm:$0xf]
  %v83 = vld [vmem:[%s1 + $0xf0] sm:$0xf]
  %v84 = vld [vmem:[%s1 + $0xf4] sm:$0xf]
  %v85 = vld [vmem:[%s1 + $0xf8] sm:$0xf]
  %v86 = vld [vmem:[%s1 + $0xfc] sm:$0xf]
  %v87 = vld [vmem:[%s2] sm:$0x1]
  %v89 = vlaneseq
  %v90 = vshrl.u32 %v89, 7
  %v91 = vsub.s32 0, %v90
  %v92 = vrot.slane %v87, %v91
  %v102 = vunpack.c.l.b16 %v15
  %v103 = vunpack.c.h.b16 %v15
  %v104 = vunpack.c.l.b16 %v16
  %v105 = vunpack.c.h.b16 %v16
  %v106 = vunpack.c.l.b16 %v17
  %v107 = vunpack.c.h.b16 %v17
  %v108 = vunpack.c.l.b16 %v18
  %v109 = vunpack.c.h.b16 %v18
  %v110 = vunpack.c.l.b16 %v19
  %v111 = vunpack.c.h.b16 %v19
  %v112 = vunpack.c.l.b16 %v20
  %v113 = vunpack.c.h.b16 %v20
  %v114 = vunpack.c.l.b16 %v21
  %v115 = vunpack.c.h.b16 %v21
  %v116 = vunpack.c.l.b16 %v22
  %v117 = vunpack.c.h.b16 %v22
  %v118 = vpack.c.b16 %v106, %v102
  %v119 = vpack.c.b16 %v107, %v103
  %v120 = vpack.c.b16 %v108, %v104
  %v121 = vpack.c.b16 %v109, %v105
  %v122 = vpack.c.b16 %v114, %v110
  %v123 = vpack.c.b16 %v115, %v111
  %v124 = vpack.c.b16 %v116, %v112
  %v125 = vpack.c.b16 %v117, %v113
  %v198 = vunpack.c.l.b16 %v23
  %v199 = vunpack.c.l.b16 %v24
  %v200 = vunpack.c.l.b16 %v25
  %v201 = vunpack.c.l.b16 %v26
  %v202 = vunpack.c.l.b16 %v27
  %v203 = vunpack.c.l.b16 %v28
  %v204 = vunpack.c.l.b16 %v29
  %v205 = vunpack.c.l.b16 %v30
  %v206 = vunpack.c.l.b16 %v31
  %v207 = vunpack.c.l.b16 %v32
  %v208 = vunpack.c.l.b16 %v33
  %v209 = vunpack.c.l.b16 %v34
  %v210 = vunpack.c.l.b16 %v35
  %v211 = vunpack.c.l.b16 %v36
  %v212 = vunpack.c.l.b16 %v37
  %v213 = vunpack.c.l.b16 %v38
  %v214 = vunpack.c.l.b16 %v39
  %v215 = vunpack.c.l.b16 %v40
  %v216 = vunpack.c.l.b16 %v41
  %v217 = vunpack.c.l.b16 %v42
  %v218 = vunpack.c.l.b16 %v43
  %v219 = vunpack.c.l.b16 %v44
  %v220 = vunpack.c.l.b16 %v45
  %v221 = vunpack.c.l.b16 %v46
  %v222 = vunpack.c.l.b16 %v47
  %v223 = vunpack.c.l.b16 %v48
  %v224 = vunpack.c.l.b16 %v49
  %v225 = vunpack.c.l.b16 %v50
  %v226 = vunpack.c.l.b16 %v51
  %v227 = vunpack.c.l.b16 %v52
  %v228 = vunpack.c.l.b16 %v53
  %v229 = vunpack.c.l.b16 %v54
  %v230 = vunpack.c.l.b16 %v55
  %v231 = vunpack.c.l.b16 %v56
  %v232 = vunpack.c.l.b16 %v57
  %v233 = vunpack.c.l.b16 %v58
  %v234 = vunpack.c.l.b16 %v59
  %v235 = vunpack.c.l.b16 %v60
  %v236 = vunpack.c.l.b16 %v61
  %v237 = vunpack.c.l.b16 %v62
  %v238 = vunpack.c.l.b16 %v63
  %v239 = vunpack.c.l.b16 %v64
  %v240 = vunpack.c.l.b16 %v65
  %v241 = vunpack.c.l.b16 %v66
  %v242 = vunpack.c.l.b16 %v67
  %v243 = vunpack.c.l.b16 %v68
  %v244 = vunpack.c.l.b16 %v69
  %v245 = vunpack.c.l.b16 %v70
  %v246 = vunpack.c.l.b16 %v71
  %v247 = vunpack.c.l.b16 %v72
  %v248 = vunpack.c.l.b16 %v73
  %v249 = vunpack.c.l.b16 %v74
  %v250 = vunpack.c.l.b16 %v75
  %v251 = vunpack.c.l.b16 %v76
  %v252 = vunpack.c.l.b16 %v77
  %v253 = vunpack.c.l.b16 %v78
  %v254 = vunpack.c.l.b16 %v79
  %v255 = vunpack.c.l.b16 %v80
  %v256 = vunpack.c.l.b16 %v81
  %v257 = vunpack.c.l.b16 %v82
  %v258 = vunpack.c.l.b16 %v83
  %v259 = vunpack.c.l.b16 %v84
  %v260 = vunpack.c.l.b16 %v85
  %v261 = vunpack.c.l.b16 %v86
  %v262 = vpack.c.b16 %v199, %v198
  %v263 = vpack.c.b16 %v201, %v200
  %v264 = vpack.c.b16 %v203, %v202
  %v265 = vpack.c.b16 %v205, %v204
  %v266 = vpack.c.b16 %v207, %v206
  %v267 = vpack.c.b16 %v209, %v208
  %v268 = vpack.c.b16 %v211, %v210
  %v269 = vpack.c.b16 %v213, %v212
  %v270 = vpack.c.b16 %v215, %v214
  %v271 = vpack.c.b16 %v217, %v216
  %v272 = vpack.c.b16 %v219, %v218
  %v273 = vpack.c.b16 %v221, %v220
  %v274 = vpack.c.b16 %v223, %v222
  %v275 = vpack.c.b16 %v225, %v224
  %v276 = vpack.c.b16 %v227, %v226
  %v277 = vpack.c.b16 %v229, %v228
  %v278 = vpack.c.b16 %v231, %v230
  %v279 = vpack.c.b16 %v233, %v232
  %v280 = vpack.c.b16 %v235, %v234
  %v281 = vpack.c.b16 %v237, %v236
  %v282 = vpack.c.b16 %v239, %v238
  %v283 = vpack.c.b16 %v241, %v240
  %v284 = vpack.c.b16 %v243, %v242
  %v285 = vpack.c.b16 %v245, %v244
  %v286 = vpack.c.b16 %v247, %v246
  %v287 = vpack.c.b16 %v249, %v248
  %v288 = vpack.c.b16 %v251, %v250
  %v289 = vpack.c.b16 %v253, %v252
  %v290 = vpack.c.b16 %v255, %v254
  %v291 = vpack.c.b16 %v257, %v256
  %v292 = vpack.c.b16 %v259, %v258
  %v293 = vpack.c.b16 %v261, %v260
  %326 = vmatprep.subr.bf16.mxu0 0
  %327 = vmatpush1.bf16.msra.mxu0 %v262
  %328 = vmatprep.subr.bf16.mxu0 0
  %329 = vmatpush1.bf16.msra.mxu0 %v263
  %330 = vmatprep.subr.bf16.mxu0 0
  %331 = vmatpush1.bf16.msra.mxu0 %v264
  %332 = vmatprep.subr.bf16.mxu0 0
  %333 = vmatpush1.bf16.msra.mxu0 %v265
  %334 = vmatprep.subr.bf16.mxu0 0
  %335 = vmatpush1.bf16.msra.mxu0 %v266
  %336 = vmatprep.subr.bf16.mxu0 0
  %337 = vmatpush1.bf16.msra.mxu0 %v267
  %338 = vmatprep.subr.bf16.mxu0 0
  %339 = vmatpush1.bf16.msra.mxu0 %v268
  %340 = vmatprep.subr.bf16.mxu0 0
  %341 = vmatpush1.bf16.msra.mxu0 %v269
  %342 = vmatprep.subr.bf16.mxu0 0
  %343 = vmatpush1.bf16.msra.mxu0 %v270
  %344 = vmatprep.subr.bf16.mxu0 0
  %345 = vmatpush1.bf16.msra.mxu0 %v271
  %346 = vmatprep.subr.bf16.mxu0 0
  %347 = vmatpush1.bf16.msra.mxu0 %v272
  %348 = vmatprep.subr.bf16.mxu0 0
  %349 = vmatpush1.bf16.msra.mxu0 %v273
  %350 = vmatprep.subr.bf16.mxu0 0
  %351 = vmatpush1.bf16.msra.mxu0 %v274
  %352 = vmatprep.subr.bf16.mxu0 0
  %353 = vmatpush1.bf16.msra.mxu0 %v275
  %354 = vmatprep.subr.bf16.mxu0 0
  %355 = vmatpush1.bf16.msra.mxu0 %v276
  %356 = vmatprep.subr.bf16.mxu0 0
  %357 = vmatpush1.bf16.msra.mxu0 %v277
  %358 = vmatprep.mubr.bf16.mxu0 %v119
  %359 = vmatmul.mubr.bf16.gmra.mrb[0].mxu0 %v118
  %v360 = vpop.f32.mrb[0].mxu0
  %v361 = vadd.f32 %v92, %v360
  %v362 = vpop.f32.mrb[0].mxu0
  %v363 = vpop.f32.mrb[0].mxu0
  %v364 = vadd.f32 %v92, %v363
  %v365 = vpop.f32.mrb[0].mxu0
  %366 = vmatprep.mubr.bf16.mxu0 %v123
  %367 = vmatmul.mubr.bf16.gmra.mrb[0].mxu0 %v122
  %v368 = vpop.f32.mrb[0].mxu0
  %v369 = vadd.f32 %v92, %v368
  %v370 = vpop.f32.mrb[0].mxu0
  %v371 = vpop.f32.mrb[0].mxu0
  %v372 = vadd.f32 %v92, %v371
  %v373 = vpop.f32.mrb[0].mxu0
  %374 = vdwg.mxu0
  %375 = vmatprep.subr.bf16.mxu0 0
  %376 = vmatpush1.bf16.msra.mxu0 %v278
  %377 = vmatprep.subr.bf16.mxu0 0
  %378 = vmatpush1.bf16.msra.mxu0 %v279
  %379 = vmatprep.subr.bf16.mxu0 0
  %380 = vmatpush1.bf16.msra.mxu0 %v280
  %381 = vmatprep.subr.bf16.mxu0 0
  %382 = vmatpush1.bf16.msra.mxu0 %v281
  %383 = vmatprep.subr.bf16.mxu0 0
  %384 = vmatpush1.bf16.msra.mxu0 %v282
  %385 = vmatprep.subr.bf16.mxu0 0
  %386 = vmatpush1.bf16.msra.mxu0 %v283
  %387 = vmatprep.subr.bf16.mxu0 0
  %388 = vmatpush1.bf16.msra.mxu0 %v284
  %389 = vmatprep.subr.bf16.mxu0 0
  %390 = vmatpush1.bf16.msra.mxu0 %v285
  %391 = vmatprep.subr.bf16.mxu0 0
  %392 = vmatpush1.bf16.msra.mxu0 %v286
  %393 = vmatprep.subr.bf16.mxu0 0
  %394 = vmatpush1.bf16.msra.mxu0 %v287
  %395 = vmatprep.subr.bf16.mxu0 0
  %396 = vmatpush1.bf16.msra.mxu0 %v288
  %397 = vmatprep.subr.bf16.mxu0 0
  %398 = vmatpush1.bf16.msra.mxu0 %v289
  %399 = vmatprep.subr.bf16.mxu0 0
  %400 = vmatpush1.bf16.msra.mxu0 %v290
  %401 = vmatprep.subr.bf16.mxu0 0
  %402 = vmatpush1.bf16.msra.mxu0 %v291
  %403 = vmatprep.subr.bf16.mxu0 0
  %404 = vmatpush1.bf16.msra.mxu0 %v292
  %405 = vmatprep.subr.bf16.mxu0 0
  %406 = vmatpush1.bf16.msra.mxu0 %v293
  %407 = vmatprep.mubr.bf16.mxu0 %v121
  %408 = vmatmul.mubr.bf16.gmra.mrb[0].mxu0 %v120
  %v409 = vpop.f32.mrb[0].mxu0
  %v410 = vadd.f32 %v361, %v409
  %v411 = vpop.f32.mrb[0].mxu0
  %v412 = vpop.f32.mrb[0].mxu0
  %v413 = vadd.f32 %v364, %v412
  %v414 = vpop.f32.mrb[0].mxu0
  %415 = vmatprep.mubr.bf16.mxu0 %v125
  %416 = vmatmul.mubr.bf16.gmra.mrb[0].mxu0 %v124
  %v417 = vpop.f32.mrb[0].mxu0
  %v418 = vadd.f32 %v369, %v417
  %v419 = vpop.f32.mrb[0].mxu0
  %v420 = vpop.f32.mrb[0].mxu0
  %v421 = vadd.f32 %v372, %v420
  %v422 = vpop.f32.mrb[0].mxu0
  %423 = vdwg.mxu0
  %v424 = vmax.f32 %v410, 0.0
  %v425 = vmax.f32 %v413, 0.0
  %v426 = vmax.f32 %v418, 0.0
  %v427 = vmax.f32 %v421, 0.0
  %v428 = vpack.c.bf16 %v425, %v424
  %v429 = vpack.c.bf16 %v427, %v426
  %v432 = vunpack.c.l.b16 %v428
  %v433 = vunpack.c.h.b16 %v428
  %v434 = vunpack.c.l.b16 %v429
  %v435 = vunpack.c.h.b16 %v429
  %v436 = vpack.c.b16 %v432, %v432
  %v437 = vpack.c.b16 %v433, %v433
  %v438 = vpack.c.b16 %v434, %v434
  %v439 = vpack.c.b16 %v435, %v435
  %444 = vst [vmem:[%s3] sm:$0xf] %v436
  %445 = vst [vmem:[%s3 + $0x4] sm:$0xf] %v437
  %446 = vst [vmem:[%s3 + $0x8] sm:$0xf] %v438
  %447 = vst [vmem:[%s3 + $0xc] sm:$0xf] %v439
  // Predicated region
  $region14: #{deep_q_forward.5} parent=0 // pred_check
    _
  $region15: #{deep_q_forward.5} parent=0 // pred_check_branch
    %449 = sbr.rel (0) target = $region17
  $region16: #{deep_q_forward.5} parent=0 // pred_region
    _
  $region17: #{deep_q_forward.5} parent=0 // pred_fallthru
    _
  // Predicated region
  $region18: #{deep_q_forward.5} parent=0 // pred_check
    _
  $region19: #{deep_q_forward.5} parent=0 // pred_check_branch
    %451 = sbr.rel (0) target = $region21
  $region20: #{deep_q_forward.5} parent=0 // pred_region
    _
  $region21: #{deep_q_forward.5} parent=0 // pred_fallthru
    _

// kernel: deep_q_forward.6
$region0: #{deep_q_forward.6}
  #allocation0 [shape = 'u32[]', space=smem, size = 0x4, offset = 0x4, fixed_abs, tag = 'smem constant byte address 0x4 - core index']
  #allocation1 [shape = 'u32[144,128]{1,0:T(1,128)}', space=vmem, size = 0x12000, scoped, tag = 'internal scratch']
  %s0 = inlined_call_operand.vmem [shape: bf16[16,640], index: 0, kind: input, shape index: {}]
  %s1 = inlined_call_operand.vmem [shape: bf16[640,128], index: 1, kind: input, shape index: {}]
  %s2 = inlined_call_operand.vmem [shape: f32[1,128], index: 2, kind: input, shape index: {}]
  %s3 = inlined_call_operand.vmem [shape: bf16[16,128], index: 3, kind: output, shape index: {}]
  %s4 = sld [smem:[#allocation0]]
  $region22: #{deep_q_forward.6} parent=0
    _
  %s6 = ssub.s32 1, %s4
  %s7 = scalar_select 0, %s6, %s4
  // Predicated region
  $region2: #{deep_q_forward.6} parent=0 // pred_check
    _
  $region3: #{deep_q_forward.6} parent=0 // pred_check_branch
    %9 = sbr.rel (0) target = $region5
  $region4: #{deep_q_forward.6} parent=0 // pred_region
    _
  $region5: #{deep_q_forward.6} parent=0 // pred_fallthru
    _
  // Predicated region
  $region6: #{deep_q_forward.6} parent=0 // pred_check
    _
  $region7: #{deep_q_forward.6} parent=0 // pred_check_branch
    %11 = sbr.rel (0) target = $region9
  $region8: #{deep_q_forward.6} parent=0 // pred_region
    _
  $region9: #{deep_q_forward.6} parent=0 // pred_fallthru
    _
  // Predicated region
  $region10: #{deep_q_forward.6} parent=0 // pred_check
    _
  $region11: #{deep_q_forward.6} parent=0 // pred_check_branch
    %13 = sbr.rel (0) target = $region13
  $region12: #{deep_q_forward.6} parent=0 // pred_region
    _
  $region13: #{deep_q_forward.6} parent=0 // pred_fallthru
    _
  %v15 = vld [vmem:[%s0] sm:$0xff]
  %v16 = vld [vmem:[%s0 + $0x8] sm:$0xff]
  %v17 = vld [vmem:[%s0 + $0x10] sm:$0xf]
  %v18 = vld [vmem:[%s0 + $0x14] sm:$0xff]
  %v19 = vld [vmem:[%s0 + $0x1c] sm:$0xff]
  %v20 = vld [vmem:[%s0 + $0x24] sm:$0xf]
  %v21 = vld [vmem:[%s1] sm:$0xf]
  %v22 = vld [vmem:[%s1 + $0x4] sm:$0xf]
  %v23 = vld [vmem:[%s1 + $0x8] sm:$0xf]
  %v24 = vld [vmem:[%s1 + $0xc] sm:$0xf]
  %v25 = vld [vmem:[%s1 + $0x10] sm:$0xf]
  %v26 = vld [vmem:[%s1 + $0x14] sm:$0xf]
  %v27 = vld [vmem:[%s1 + $0x18] sm:$0xf]
  %v28 = vld [vmem:[%s1 + $0x1c] sm:$0xf]
  %v29 = vld [vmem:[%s1 + $0x20] sm:$0xf]
  %v30 = vld [vmem:[%s1 + $0x24] sm:$0xf]
  %v31 = vld [vmem:[%s1 + $0x28] sm:$0xf]
  %v32 = vld [vmem:[%s1 + $0x2c] sm:$0xf]
  %v33 = vld [vmem:[%s1 + $0x30] sm:$0xf]
  %v34 = vld [vmem:[%s1 + $0x34] sm:$0xf]
  %v35 = vld [vmem:[%s1 + $0x38] sm:$0xf]
  %v36 = vld [vmem:[%s1 + $0x3c] sm:$0xf]
  %v37 = vld [vmem:[%s1 + $0x40] sm:$0xf]
  %v38 = vld [vmem:[%s1 + $0x44] sm:$0xf]
  %v39 = vld [vmem:[%s1 + $0x48] sm:$0xf]
  %v40 = vld [vmem:[%s1 + $0x4c] sm:$0xf]
  %v41 = vld [vmem:[%s1 + $0x50] sm:$0xf]
  %v42 = vld [vmem:[%s1 + $0x54] sm:$0xf]
  %v43 = vld [vmem:[%s1 + $0x58] sm:$0xf]
  %v44 = vld [vmem:[%s1 + $0x5c] sm:$0xf]
  %v45 = vld [vmem:[%s1 + $0x60] sm:$0xf]
  %v46 = vld [vmem:[%s1 + $0x64] sm:$0xf]
  %v47 = vld [vmem:[%s1 + $0x68] sm:$0xf]
  %v48 = vld [vmem:[%s1 + $0x6c] sm:$0xf]
  %v49 = vld [vmem:[%s1 + $0x70] sm:$0xf]
  %v50 = vld [vmem:[%s1 + $0x74] sm:$0xf]
  %v51 = vld [vmem:[%s1 + $0x78] sm:$0xf]
  %v52 = vld [vmem:[%s1 + $0x7c] sm:$0xf]
  %v53 = vld [vmem:[%s1 + $0x80] sm:$0xf]
  %v54 = vld [vmem:[%s1 + $0x84] sm:$0xf]
  %v55 = vld [vmem:[%s1 + $0x88] sm:$0xf]
  %v56 = vld [vmem:[%s1 + $0x8c] sm:$0xf]
  %v57 = vld [vmem:[%s1 + $0x90] sm:$0xf]
  %v58 = vld [vmem:[%s1 + $0x94] sm:$0xf]
  %v59 = vld [vmem:[%s1 + $0x98] sm:$0xf]
  %v60 = vld [vmem:[%s1 + $0x9c] sm:$0xf]
  %v61 = vld [vmem:[%s1 + $0xa0] sm:$0xf]
  %v62 = vld [vmem:[%s1 + $0xa4] sm:$0xf]
  %v63 = vld [vmem:[%s1 + $0xa8] sm:$0xf]
  %v64 = vld [vmem:[%s1 + $0xac] sm:$0xf]
  %v65 = vld [vmem:[%s1 + $0xb0] sm:$0xf]
  %v66 = vld [vmem:[%s1 + $0xb4] sm:$0xf]
  %v67 = vld [vmem:[%s1 + $0xb8] sm:$0xf]
  %v68 = vld [vmem:[%s1 + $0xbc] sm:$0xf]
  %v69 = vld [vmem:[%s1 + $0xc0] sm:$0xf]
  %v70 = vld [vmem:[%s1 + $0xc4] sm:$0xf]
  %v71 = vld [vmem:[%s1 + $0xc8] sm:$0xf]
  %v72 = vld [vmem:[%s1 + $0xcc] sm:$0xf]
  %v73 = vld [vmem:[%s1 + $0xd0] sm:$0xf]
  %v74 = vld [vmem:[%s1 + $0xd4] sm:$0xf]
  %v75 = vld [vmem:[%s1 + $0xd8] sm:$0xf]
  %v76 = vld [vmem:[%s1 + $0xdc] sm:$0xf]
  %v77 = vld [vmem:[%s1 + $0xe0] sm:$0xf]
  %v78 = vld [vmem:[%s1 + $0xe4] sm:$0xf]
  %v79 = vld [vmem:[%s1 + $0xe8] sm:$0xf]
  %v80 = vld [vmem:[%s1 + $0xec] sm:$0xf]
  %v81 = vld [vmem:[%s1 + $0xf0] sm:$0xf]
  %v82 = vld [vmem:[%s1 + $0xf4] sm:$0xf]
  %v83 = vld [vmem:[%s1 + $0xf8] sm:$0xf]
  %v84 = vld [vmem:[%s1 + $0xfc] sm:$0xf]
  %v85 = vld [vmem:[%s1 + $0x100] sm:$0xf]
  %v86 = vld [vmem:[%s1 + $0x104] sm:$0xf]
  %v87 = vld [vmem:[%s1 + $0x108] sm:$0xf]
  %v88 = vld [vmem:[%s1 + $0x10c] sm:$0xf]
  %v89 = vld [vmem:[%s1 + $0x110] sm:$0xf]
  %v90 = vld [vmem:[%s1 + $0x114] sm:$0xf]
  %v91 = vld [vmem:[%s1 + $0x118] sm:$0xf]
  %v92 = vld [vmem:[%s1 + $0x11c] sm:$0xf]
  %v93 = vld [vmem:[%s1 + $0x120] sm:$0xf]
  %v94 = vld [vmem:[%s1 + $0x124] sm:$0xf]
  %v95 = vld [vmem:[%s1 + $0x128] sm:$0xf]
  %v96 = vld [vmem:[%s1 + $0x12c] sm:$0xf]
  %v97 = vld [vmem:[%s1 + $0x130] sm:$0xf]
  %v98 = vld [vmem:[%s1 + $0x134] sm:$0xf]
  %v99 = vld [vmem:[%s1 + $0x138] sm:$0xf]
  %v100 = vld [vmem:[%s1 + $0x13c] sm:$0xf]
  %v101 = vld [vmem:[%s2] sm:$0x1]
  %v103 = vlaneseq
  %v104 = vshrl.u32 %v103, 7
  %v105 = vsub.s32 0, %v104
  %v106 = vrot.slane %v101, %v105
  %v114 = vunpack.c.l.b16 %v15
  %v115 = vunpack.c.h.b16 %v15
  %v116 = vunpack.c.l.b16 %v16
  %v117 = vunpack.c.h.b16 %v16
  %v118 = vunpack.c.l.b16 %v17
  %v119 = vunpack.c.l.b16 %v18
  %v120 = vunpack.c.h.b16 %v18
  %v121 = vunpack.c.l.b16 %v19
  %v122 = vunpack.c.h.b16 %v19
  %v123 = vunpack.c.l.b16 %v20
  %v124 = vpack.c.b16 %v119, %v114
  %v125 = vpack.c.b16 %v120, %v115
  %v126 = vpack.c.b16 %v121, %v116
  %v127 = vpack.c.b16 %v122, %v117
  %v128 = vpack.c.b16 %v123, %v118
  %v214 = vunpack.c.l.b16 %v21
  %v215 = vunpack.c.l.b16 %v22
  %v216 = vunpack.c.l.b16 %v23
  %v217 = vunpack.c.l.b16 %v24
  %v218 = vunpack.c.l.b16 %v25
  %v219 = vunpack.c.l.b16 %v26
  %v220 = vunpack.c.l.b16 %v27
  %v221 = vunpack.c.l.b16 %v28
  %v222 = vunpack.c.l.b16 %v29
  %v223 = vunpack.c.l.b16 %v30
  %v224 = vunpack.c.l.b16 %v31
  %v225 = vunpack.c.l.b16 %v32
  %v226 = vunpack.c.l.b16 %v33
  %v227 = vunpack.c.l.b16 %v34
  %v228 = vunpack.c.l.b16 %v35
  %v229 = vunpack.c.l.b16 %v36
  %v230 = vunpack.c.l.b16 %v37
  %v231 = vunpack.c.l.b16 %v38
  %v232 = vunpack.c.l.b16 %v39
  %v233 = vunpack.c.l.b16 %v40
  %v234 = vunpack.c.l.b16 %v41
  %v235 = vunpack.c.l.b16 %v42
  %v236 = vunpack.c.l.b16 %v43
  %v237 = vunpack.c.l.b16 %v44
  %v238 = vunpack.c.l.b16 %v45
  %v239 = vunpack.c.l.b16 %v46
  %v240 = vunpack.c.l.b16 %v47
  %v241 = vunpack.c.l.b16 %v48
  %v242 = vunpack.c.l.b16 %v49
  %v243 = vunpack.c.l.b16 %v50
  %v244 = vunpack.c.l.b16 %v51
  %v245 = vunpack.c.l.b16 %v52
  %v246 = vunpack.c.l.b16 %v53
  %v247 = vunpack.c.l.b16 %v54
  %v248 = vunpack.c.l.b16 %v55
  %v249 = vunpack.c.l.b16 %v56
  %v250 = vunpack.c.l.b16 %v57
  %v251 = vunpack.c.l.b16 %v58
  %v252 = vunpack.c.l.b16 %v59
  %v253 = vunpack.c.l.b16 %v60
  %v254 = vunpack.c.l.b16 %v61
  %v255 = vunpack.c.l.b16 %v62
  %v256 = vunpack.c.l.b16 %v63
  %v257 = vunpack.c.l.b16 %v64
  %v258 = vunpack.c.l.b16 %v65
  %v259 = vunpack.c.l.b16 %v66
  %v260 = vunpack.c.l.b16 %v67
  %v261 = vunpack.c.l.b16 %v68
  %v262 = vunpack.c.l.b16 %v69
  %v263 = vunpack.c.l.b16 %v70
  %v264 = vunpack.c.l.b16 %v71
  %v265 = vunpack.c.l.b16 %v72
  %v266 = vunpack.c.l.b16 %v73
  %v267 = vunpack.c.l.b16 %v74
  %v268 = vunpack.c.l.b16 %v75
  %v269 = vunpack.c.l.b16 %v76
  %v270 = vunpack.c.l.b16 %v77
  %v271 = vunpack.c.l.b16 %v78
  %v272 = vunpack.c.l.b16 %v79
  %v273 = vunpack.c.l.b16 %v80
  %v274 = vunpack.c.l.b16 %v81
  %v275 = vunpack.c.l.b16 %v82
  %v276 = vunpack.c.l.b16 %v83
  %v277 = vunpack.c.l.b16 %v84
  %v278 = vunpack.c.l.b16 %v85
  %v279 = vunpack.c.l.b16 %v86
  %v280 = vunpack.c.l.b16 %v87
  %v281 = vunpack.c.l.b16 %v88
  %v282 = vunpack.c.l.b16 %v89
  %v283 = vunpack.c.l.b16 %v90
  %v284 = vunpack.c.l.b16 %v91
  %v285 = vunpack.c.l.b16 %v92
  %v286 = vunpack.c.l.b16 %v93
  %v287 = vunpack.c.l.b16 %v94
  %v288 = vunpack.c.l.b16 %v95
  %v289 = vunpack.c.l.b16 %v96
  %v290 = vunpack.c.l.b16 %v97
  %v291 = vunpack.c.l.b16 %v98
  %v292 = vunpack.c.l.b16 %v99
  %v293 = vunpack.c.l.b16 %v100
  %v294 = vpack.c.b16 %v215, %v214
  %v295 = vpack.c.b16 %v217, %v216
  %v296 = vpack.c.b16 %v219, %v218
  %v297 = vpack.c.b16 %v221, %v220
  %v298 = vpack.c.b16 %v223, %v222
  %v299 = vpack.c.b16 %v225, %v224
  %v300 = vpack.c.b16 %v227, %v226
  %v301 = vpack.c.b16 %v229, %v228
  %v302 = vpack.c.b16 %v231, %v230
  %v303 = vpack.c.b16 %v233, %v232
  %v304 = vpack.c.b16 %v235, %v234
  %v305 = vpack.c.b16 %v237, %v236
  %v306 = vpack.c.b16 %v239, %v238
  %v307 = vpack.c.b16 %v241, %v240
  %v308 = vpack.c.b16 %v243, %v242
  %v309 = vpack.c.b16 %v245, %v244
  %v310 = vpack.c.b16 %v247, %v246
  %v311 = vpack.c.b16 %v249, %v248
  %v312 = vpack.c.b16 %v251, %v250
  %v313 = vpack.c.b16 %v253, %v252
  %v314 = vpack.c.b16 %v255, %v254
  %v315 = vpack.c.b16 %v257, %v256
  %v316 = vpack.c.b16 %v259, %v258
  %v317 = vpack.c.b16 %v261, %v260
  %v318 = vpack.c.b16 %v263, %v262
  %v319 = vpack.c.b16 %v265, %v264
  %v320 = vpack.c.b16 %v267, %v266
  %v321 = vpack.c.b16 %v269, %v268
  %v322 = vpack.c.b16 %v271, %v270
  %v323 = vpack.c.b16 %v273, %v272
  %v324 = vpack.c.b16 %v275, %v274
  %v325 = vpack.c.b16 %v277, %v276
  %v326 = vpack.c.b16 %v279, %v278
  %v327 = vpack.c.b16 %v281, %v280
  %v328 = vpack.c.b16 %v283, %v282
  %v329 = vpack.c.b16 %v285, %v284
  %v330 = vpack.c.b16 %v287, %v286
  %v331 = vpack.c.b16 %v289, %v288
  %v332 = vpack.c.b16 %v291, %v290
  %v333 = vpack.c.b16 %v293, %v292
  %374 = vmatprep.subr.bf16.mxu0 0
  %375 = vmatpush1.bf16.msra.mxu0 %v294
  %376 = vmatprep.subr.bf16.mxu0 0
  %377 = vmatpush1.bf16.msra.mxu0 %v295
  %378 = vmatprep.subr.bf16.mxu0 0
  %379 = vmatpush1.bf16.msra.mxu0 %v296
  %380 = vmatprep.subr.bf16.mxu0 0
  %381 = vmatpush1.bf16.msra.mxu0 %v297
  %382 = vmatprep.subr.bf16.mxu0 0
  %383 = vmatpush1.bf16.msra.mxu0 %v298
  %384 = vmatprep.subr.bf16.mxu0 0
  %385 = vmatpush1.bf16.msra.mxu0 %v299
  %386 = vmatprep.subr.bf16.mxu0 0
  %387 = vmatpush1.bf16.msra.mxu0 %v300
  %388 = vmatprep.subr.bf16.mxu0 0
  %389 = vmatpush1.bf16.msra.mxu0 %v301
  %390 = vmatprep.subr.bf16.mxu0 0
  %391 = vmatpush1.bf16.msra.mxu0 %v302
  %392 = vmatprep.subr.bf16.mxu0 0
  %393 = vmatpush1.bf16.msra.mxu0 %v303
  %394 = vmatprep.subr.bf16.mxu0 0
  %395 = vmatpush1.bf16.msra.mxu0 %v304
  %396 = vmatprep.subr.bf16.mxu0 0
  %397 = vmatpush1.bf16.msra.mxu0 %v305
  %398 = vmatprep.subr.bf16.mxu0 0
  %399 = vmatpush1.bf16.msra.mxu0 %v306
  %400 = vmatprep.subr.bf16.mxu0 0
  %401 = vmatpush1.bf16.msra.mxu0 %v307
  %402 = vmatprep.subr.bf16.mxu0 0
  %403 = vmatpush1.bf16.msra.mxu0 %v308
  %404 = vmatprep.subr.bf16.mxu0 0
  %405 = vmatpush1.bf16.msra.mxu0 %v309
  %406 = vmatprep.mubr.bf16.mxu0 %v125
  %407 = vmatmul.mubr.bf16.gmra.mrb[0].mxu0 %v124
  %v408 = vpop.f32.mrb[0].mxu0
  %v409 = vadd.f32 %v106, %v408
  %v410 = vpop.f32.mrb[0].mxu0
  %v411 = vpop.f32.mrb[0].mxu0
  %v412 = vadd.f32 %v106, %v411
  %v413 = vpop.f32.mrb[0].mxu0
  %414 = vdwg.mxu0
  %415 = vmatprep.subr.bf16.mxu0 0
  %416 = vmatpush1.bf16.msra.mxu0 %v310
  %417 = vmatprep.subr.bf16.mxu0 0
  %418 = vmatpush1.bf16.msra.mxu0 %v311
  %419 = vmatprep.subr.bf16.mxu0 0
  %420 = vmatpush1.bf16.msra.mxu0 %v312
  %421 = vmatprep.subr.bf16.mxu0 0
  %422 = vmatpush1.bf16.msra.mxu0 %v313
  %423 = vmatprep.subr.bf16.mxu0 0
  %424 = vmatpush1.bf16.msra.mxu0 %v314
  %425 = vmatprep.subr.bf16.mxu0 0
  %426 = vmatpush1.bf16.msra.mxu0 %v315
  %427 = vmatprep.subr.bf16.mxu0 0
  %428 = vmatpush1.bf16.msra.mxu0 %v316
  %429 = vmatprep.subr.bf16.mxu0 0
  %430 = vmatpush1.bf16.msra.mxu0 %v317
  %431 = vmatprep.subr.bf16.mxu0 0
  %432 = vmatpush1.bf16.msra.mxu0 %v318
  %433 = vmatprep.subr.bf16.mxu0 0
  %434 = vmatpush1.bf16.msra.mxu0 %v319
  %435 = vmatprep.subr.bf16.mxu0 0
  %436 = vmatpush1.bf16.msra.mxu0 %v320
  %437 = vmatprep.subr.bf16.mxu0 0
  %438 = vmatpush1.bf16.msra.mxu0 %v321
  %439 = vmatprep.subr.bf16.mxu0 0
  %440 = vmatpush1.bf16.msra.mxu0 %v322
  %441 = vmatprep.subr.bf16.mxu0 0
  %442 = vmatpush1.bf16.msra.mxu0 %v323
  %443 = vmatprep.subr.bf16.mxu0 0
  %444 = vmatpush1.bf16.msra.mxu0 %v324
  %445 = vmatprep.subr.bf16.mxu0 0
  %446 = vmatpush1.bf16.msra.mxu0 %v325
  %447 = vmatprep.mubr.bf16.mxu0 %v127
  %448 = vmatmul.mubr.bf16.gmra.mrb[0].mxu0 %v126
  %v449 = vpop.f32.mrb[0].mxu0
  %v450 = vadd.f32 %v409, %v449
  %v451 = vpop.f32.mrb[0].mxu0
  %v452 = vpop.f32.mrb[0].mxu0
  %v453 = vadd.f32 %v412, %v452
  %v454 = vpop.f32.mrb[0].mxu0
  %455 = vdwg.mxu0
  %456 = vmatprep.subr.bf16.mxu0 0
  %457 = vmatpush1.bf16.msra.mxu0 %v326
  %458 = vmatprep.subr.bf16.mxu0 0
  %459 = vmatpush1.bf16.msra.mxu0 %v327
  %460 = vmatprep.subr.bf16.mxu0 0
  %461 = vmatpush1.bf16.msra.mxu0 %v328
  %462 = vmatprep.subr.bf16.mxu0 0
  %463 = vmatpush1.bf16.msra.mxu0 %v329
  %464 = vmatprep.subr.bf16.mxu0 0
  %465 = vmatpush1.bf16.msra.mxu0 %v330
  %466 = vmatprep.subr.bf16.mxu0 0
  %467 = vmatpush1.bf16.msra.mxu0 %v331
  %468 = vmatprep.subr.bf16.mxu0 0
  %469 = vmatpush1.bf16.msra.mxu0 %v332
  %470 = vmatprep.subr.bf16.mxu0 0
  %471 = vmatpush1.bf16.msra.mxu0 %v333
  %472 = vmatprep.subr.bf16.mxu0 0
  %473 = vmatpush1.bf16.msra.mxu0 0
  %474 = vmatprep.subr.bf16.mxu0 0
  %475 = vmatpush1.bf16.msra.mxu0 0
  %476 = vmatprep.subr.bf16.mxu0 0
  %477 = vmatpush1.bf16.msra.mxu0 0
  %478 = vmatprep.subr.bf16.mxu0 0
  %479 = vmatpush1.bf16.msra.mxu0 0
  %480 = vmatprep.subr.bf16.mxu0 0
  %481 = vmatpush1.bf16.msra.mxu0 0
  %482 = vmatprep.subr.bf16.mxu0 0
  %483 = vmatpush1.bf16.msra.mxu0 0
  %484 = vmatprep.subr.bf16.mxu0 0
  %485 = vmatpush1.bf16.msra.mxu0 0
  %486 = vmatprep.subr.bf16.mxu0 0
  %487 = vmatpush1.bf16.msra.mxu0 0
  %488 = vmatprep.mubr.bf16.mxu0 0
  %489 = vmatmul.mubr.bf16.gmra.mrb[0].mxu0 %v128
  %v490 = vpop.f32.mrb[0].mxu0
  %v491 = vadd.f32 %v450, %v490
  %v492 = vpop.f32.mrb[0].mxu0
  %v493 = vpop.f32.mrb[0].mxu0
  %v494 = vadd.f32 %v453, %v493
  %v495 = vpop.f32.mrb[0].mxu0
  %496 = vdwg.mxu0
  %v497 = vmax.f32 %v491, 0.0
  %v498 = vmax.f32 %v494, 0.0
  %v499 = vpack.c.bf16 %v498, %v497
  %v501 = vunpack.c.l.b16 %v499
  %v502 = vunpack.c.h.b16 %v499
  %v503 = vpack.c.b16 %v501, %v501
  %v504 = vpack.c.b16 %v502, %v502
  %507 = vst [vmem:[%s3] sm:$0xf] %v503
  %508 = vst [vmem:[%s3 + $0x4] sm:$0xf] %v504
  // Predicated region
  $region14: #{deep_q_forward.6} parent=0 // pred_check
    _
  $region15: #{deep_q_forward.6} parent=0 // pred_check_branch
    %510 = sbr.rel (0) target = $region17
  $region16: #{deep_q_forward.6} parent=0 // pred_region
    _
  $region17: #{deep_q_forward.6} parent=0 // pred_fallthru
    _
  // Predicated region
  $region18: #{deep_q_forward.6} parent=0 // pred_check
    _
  $region19: #{deep_q_forward.6} parent=0 // pred_check_branch
    %512 = sbr.rel (0) target = $region21
  $region20: #{deep_q_forward.6} parent=0 // pred_region
    _
  $region21: #{deep_q_forward.6} parent=0 // pred_fallthru
    _

// kernel: deep_q_forward.7
$region0: #{deep_q_forward.7}
  #allocation0 [shape = 'u32[]', space=smem, size = 0x4, offset = 0x4, fixed_abs, tag = 'smem constant byte address 0x4 - core index']
  #allocation1 [shape = 'u32[144,128]{1,0:T(1,128)}', space=vmem, size = 0x12000, scoped, tag = 'internal scratch']
  %s0 = inlined_call_operand.vmem [shape: bf16[16,256], index: 0, kind: input, shape index: {}]
  %s1 = inlined_call_operand.vmem [shape: bf16[256,1024], index: 1, kind: input, shape index: {}]
  %s2 = inlined_call_operand.vmem [shape: f32[1,1024], index: 2, kind: input, shape index: {}]
  %s3 = inlined_call_operand.vmem [shape: bf16[1024,1024], index: 3, kind: input, shape index: {}]
  %s4 = inlined_call_operand.vmem [shape: f32[1,1024], index: 4, kind: input, shape index: {}]
  %s5 = inlined_call_operand.vmem [shape: bf16[1024,128], index: 5, kind: input, shape index: {}]
  %s6 = inlined_call_operand.vmem [shape: f32[1,128], index: 6, kind: input, shape index: {}]
  %s7 = inlined_call_operand.vmem [shape: f32[16,128], index: 7, kind: output, shape index: {}]
  %s8 = sld [smem:[#allocation0]]
  $region38: #{deep_q_forward.7} parent=0
    _
  %s10 = ssub.s32 1, %s8
  %s11 = scalar_select 0, %s10, %s8
  // Predicated region
  $region2: #{deep_q_forward.7} parent=0 // pred_check
    _
  $region3: #{deep_q_forward.7} parent=0 // pred_check_branch
    %13 = sbr.rel (0) target = $region5
  $region4: #{deep_q_forward.7} parent=0 // pred_region
    _
  $region5: #{deep_q_forward.7} parent=0 // pred_fallthru
    _
  // Predicated region
  $region6: #{deep_q_forward.7} parent=0 // pred_check
    _
  $region7: #{deep_q_forward.7} parent=0 // pred_check_branch
    %15 = sbr.rel (0) target = $region9
  $region8: #{deep_q_forward.7} parent=0 // pred_region
    _
  $region9: #{deep_q_forward.7} parent=0 // pred_fallthru
    _
  // Predicated region
  $region10: #{deep_q_forward.7} parent=0 // pred_check
    _
  $region11: #{deep_q_forward.7} parent=0 // pred_check_branch
    %17 = sbr.rel (0) target = $region13
  $region12: #{deep_q_forward.7} parent=0 // pred_region
    _
  $region13: #{deep_q_forward.7} parent=0 // pred_fallthru
    _
  // Predicated region
  $region14: #{deep_q_forward.7} parent=0 // pred_check
    _
  $region15: #{deep_q_forward.7} parent=0 // pred_check_branch
    %19 = sbr.rel (0) target = $region17
  $region16: #{deep_q_forward.7} parent=0 // pred_region
    _
  $region17: #{deep_q_forward.7} parent=0 // pred_fallthru
    _
  // Predicated region
  $region18: #{deep_q_forward.7} parent=0 // pred_check
    _
  $region19: #{deep_q_forward.7} parent=0 // pred_check_branch
    %21 = sbr.rel (0) target = $region21
  $region20: #{deep_q_forward.7} parent=0 // pred_region
    _
  $region21: #{deep_q_forward.7} parent=0 // pred_fallthru
    _
  // Predicated region
  $region22: #{deep_q_forward.7} parent=0 // pred_check
    _
  $region23: #{deep_q_forward.7} parent=0 // pred_check_branch
    %23 = sbr.rel (0) target = $region25
  $region24: #{deep_q_forward.7} parent=0 // pred_region
    _
  $region25: #{deep_q_forward.7} parent=0 // pred_fallthru
    _
  // Predicated region
  $region26: #{deep_q_forward.7} parent=0 // pred_check
    _
  $region27: #{deep_q_forward.7} parent=0 // pred_check_branch
    %25 = sbr.rel (0) target = $region29
  $region28: #{deep_q_forward.7} parent=0 // pred_region
    _
  $region29: #{deep_q_forward.7} parent=0 // pred_fallthru
    _
  %v27 = vld [vmem:[%s0] sm:$0xff]
  %v28 = vld [vmem:[%s0 + $0x8] sm:$0xff]
  %v29 = vld [vmem:[%s1] sm:$0xff]
  %v30 = vld [vmem:[%s1 + $0x8] sm:$0xff]
  %v31 = vld [vmem:[%s1 + $0x10] sm:$0xff]
  %v32 = vld [vmem:[%s1 + $0x18] sm:$0xff]
  %v33 = vld [vmem:[%s1 + $0x20] sm:$0xff]
  %v34 = vld [vmem:[%s1 + $0x28] sm:$0xff]
  %v35 = vld [vmem:[%s1 + $0x30] sm:$0xff]
  %v36 = vld [vmem:[%s1 + $0x38] sm:$0xff]
  %v37 = vld [vmem:[%s1 + $0x40] sm:$0xff]
  %v38 = vld [vmem:[%s1 + $0x48] sm:$0xff]
  %v39 = vld [vmem:[%s1 + $0x50] sm:$0xff]
  %v40 = vld [vmem:[%s1 + $0x58] sm:$0xff]
  %v41 = vld [vmem:[%s1 + $0x60] sm:$0xff]
  %v42 = vld [vmem:[%s1 + $0x68] sm:$0xff]
  %v43 = vld [vmem:[%s1 + $0x70] sm:$0xff]
  %v44 = vld [vmem:[%s1 + $0x78] sm:$0xff]
  %v45 = vld [vmem:[%s1 + $0x80] sm:$0xff]
  %v46 = vld [vmem:[%s1 + $0x88] sm:$0xff]
  %v47 = vld [vmem:[%s1 + $0x90] sm:$0xff]
  %v48 = vld [vmem:[%s1 + $0x98] sm:$0xff]
  %v49 = vld [vmem:[%s1 + $0xa0] sm:$0xff]
  %v50 = vld [vmem:[%s1 + $0xa8] sm:$0xff]
  %v51 = vld [vmem:[%s1 + $0xb0] sm:$0xff]
  %v52 = vld [vmem:[%s1 + $0xb8] sm:$0xff]
  %v53 = vld [vmem:[%s1 + $0xc0] sm:$0xff]
  %v54 = vld [vmem:[%s1 + $0xc8] sm:$0xff]
  %v55 = vld [vmem:[%s1 + $0xd0] sm:$0xff]
  %v56 = vld [vmem:[%s1 + $0xd8] sm:$0xff]
  %v57 = vld [vmem:[%s1 + $0xe0] sm:$0xff]
  %v58 = vld [vmem:[%s1 + $0xe8] sm:$0xff]
  %v59 = vld [vmem:[%s1 + $0xf0] sm:$0xff]
  %v60 = vld [vmem:[%s1 + $0xf8] sm:$0xff]
  %v61 = vld [vmem:[%s1 + $0x100] sm:$0xff]
  %v62 = vld [vmem:[%s1 + $0x108] sm:$0xff]
  %v63 = vld [vmem:[%s1 + $0x110] sm:$0xff]
  %v64 = vld [vmem:[%s1 + $0x118] sm:$0xff]
  %v65 = vld [vmem:[%s1 + $0x120] sm:$0xff]
  %v66 = vld [vmem:[%s1 + $0x128] sm:$0xff]
  %v67 = vld [vmem:[%s1 + $0x130] sm:$0xff]
  %v68 = vld [vmem:[%s1 + $0x138] sm:$0xff]
  %v69 = vld [vmem:[%s1 + $0x140] sm:$0xff]
  %v70 = vld [vmem:[%s1 + $0x148] sm:$0xff]
  %v71 = vld [vmem:[%s1 + $0x150] sm:$0xff]
  %v72 = vld [vmem:[%s1 + $0x158] sm:$0xff]
  %v73 = vld [vmem:[%s1 + $0x160] sm:$0xff]
  %v74 = vld [vmem:[%s1 + $0x168] sm:$0xff]
  %v75 = vld [vmem:[%s1 + $0x170] sm:$0xff]
  %v76 = vld [vmem:[%s1 + $0x178] sm:$0xff]
  %v77 = vld [vmem:[%s1 + $0x180] sm:$0xff]
  %v78 = vld [vmem:[%s1 + $0x188] sm:$0xff]
  %v79 = vld [vmem:[%s1 + $0x190] sm:$0xff]
  %v80 = vld [vmem:[%s1 + $0x198] sm:$0xff]
  %v81 = vld [vmem:[%s1 + $0x1a0] sm:$0xff]
  %v82 = vld [vmem:[%s1 + $0x1a8] sm:$0xff]
  %v83 = vld [vmem:[%s1 + $0x1b0] sm:$0xff]
  %v84 = vld [vmem:[%s1 + $0x1b8] sm:$0xff]
  %v85 = vld [vmem:[%s1 + $0x1c0] sm:$0xff]
  %v86 = vld [vmem:[%s1 + $0x1c8] sm:$0xff]
  %v87 = vld [vmem:[%s1 + $0x1d0] sm:$0xff]
  %v88 = vld [vmem:[%s1 + $0x1d8] sm:$0xff]
  %v89 = vld [vmem:[%s1 + $0x1e0] sm:$0xff]
  %v90 = vld [vmem:[%s1 + $0x1e8] sm:$0xff]
  %v91 = vld [vmem:[%s1 + $0x1f0] sm:$0xff]
  %v92 = vld [vmem:[%s1 + $0x1f8] sm:$0xff]
  %v93 = vld [vmem:[%s1 + $0x200] sm:$0xff]
  %v94 = vld [vmem:[%s1 + $0x208] sm:$0xff]
  %v95 = vld [vmem:[%s1 + $0x210] sm:$0xff]
  %v96 = vld [vmem:[%s1 + $0x218] sm:$0xff]
  %v97 = vld [vmem:[%s1 + $0x220] sm:$0xff]
  %v98 = vld [vmem:[%s1 + $0x228] sm:$0xff]
  %v99 = vld [vmem:[%s1 + $0x230] sm:$0xff]
  %v100 = vld [vmem:[%s1 + $0x238] sm:$0xff]
  %v101 = vld [vmem:[%s1 + $0x240] sm:$0xff]
  %v102 = vld [vmem:[%s1 + $0x248] sm:$0xff]
  %v103 = vld [vmem:[%s1 + $0x250] sm:$0xff]
  %v104 = vld [vmem:[%s1 + $0x258] sm:$0xff]
  %v105 = vld [vmem:[%s1 + $0x260] sm:$0xff]
  %v106 = vld [vmem:[%s1 + $0x268] sm:$0xff]
  %v107 = vld [vmem:[%s1 + $0x270] sm:$0xff]
  %v108 = vld [vmem:[%s1 + $0x278] sm:$0xff]
  %v109 = vld [vmem:[%s1 + $0x280] sm:$0xff]
  %v110 = vld [vmem:[%s1 + $0x288] sm:$0xff]
  %v111 = vld [vmem:[%s1 + $0x290] sm:$0xff]
  %v112 = vld [vmem:[%s1 + $0x298] sm:$0xff]
  %v113 = vld [vmem:[%s1 + $0x2a0] sm:$0xff]
  %v114 = vld [vmem:[%s1 + $0x2a8] sm:$0xff]
  %v115 = vld [vmem:[%s1 + $0x2b0] sm:$0xff]
  %v116 = vld [vmem:[%s1 + $0x2b8] sm:$0xff]
  %v117 = vld [vmem:[%s1 + $0x2c0] sm:$0xff]
  %v118 = vld [vmem:[%s1 + $0x2c8] sm:$0xff]
  %v119 = vld [vmem:[%s1 + $0x2d0] sm:$0xff]
  %v120 = vld [vmem:[%s1 + $0x2d8] sm:$0xff]
  %v121 = vld [vmem:[%s1 + $0x2e0] sm:$0xff]
  %v122 = vld [vmem:[%s1 + $0x2e8] sm:$0xff]
  %v123 = vld [vmem:[%s1 + $0x2f0] sm:$0xff]
  %v124 = vld [vmem:[%s1 + $0x2f8] sm:$0xff]
  %v125 = vld [vmem:[%s1 + $0x300] sm:$0xff]
  %v126 = vld [vmem:[%s1 + $0x308] sm:$0xff]
  %v127 = vld [vmem:[%s1 + $0x310] sm:$0xff]
  %v128 = vld [vmem:[%s1 + $0x318] sm:$0xff]
  %v129 = vld [vmem:[%s1 + $0x320] sm:$0xff]
  %v130 = vld [vmem:[%s1 + $0x328] sm:$0xff]
  %v131 = vld [vmem:[%s1 + $0x330] sm:$0xff]
  %v132 = vld [vmem:[%s1 + $0x338] sm:$0xff]
  %v133 = vld [vmem:[%s1 + $0x340] sm:$0xff]
  %v134 = vld [vmem:[%s1 + $0x348] sm:$0xff]
  %v135 = vld [vmem:[%s1 + $0x350] sm:$0xff]
  %v136 = vld [vmem:[%s1 + $0x358] sm:$0xff]
  %v137 = vld [vmem:[%s1 + $0x360] sm:$0xff]
  %v138 = vld [vmem:[%s1 + $0x368] sm:$0xff]
  %v139 = vld [vmem:[%s1 + $0x370] sm:$0xff]
  %v140 = vld [vmem:[%s1 + $0x378] sm:$0xff]
  %v141 = vld [vmem:[%s1 + $0x380] sm:$0xff]
  %v142 = vld [vmem:[%s1 + $0x388] sm:$0xff]
  %v143 = vld [vmem:[%s1 + $0x390] sm:$0xff]
  %v144 = vld [vmem:[%s1 + $0x398] sm:$0xff]
  %v145 = vld [vmem:[%s1 + $0x3a0] sm:$0xff]
  %v146 = vld [vmem:[%s1 + $0x3a8] sm:$0xff]
  %v147 = vld [vmem:[%s1 + $0x3b0] sm:$0xff]
  %v148 = vld [vmem:[%s1 + $0x3b8] sm:$0xff]
  %v149 = vld [vmem:[%s1 + $0x3c0] sm:$0xff]
  %v150 = vld [vmem:[%s1 + $0x3c8] sm:$0xff]
  %v151 = vld [vmem:[%s1 + $0x3d0] sm:$0xff]
  %v152 = vld [vmem:[%s1 + $0x3d8] sm:$0xff]
  %v153 = vld [vmem:[%s1 + $0x3e0] sm:$0xff]
  %v154 = vld [vmem:[%s1 + $0x3e8] sm:$0xff]
  %v155 = vld [vmem:[%s1 + $0x3f0] sm:$0xff]
  %v156 = vld [vmem:[%s1 + $0x3f8] sm:$0xff]
  %v157 = vld [vmem:[%s2] sm:$0xff]
  %v159 = vlaneseq
  %v160 = vshrl.u32 %v159, 7
  %v161 = vsub.s32 0, %v160
  %v162 = vrot.slane %v157, %v161
  %v163 = vlaneseq
  %v164 = vshrl.u32 %v163, 7
  %v165 = vsub.s32 1, %v164
  %v166 = vrot.slane %v157, %v165
  %v167 = vlaneseq
  %v168 = vshrl.u32 %v167, 7
  %v169 = vsub.s32 2, %v168
  %v170 = vrot.slane %v157, %v169
  %v171 = vlaneseq
  %v172 = vshrl.u32 %v171, 7
  %v173 = vsub.s32 3, %v172
  %v174 = vrot.slane %v157, %v173
  %v175 = vlaneseq
  %v176 = vshrl.u32 %v175, 7
  %v177 = vsub.s32 4, %v176
  %v178 = vrot.slane %v157, %v177
  %v179 = vlaneseq
  %v180 = vshrl.u32 %v179, 7
  %v181 = vsub.s32 5, %v180
  %v182 = vrot.slane %v157, %v181
  %v183 = vlaneseq
  %v184 = vshrl.u32 %v183, 7
  %v185 = vsub.s32 6, %v184
  %v186 = vrot.slane %v157, %v185
  %v187 = vlaneseq
  %v188 = vshrl.u32 %v187, 7
  %v189 = vsub.s32 7, %v188
  %v190 = vrot.slane %v157, %v189
  %v201 = vunpack.c.l.b16 %v27
  %v202 = vunpack.c.h.b16 %v27
  %v203 = vunpack.c.l.b16 %v28
  %v204 = vunpack.c.h.b16 %v28
  %v205 = vpack.c.b16 %v203, %v201
  %v206 = vpack.c.b16 %v204, %v202
  %v337 = vunpack.c.l.b16 %v29
  %v338 = vunpack.c.h.b16 %v29
  %v339 = vunpack.c.l.b16 %v30
  %v340 = vunpack.c.h.b16 %v30
  %v341 = vunpack.c.l.b16 %v31
  %v342 = vunpack.c.h.b16 %v31
  %v343 = vunpack.c.l.b16 %v32
  %v344 = vunpack.c.h.b16 %v32
  %v345 = vunpack.c.l.b16 %v33
  %v346 = vunpack.c.h.b16 %v33
  %v347 = vunpack.c.l.b16 %v34
  %v348 = vunpack.c.h.b16 %v34
  %v349 = vunpack.c.l.b16 %v35
  %v350 = vunpack.c.h.b16 %v35
  %v351 = vunpack.c.l.b16 %v36
  %v352 = vunpack.c.h.b16 %v36
  %v353 = vunpack.c.l.b16 %v37
  %v354 = vunpack.c.h.b16 %v37
  %v355 = vunpack.c.l.b16 %v38
  %v356 = vunpack.c.h.b16 %v38
  %v357 = vunpack.c.l.b16 %v39
  %v358 = vunpack.c.h.b16 %v39
  %v359 = vunpack.c.l.b16 %v40
  %v360 = vunpack.c.h.b16 %v40
  %v361 = vunpack.c.l.b16 %v41
  %v362 = vunpack.c.h.b16 %v41
  %v363 = vunpack.c.l.b16 %v42
  %v364 = vunpack.c.h.b16 %v42
  %v365 = vunpack.c.l.b16 %v43
  %v366 = vunpack.c.h.b16 %v43
  %v367 = vunpack.c.l.b16 %v44
  %v368 = vunpack.c.h.b16 %v44
  %v369 = vunpack.c.l.b16 %v45
  %v370 = vunpack.c.h.b16 %v45
  %v371 = vunpack.c.l.b16 %v46
  %v372 = vunpack.c.h.b16 %v46
  %v373 = vunpack.c.l.b16 %v47
  %v374 = vunpack.c.h.b16 %v47
  %v375 = vunpack.c.l.b16 %v48
  %v376 = vunpack.c.h.b16 %v48
  %v377 = vunpack.c.l.b16 %v49
  %v378 = vunpack.c.h.b16 %v49
  %v379 = vunpack.c.l.b16 %v50
  %v380 = vunpack.c.h.b16 %v50
  %v381 = vunpack.c.l.b16 %v51
  %v382 = vunpack.c.h.b16 %v51
  %v383 = vunpack.c.l.b16 %v52
  %v384 = vunpack.c.h.b16 %v52
  %v385 = vunpack.c.l.b16 %v53
  %v386 = vunpack.c.h.b16 %v53
  %v387 = vunpack.c.l.b16 %v54
  %v388 = vunpack.c.h.b16 %v54
  %v389 = vunpack.c.l.b16 %v55
  %v390 = vunpack.c.h.b16 %v55
  %v391 = vunpack.c.l.b16 %v56
  %v392 = vunpack.c.h.b16 %v56
  %v393 = vunpack.c.l.b16 %v57
  %v394 = vunpack.c.h.b16 %v57
  %v395 = vunpack.c.l.b16 %v58
  %v396 = vunpack.c.h.b16 %v58
  %v397 = vunpack.c.l.b16 %v59
  %v398 = vunpack.c.h.b16 %v59
  %v399 = vunpack.c.l.b16 %v60
  %v400 = vunpack.c.h.b16 %v60
  %v401 = vunpack.c.l.b16 %v61
  %v402 = vunpack.c.h.b16 %v61
  %v403 = vunpack.c.l.b16 %v62
  %v404 = vunpack.c.h.b16 %v62
  %v405 = vunpack.c.l.b16 %v63
  %v406 = vunpack.c.h.b16 %v63
  %v407 = vunpack.c.l.b16 %v64
  %v408 = vunpack.c.h.b16 %v64
  %v409 = vunpack.c.l.b16 %v65
  %v410 = vunpack.c.h.b16 %v65
  %v411 = vunpack.c.l.b16 %v66
  %v412 = vunpack.c.h.b16 %v66
  %v413 = vunpack.c.l.b16 %v67
  %v414 = vunpack.c.h.b16 %v67
  %v415 = vunpack.c.l.b16 %v68
  %v416 = vunpack.c.h.b16 %v68
  %v417 = vunpack.c.l.b16 %v69
  %v418 = vunpack.c.h.b16 %v69
  %v419 = vunpack.c.l.b16 %v70
  %v420 = vunpack.c.h.b16 %v70
  %v421 = vunpack.c.l.b16 %v71
  %v422 = vunpack.c.h.b16 %v71
  %v423 = vunpack.c.l.b16 %v72
  %v424 = vunpack.c.h.b16 %v72
  %v425 = vunpack.c.l.b16 %v73
  %v426 = vunpack.c.h.b16 %v73
  %v427 = vunpack.c.l.b16 %v74
  %v428 = vunpack.c.h.b16 %v74
  %v429 = vunpack.c.l.b16 %v75
  %v430 = vunpack.c.h.b16 %v75
  %v431 = vunpack.c.l.b16 %v76
  %v432 = vunpack.c.h.b16 %v76
  %v433 = vunpack.c.l.b16 %v77
  %v434 = vunpack.c.h.b16 %v77
  %v435 = vunpack.c.l.b16 %v78
  %v436 = vunpack.c.h.b16 %v78
  %v437 = vunpack.c.l.b16 %v79
  %v438 = vunpack.c.h.b16 %v79
  %v439 = vunpack.c.l.b16 %v80
  %v440 = vunpack.c.h.b16 %v80
  %v441 = vunpack.c.l.b16 %v81
  %v442 = vunpack.c.h.b16 %v81
  %v443 = vunpack.c.l.b16 %v82
  %v444 = vunpack.c.h.b16 %v82
  %v445 = vunpack.c.l.b16 %v83
  %v446 = vunpack.c.h.b16 %v83
  %v447 = vunpack.c.l.b16 %v84
  %v448 = vunpack.c.h.b16 %v84
  %v449 = vunpack.c.l.b16 %v85
  %v450 = vunpack.c.h.b16 %v85
  %v451 = vunpack.c.l.b16 %v86
  %v452 = vunpack.c.h.b16 %v86
  %v453 = vunpack.c.l.b16 %v87
  %v454 = vunpack.c.h.b16 %v87
  %v455 = vunpack.c.l.b16 %v88
  %v456 = vunpack.c.h.b16 %v88
  %v457 = vunpack.c.l.b16 %v89
  %v458 = vunpack.c.h.b16 %v89
  %v459 = vunpack.c.l.b16 %v90
  %v460 = vunpack.c.h.b16 %v90
  %v461 = vunpack.c.l.b16 %v91
  %v462 = vunpack.c.h.b16 %v91
  %v463 = vunpack.c.l.b16 %v92
  %v464 = vunpack.c.h.b16 %v92
  %v465 = vunpack.c.l.b16 %v93
  %v466 = vunpack.c.h.b16 %v93
  %v467 = vunpack.c.l.b16 %v94
  %v468 = vunpack.c.h.b16 %v94
  %v469 = vunpack.c.l.b16 %v95
  %v470 = vunpack.c.h.b16 %v95
  %v471 = vunpack.c.l.b16 %v96
  %v472 = vunpack.c.h.b16 %v96
  %v473 = vunpack.c.l.b16 %v97
  %v474 = vunpack.c.h.b16 %v97
  %v475 = vunpack.c.l.b16 %v98
  %v476 = vunpack.c.h.b16 %v98
  %v477 = vunpack.c.l.b16 %v99
  %v478 = vunpack.c.h.b16 %v99
  %v479 = vunpack.c.l.b16 %v100
  %v480 = vunpack.c.h.b16 %v100
  %v481 = vunpack.c.l.b16 %v101
  %v482 = vunpack.c.h.b16 %v101
  %v483 = vunpack.c.l.b16 %v102
  %v484 = vunpack.c.h.b16 %v102
  %v485 = vunpack.c.l.b16 %v103
  %v486 = vunpack.c.h.b16 %v103
  %v487 = vunpack.c.l.b16 %v104
  %v488 = vunpack.c.h.b16 %v104
  %v489 = vunpack.c.l.b16 %v105
  %v490 = vunpack.c.h.b16 %v105
  %v491 = vunpack.c.l.b16 %v106
  %v492 = vunpack.c.h.b16 %v106
  %v493 = vunpack.c.l.b16 %v107
  %v494 = vunpack.c.h.b16 %v107
  %v495 = vunpack.c.l.b16 %v108
  %v496 = vunpack.c.h.b16 %v108
  %v497 = vunpack.c.l.b16 %v109
  %v498 = vunpack.c.h.b16 %v109
  %v499 = vunpack.c.l.b16 %v110
  %v500 = vunpack.c.h.b16 %v110
  %v501 = vunpack.c.l.b16 %v111
  %v502 = vunpack.c.h.b16 %v111
  %v503 = vunpack.c.l.b16 %v112
  %v504 = vunpack.c.h.b16 %v112
  %v505 = vunpack.c.l.b16 %v113
  %v506 = vunpack.c.h.b16 %v113
  %v507 = vunpack.c.l.b16 %v114
  %v508 = vunpack.c.h.b16 %v114
  %v509 = vunpack.c.l.b16 %v115
  %v510 = vunpack.c.h.b16 %v115
  %v511 = vunpack.c.l.b16 %v116
  %v512 = vunpack.c.h.b16 %v116
  %v513 = vunpack.c.l.b16 %v117
  %v514 = vunpack.c.h.b16 %v117
  %v515 = vunpack.c.l.b16 %v118
  %v516 = vunpack.c.h.b16 %v118
  %v517 = vunpack.c.l.b16 %v119
  %v518 = vunpack.c.h.b16 %v119
  %v519 = vunpack.c.l.b16 %v120
  %v520 = vunpack.c.h.b16 %v120
  %v521 = vunpack.c.l.b16 %v121
  %v522 = vunpack.c.h.b16 %v121
  %v523 = vunpack.c.l.b16 %v122
  %v524 = vunpack.c.h.b16 %v122
  %v525 = vunpack.c.l.b16 %v123
  %v526 = vunpack.c.h.b16 %v123
  %v527 = vunpack.c.l.b16 %v124
  %v528 = vunpack.c.h.b16 %v124
  %v529 = vunpack.c.l.b16 %v125
  %v530 = vunpack.c.h.b16 %v125
  %v531 = vunpack.c.l.b16 %v126
  %v532 = vunpack.c.h.b16 %v126
  %v533 = vunpack.c.l.b16 %v127
  %v534 = vunpack.c.h.b16 %v127
  %v535 = vunpack.c.l.b16 %v128
  %v536 = vunpack.c.h.b16 %v128
  %v537 = vunpack.c.l.b16 %v129
  %v538 = vunpack.c.h.b16 %v129
  %v539 = vunpack.c.l.b16 %v130
  %v540 = vunpack.c.h.b16 %v130
  %v541 = vunpack.c.l.b16 %v131
  %v542 = vunpack.c.h.b16 %v131
  %v543 = vunpack.c.l.b16 %v132
  %v544 = vunpack.c.h.b16 %v132
  %v545 = vunpack.c.l.b16 %v133
  %v546 = vunpack.c.h.b16 %v133
  %v547 = vunpack.c.l.b16 %v134
  %v548 = vunpack.c.h.b16 %v134
  %v549 = vunpack.c.l.b16 %v135
  %v550 = vunpack.c.h.b16 %v135
  %v551 = vunpack.c.l.b16 %v136
  %v552 = vunpack.c.h.b16 %v136
  %v553 = vunpack.c.l.b16 %v137
  %v554 = vunpack.c.h.b16 %v137
  %v555 = vunpack.c.l.b16 %v138
  %v556 = vunpack.c.h.b16 %v138
  %v557 = vunpack.c.l.b16 %v139
  %v558 = vunpack.c.h.b16 %v139
  %v559 = vunpack.c.l.b16 %v140
  %v560 = vunpack.c.h.b16 %v140
  %v561 = vunpack.c.l.b16 %v141
  %v562 = vunpack.c.h.b16 %v141
  %v563 = vunpack.c.l.b16 %v142
  %v564 = vunpack.c.h.b16 %v142
  %v565 = vunpack.c.l.b16 %v143
  %v566 = vunpack.c.h.b16 %v143
  %v567 = vunpack.c.l.b16 %v144
  %v568 = vunpack.c.h.b16 %v144
  %v569 = vunpack.c.l.b16 %v145
  %v570 = vunpack.c.h.b16 %v145
  %v571 = vunpack.c.l.b16 %v146
  %v572 = vunpack.c.h.b16 %v146
  %v573 = vunpack.c.l.b16 %v147
  %v574 = vunpack.c.h.b16 %v147
  %v575 = vunpack.c.l.b16 %v148
  %v576 = vunpack.c.h.b16 %v148
  %v577 = vunpack.c.l.b16 %v149
  %v578 = vunpack.c.h.b16 %v149
  %v579 = vunpack.c.l.b16 %v150
  %v580 = vunpack.c.h.b16 %v150
  %v581 = vunpack.c.l.b16 %v151
  %v582 = vunpack.c.h.b16 %v151
  %v583 = vunpack.c.l.b16 %v152
  %v584 = vunpack.c.h.b16 %v152
  %v585 = vunpack.c.l.b16 %v153
  %v586 = vunpack.c.h.b16 %v153
  %v587 = vunpack.c.l.b16 %v154
  %v588 = vunpack.c.h.b16 %v154
  %v589 = vunpack.c.l.b16 %v155
  %v590 = vunpack.c.h.b16 %v155
  %v591 = vunpack.c.l.b16 %v156
  %v592 = vunpack.c.h.b16 %v156
  %v593 = vpack.c.b16 %v345, %v337
  %v594 = vpack.c.b16 %v346, %v338
  %v595 = vpack.c.b16 %v347, %v339
  %v596 = vpack.c.b16 %v348, %v340
  %v597 = vpack.c.b16 %v349, %v341
  %v598 = vpack.c.b16 %v350, %v342
  %v599 = vpack.c.b16 %v351, %v343
  %v600 = vpack.c.b16 %v352, %v344
  %v601 = vpack.c.b16 %v361, %v353
  %v602 = vpack.c.b16 %v362, %v354
  %v603 = vpack.c.b16 %v363, %v355
  %v604 = vpack.c.b16 %v364, %v356
  %v605 = vpack.c.b16 %v365, %v357
  %v606 = vpack.c.b16 %v366, %v358
  %v607 = vpack.c.b16 %v367, %v359
  %v608 = vpack.c.b16 %v368, %v360
  %v609 = vpack.c.b16 %v377, %v369
  %v610 = vpack.c.b16 %v378, %v370
  %v611 = vpack.c.b16 %v379, %v371
  %v612 = vpack.c.b16 %v380, %v372
  %v613 = vpack.c.b16 %v381, %v373
  %v614 = vpack.c.b16 %v382, %v374
  %v615 = vpack.c.b16 %v383, %v375
  %v616 = vpack.c.b16 %v384, %v376
  %v617 = vpack.c.b16 %v393, %v385
  %v618 = vpack.c.b16 %v394, %v386
  %v619 = vpack.c.b16 %v395, %v387
  %v620 = vpack.c.b16 %v396, %v388
  %v621 = vpack.c.b16 %v397, %v389
  %v622 = vpack.c.b16 %v398, %v390
  %v623 = vpack.c.b16 %v399, %v391
  %v624 = vpack.c.b16 %v400, %v392
  %v625 = vpack.c.b16 %v409, %v401
  %v626 = vpack.c.b16 %v410, %v402
  %v627 = vpack.c.b16 %v411, %v403
  %v628 = vpack.c.b16 %v412, %v404
  %v629 = vpack.c.b16 %v413, %v405
  %v630 = vpack.c.b16 %v414, %v406
  %v631 = vpack.c.b16 %v415, %v407
  %v632 = vpack.c.b16 %v416, %v408
  %v633 = vpack.c.b16 %v425, %v417
  %v634 = vpack.c.b16 %v426, %v418
  %v635 = vpack.c.b16 %v427, %v419
  %v636 = vpack.c.b16 %v428, %v420
  %v637 = vpack.c.b16 %v429, %v421
  %v638 = vpack.c.b16 %v430, %v422
  %v639 = vpack.c.b16 %v431, %v423
  %v640 = vpack.c.b16 %v432, %v424
  %v641 = vpack.c.b16 %v441, %v433
  %v642 = vpack.c.b16 %v442, %v434
  %v643 = vpack.c.b16 %v443, %v435
  %v644 = vpack.c.b16 %v444, %v436
  %v645 = vpack.c.b16 %v445, %v437
  %v646 = vpack.c.b16 %v446, %v438
  %v647 = vpack.c.b16 %v447, %v439
  %v648 = vpack.c.b16 %v448, %v440
  %v649 = vpack.c.b16 %v457, %v449
  %v650 = vpack.c.b16 %v458, %v450
  %v651 = vpack.c.b16 %v459, %v451
  %v652 = vpack.c.b16 %v460, %v452
  %v653 = vpack.c.b16 %v461, %v453
  %v654 = vpack.c.b16 %v462, %v454
  %v655 = vpack.c.b16 %v463, %v455
  %v656 = vpack.c.b16 %v464, %v456
  %v657 = vpack.c.b16 %v473, %v465
  %v658 = vpack.c.b16 %v474, %v466
  %v659 = vpack.c.b16 %v475, %v467
  %v660 = vpack.c.b16 %v476, %v468
  %v661 = vpack.c.b16 %v477, %v469
  %v662 = vpack.c.b16 %v478, %v470
  %v663 = vpack.c.b16 %v479, %v471
  %v664 = vpack.c.b16 %v480, %v472
  %v665 = vpack.c.b16 %v489, %v481
  %v666 = vpack.c.b16 %v490, %v482
  %v667 = vpack.c.b16 %v491, %v483
  %v668 = vpack.c.b16 %v492, %v484
  %v669 = vpack.c.b16 %v493, %v485
  %v670 = vpack.c.b16 %v494, %v486
  %v671 = vpack.c.b16 %v495, %v487
  %v672 = vpack.c.b16 %v496, %v488
  %v673 = vpack.c.b16 %v505, %v497
  %v674 = vpack.c.b16 %v506, %v498
  %v675 = vpack.c.b16 %v507, %v499
  %v676 = vpack.c.b16 %v508, %v500
  %v677 = vpack.c.b16 %v509, %v501
  %v678 = vpack.c.b16 %v510, %v502
  %v679 = vpack.c.b16 %v511, %v503
  %v680 = vpack.c.b16 %v512, %v504
  %v681 = vpack.c.b16 %v521, %v513
  %v682 = vpack.c.b16 %v522, %v514
  %v683 = vpack.c.b16 %v523, %v515
  %v684 = vpack.c.b16 %v524, %v516
  %v685 = vpack.c.b16 %v525, %v517
  %v686 = vpack.c.b16 %v526, %v518
  %v687 = vpack.c.b16 %v527, %v519
  %v688 = vpack.c.b16 %v528, %v520
  %v689 = vpack.c.b16 %v537, %v529
  %v690 = vpack.c.b16 %v538, %v530
  %v691 = vpack.c.b16 %v539, %v531
  %v692 = vpack.c.b16 %v540, %v532
  %v693 = vpack.c.b16 %v541, %v533
  %v694 = vpack.c.b16 %v542, %v534
  %v695 = vpack.c.b16 %v543, %v535
  %v696 = vpack.c.b16 %v544, %v536
  %v697 = vpack.c.b16 %v553, %v545
  %v698 = vpack.c.b16 %v554, %v546
  %v699 = vpack.c.b16 %v555, %v547
  %v700 = vpack.c.b16 %v556, %v548
  %v701 = vpack.c.b16 %v557, %v549
  %v702 = vpack.c.b16 %v558, %v550
  %v703 = vpack.c.b16 %v559, %v551
  %v704 = vpack.c.b16 %v560, %v552
  %v705 = vpack.c.b16 %v569, %v561
  %v706 = vpack.c.b16 %v570, %v562
  %v707 = vpack.c.b16 %v571, %v563
  %v708 = vpack.c.b16 %v572, %v564
  %v709 = vpack.c.b16 %v573, %v565
  %v710 = vpack.c.b16 %v574, %v566
  %v711 = vpack.c.b16 %v575, %v567
  %v712 = vpack.c.b16 %v576, %v568
  %v713 = vpack.c.b16 %v585, %v577
  %v714 = vpack.c.b16 %v586, %v578
  %v715 = vpack.c.b16 %v587, %v579
  %v716 = vpack.c.b16 %v588, %v580
  %v717 = vpack.c.b16 %v589, %v581
  %v718 = vpack.c.b16 %v590, %v582
  %v719 = vpack.c.b16 %v591, %v583
  %v720 = vpack.c.b16 %v592, %v584
  %849 = vmatprep.subr.bf16.mxu0 %v594
  %850 = vmatpush1.bf16.msra.mxu0 %v593
  %851 = vmatprep.subr.bf16.mxu0 %v602
  %852 = vmatpush1.bf16.msra.mxu0 %v601
  %853 = vmatprep.subr.bf16.mxu0 %v610
  %854 = vmatpush1.bf16.msra.mxu0 %v609
  %855 = vmatprep.subr.bf16.mxu0 %v618
  %856 = vmatpush1.bf16.msra.mxu0 %v617
  %857 = vmatprep.subr.bf16.mxu0 %v626
  %858 = vmatpush1.bf16.msra.mxu0 %v625
  %859 = vmatprep.subr.bf16.mxu0 %v634
  %860 = vmatpush1.bf16.msra.mxu0 %v633
  %861 = vmatprep.subr.bf16.mxu0 %v642
  %862 = vmatpush1.bf16.msra.mxu0 %v641
  %863 = vmatprep.subr.bf16.mxu0 %v650
  %864 = vmatpush1.bf16.msra.mxu0 %v649
  %865 = vmatprep.subr.bf16.mxu0 %v658
  %866 = vmatpush1.bf16.msra.mxu0 %v657
  %867 = vmatprep.subr.bf16.mxu0 %v666
  %868 = vmatpush1.bf16.msra.mxu0 %v665
  %869 = vmatprep.subr.bf16.mxu0 %v674
  %870 = vmatpush1.bf16.msra.mxu0 %v673
  %871 = vmatprep.subr.bf16.mxu0 %v682
  %872 = vmatpush1.bf16.msra.mxu0 %v681
  %873 = vmatprep.subr.bf16.mxu0 %v690
  %874 = vmatpush1.bf16.msra.mxu0 %v689
  %875 = vmatprep.subr.bf16.mxu0 %v698
  %876 = vmatpush1.bf16.msra.mxu0 %v697
  %877 = vmatprep.subr.bf16.mxu0 %v706
  %878 = vmatpush1.bf16.msra.mxu0 %v705
  %879 = vmatprep.subr.bf16.mxu0 %v714
  %880 = vmatpush1.bf16.msra.mxu0 %v713
  %881 = vmatprep.mubr.bf16.mxu0 %v206
  %882 = vmatmul.mubr.bf16.gmra.mrb[0].mxu0 %v205
  %v883 = vpop.f32.mrb[0].mxu0
  %v884 = vadd.f32 %v162, %v883
  %v885 = vpop.f32.mrb[0].mxu0
  %v886 = vadd.f32 %v166, %v885
  %v887 = vpop.f32.mrb[0].mxu0
  %v888 = vadd.f32 %v162, %v887
  %v889 = vpop.f32.mrb[0].mxu0
  %v890 = vadd.f32 %v166, %v889
  %891 = vdwg.mxu0
  %892 = vmatprep.subr.bf16.mxu0 %v596
  %893 = vmatpush1.bf16.msra.mxu0 %v595
  %894 = vmatprep.subr.bf16.mxu0 %v604
  %895 = vmatpush1.bf16.msra.mxu0 %v603
  %896 = vmatprep.subr.bf16.mxu0 %v612
  %897 = vmatpush1.bf16.msra.mxu0 %v611
  %898 = vmatprep.subr.bf16.mxu0 %v620
  %899 = vmatpush1.bf16.msra.mxu0 %v619
  %900 = vmatprep.subr.bf16.mxu0 %v628
  %901 = vmatpush1.bf16.msra.mxu0 %v627
  %902 = vmatprep.subr.bf16.mxu0 %v636
  %903 = vmatpush1.bf16.msra.mxu0 %v635
  %904 = vmatprep.subr.bf16.mxu0 %v644
  %905 = vmatpush1.bf16.msra.mxu0 %v643
  %906 = vmatprep.subr.bf16.mxu0 %v652
  %907 = vmatpush1.bf16.msra.mxu0 %v651
  %908 = vmatprep.subr.bf16.mxu0 %v660
  %909 = vmatpush1.bf16.msra.mxu0 %v659
  %910 = vmatprep.subr.bf16.mxu0 %v668
  %911 = vmatpush1.bf16.msra.mxu0 %v667
  %912 = vmatprep.subr.bf16.mxu0 %v676
  %913 = vmatpush1.bf16.msra.mxu0 %v675
  %914 = vmatprep.subr.bf16.mxu0 %v684
  %915 = vmatpush1.bf16.msra.mxu0 %v683
  %916 = vmatprep.subr.bf16.mxu0 %v692
  %917 = vmatpush1.bf16.msra.mxu0 %v691
  %918 = vmatprep.subr.bf16.mxu0 %v700
  %919 = vmatpush1.bf16.msra.mxu0 %v699
  %920 = vmatprep.subr.bf16.mxu0 %v708
  %921 = vmatpush1.bf16.msra.mxu0 %v707
  %922 = vmatprep.subr.bf16.mxu0 %v716
  %923 = vmatpush1.bf16.msra.mxu0 %v715
  %924 = vmatprep.mubr.bf16.mxu0 %v206
  %925 = vmatmul.mubr.bf16.gmra.mrb[0].mxu0 %v205
  %v926 = vpop.f32.mrb[0].mxu0
  %v927 = vadd.f32 %v170, %v926
  %v928 = vpop.f32.mrb[0].mxu0
  %v929 = vadd.f32 %v174, %v928
  %v930 = vpop.f32.mrb[0].mxu0
  %v931 = vadd.f32 %v170, %v930
  %v932 = vpop.f32.mrb[0].mxu0
  %v933 = vadd.f32 %v174, %v932
  %934 = vdwg.mxu0
  %935 = vmatprep.subr.bf16.mxu0 %v598
  %936 = vmatpush1.bf16.msra.mxu0 %v597
  %937 = vmatprep.subr.bf16.mxu0 %v606
  %938 = vmatpush1.bf16.msra.mxu0 %v605
  %939 = vmatprep.subr.bf16.mxu0 %v614
  %940 = vmatpush1.bf16.msra.mxu0 %v613
  %941 = vmatprep.subr.bf16.mxu0 %v622
  %942 = vmatpush1.bf16.msra.mxu0 %v621
  %943 = vmatprep.subr.bf16.mxu0 %v630
  %944 = vmatpush1.bf16.msra.mxu0 %v629
  %945 = vmatprep.subr.bf16.mxu0 %v638
  %946 = vmatpush1.bf16.msra.mxu0 %v637
  %947 = vmatprep.subr.bf16.mxu0 %v646
  %948 = vmatpush1.bf16.msra.mxu0 %v645
  %949 = vmatprep.subr.bf16.mxu0 %v654
  %950 = vmatpush1.bf16.msra.mxu0 %v653
  %951 = vmatprep.subr.bf16.mxu0 %v662
  %952 = vmatpush1.bf16.msra.mxu0 %v661
  %953 = vmatprep.subr.bf16.mxu0 %v670
  %954 = vmatpush1.bf16.msra.mxu0 %v669
  %955 = vmatprep.subr.bf16.mxu0 %v678
  %956 = vmatpush1.bf16.msra.mxu0 %v677
  %957 = vmatprep.subr.bf16.mxu0 %v686
  %958 = vmatpush1.bf16.msra.mxu0 %v685
  %959 = vmatprep.subr.bf16.mxu0 %v694
  %960 = vmatpush1.bf16.msra.mxu0 %v693
  %961 = vmatprep.subr.bf16.mxu0 %v702
  %962 = vmatpush1.bf16.msra.mxu0 %v701
  %963 = vmatprep.subr.bf16.mxu0 %v710
  %964 = vmatpush1.bf16.msra.mxu0 %v709
  %965 = vmatprep.subr.bf16.mxu0 %v718
  %966 = vmatpush1.bf16.msra.mxu0 %v717
  %967 = vmatprep.mubr.bf16.mxu0 %v206
  %968 = vmatmul.mubr.bf16.gmra.mrb[0].mxu0 %v205
  %v969 = vpop.f32.mrb[0].mxu0
  %v970 = vadd.f32 %v178, %v969
  %v971 = vpop.f32.mrb[0].mxu0
  %v972 = vadd.f32 %v182, %v971
  %v973 = vpop.f32.mrb[0].mxu0
  %v974 = vadd.f32 %v178, %v973
  %v975 = vpop.f32.mrb[0].mxu0
  %v976 = vadd.f32 %v182, %v975
  %977 = vdwg.mxu0
  %978 = vmatprep.subr.bf16.mxu0 %v600
  %979 = vmatpush1.bf16.msra.mxu0 %v599
  %980 = vmatprep.subr.bf16.mxu0 %v608
  %981 = vmatpush1.bf16.msra.mxu0 %v607
  %982 = vmatprep.subr.bf16.mxu0 %v616
  %983 = vmatpush1.bf16.msra.mxu0 %v615
  %984 = vmatprep.subr.bf16.mxu0 %v624
  %985 = vmatpush1.bf16.msra.mxu0 %v623
  %986 = vmatprep.subr.bf16.mxu0 %v632
  %987 = vmatpush1.bf16.msra.mxu0 %v631
  %988 = vmatprep.subr.bf16.mxu0 %v640
  %989 = vmatpush1.bf16.msra.mxu0 %v639
  %990 = vmatprep.subr.bf16.mxu0 %v648
  %991 = vmatpush1.bf16.msra.mxu0 %v647
  %992 = vmatprep.subr.bf16.mxu0 %v656
  %993 = vmatpush1.bf16.msra.mxu0 %v655
  %994 = vmatprep.subr.bf16.mxu0 %v664
  %995 = vmatpush1.bf16.msra.mxu0 %v663
  %996 = vmatprep.subr.bf16.mxu0 %v672
  %997 = vmatpush1.bf16.msra.mxu0 %v671
  %998 = vmatprep.subr.bf16.mxu0 %v680
  %999 = vmatpush1.bf16.msra.mxu0 %v679
  %1000 = vmatprep.subr.bf16.mxu0 %v688
  %1001 = vmatpush1.bf16.msra.mxu0 %v687
  %1002 = vmatprep.subr.bf16.mxu0 %v696
  %1003 = vmatpush1.bf16.msra.mxu0 %v695
  %1004 = vmatprep.subr.bf16.mxu0 %v704
  %1005 = vmatpush1.bf16.msra.mxu0 %v703
  %1006 = vmatprep.subr.bf16.mxu0 %v712
  %1007 = vmatpush1.bf16.msra.mxu0 %v711
  %1008 = vmatprep.subr.bf16.mxu0 %v720
  %1009 = vmatpush1.bf16.msra.mxu0 %v719
  %1010 = vmatprep.mubr.bf16.mxu0 %v206
  %1011 = vmatmul.mubr.bf16.gmra.mrb[0].mxu0 %v205
  %v1012 = vpop.f32.mrb[0].mxu0
  %v1013 = vadd.f32 %v186, %v1012
  %v1014 = vpop.f32.mrb[0].mxu0
  %v1015 = vadd.f32 %v190, %v1014
  %v1016 = vpop.f32.mrb[0].mxu0
  %v1017 = vadd.f32 %v186, %v1016
  %v1018 = vpop.f32.mrb[0].mxu0
  %v1019 = vadd.f32 %v190, %v1018
  %1020 = vdwg.mxu0
  %v1021 = vmax.f32 %v884, 0.0
  %v1022 = vmax.f32 %v886, 0.0
  %v1023 = vmax.f32 %v927, 0.0
  %v1024 = vmax.f32 %v929, 0.0
  %v1025 = vmax.f32 %v970, 0.0
  %v1026 = vmax.f32 %v972, 0.0
  %v1027 = vmax.f32 %v1013, 0.0
  %v1028 = vmax.f32 %v1015, 0.0
  %v1029 = vmax.f32 %v888, 0.0
  %v1030 = vmax.f32 %v890, 0.0
  %v1031 = vmax.f32 %v931, 0.0
  %v1032 = vmax.f32 %v933, 0.0
  %v1033 = vmax.f32 %v974, 0.0
  %v1034 = vmax.f32 %v976, 0.0
  %v1035 = vmax.f32 %v1017, 0.0
  %v1036 = vmax.f32 %v1019, 0.0
  %v1037 = vpack.c.bf16 %v1029, %v1021
  %v1038 = vpack.c.bf16 %v1030, %v1022
  %v1039 = vpack.c.bf16 %v1031, %v1023
  %v1040 = vpack.c.bf16 %v1032, %v1024
  %v1041 = vpack.c.bf16 %v1033, %v1025
  %v1042 = vpack.c.bf16 %v1034, %v1026
  %v1043 = vpack.c.bf16 %v1035, %v1027
  %v1044 = vpack.c.bf16 %v1036, %v1028
  %v1045 = vld [vmem:[%s3] sm:$0xff]
  %v1046 = vld [vmem:[%s3 + $0x8] sm:$0xff]
  %v1047 = vld [vmem:[%s3 + $0x10] sm:$0xff]
  %v1048 = vld [vmem:[%s3 + $0x18] sm:$0xff]
  %v1049 = vld [vmem:[%s3 + $0x20] sm:$0xff]
  %v1050 = vld [vmem:[%s3 + $0x28] sm:$0xff]
  %v1051 = vld [vmem:[%s3 + $0x30] sm:$0xff]
  %v1052 = vld [vmem:[%s3 + $0x38] sm:$0xff]
  %v1053 = vld [vmem:[%s3 + $0x40] sm:$0xff]
  %v1054 = vld [vmem:[%s3 + $0x48] sm:$0xff]
  %v1055 = vld [vmem:[%s3 + $0x50] sm:$0xff]
  %v1056 = vld [vmem:[%s3 + $0x58] sm:$0xff]
  %v1057 = vld [vmem:[%s3 + $0x60] sm:$0xff]
  %v1058 = vld [vmem:[%s3 + $0x68] sm:$0xff]
  %v1059 = vld [vmem:[%s3 + $0x70] sm:$0xff]
  %v1060 = vld [vmem:[%s3 + $0x78] sm:$0xff]
  %v1061 = vld [vmem:[%s3 + $0x80] sm:$0xff]
  %v1062 = vld [vmem:[%s3 + $0x88] sm:$0xff]
  %v1063 = vld [vmem:[%s3 + $0x90] sm:$0xff]
  %v1064 = vld [vmem:[%s3 + $0x98] sm:$0xff]
  %v1065 = vld [vmem:[%s3 + $0xa0] sm:$0xff]
  %v1066 = vld [vmem:[%s3 + $0xa8] sm:$0xff]
  %v1067 = vld [vmem:[%s3 + $0xb0] sm:$0xff]
  %v1068 = vld [vmem:[%s3 + $0xb8] sm:$0xff]
  %v1069 = vld [vmem:[%s3 + $0xc0] sm:$0xff]
  %v1070 = vld [vmem:[%s3 + $0xc8] sm:$0xff]
  %v1071 = vld [vmem:[%s3 + $0xd0] sm:$0xff]
  %v1072 = vld [vmem:[%s3 + $0xd8] sm:$0xff]
  %v1073 = vld [vmem:[%s3 + $0xe0] sm:$0xff]
  %v1074 = vld [vmem:[%s3 + $0xe8] sm:$0xff]
  %v1075 = vld [vmem:[%s3 + $0xf0] sm:$0xff]
  %v1076 = vld [vmem:[%s3 + $0xf8] sm:$0xff]
  %v1077 = vld [vmem:[%s3 + $0x100] sm:$0xff]
  %v1078 = vld [vmem:[%s3 + $0x108] sm:$0xff]
  %v1079 = vld [vmem:[%s3 + $0x110] sm:$0xff]
  %v1080 = vld [vmem:[%s3 + $0x118] sm:$0xff]
  %v1081 = vld [vmem:[%s3 + $0x120] sm:$0xff]
  %v1082 = vld [vmem:[%s3 + $0x128] sm:$0xff]
  %v1083 = vld [vmem:[%s3 + $0x130] sm:$0xff]
  %v1084 = vld [vmem:[%s3 + $0x138] sm:$0xff]
  %v1085 = vld [vmem:[%s3 + $0x140] sm:$0xff]
  %v1086 = vld [vmem:[%s3 + $0x148] sm:$0xff]
  %v1087 = vld [vmem:[%s3 + $0x150] sm:$0xff]
  %v1088 = vld [vmem:[%s3 + $0x158] sm:$0xff]
  %v1089 = vld [vmem:[%s3 + $0x160] sm:$0xff]
  %v1090 = vld [vmem:[%s3 + $0x168] sm:$0xff]
  %v1091 = vld [vmem:[%s3 + $0x170] sm:$0xff]
  %v1092 = vld [vmem:[%s3 + $0x178] sm:$0xff]
  %v1093 = vld [vmem:[%s3 + $0x180] sm:$0xff]
  %v1094 = vld [vmem:[%s3 + $0x188] sm:$0xff]
  %v1095 = vld [vmem:[%s3 + $0x190] sm:$0xff]
  %v1096 = vld [vmem:[%s3 + $0x198] sm:$0xff]
  %v1097 = vld [vmem:[%s3 + $0x1a0] sm:$0xff]
  %v1098 = vld [vmem:[%s3 + $0x1a8] sm:$0xff]
  %v1099 = vld [vmem:[%s3 + $0x1b0] sm:$0xff]
  %v1100 = vld [vmem:[%s3 + $0x1b8] sm:$0xff]
  %v1101 = vld [vmem:[%s3 + $0x1c0] sm:$0xff]
  %v1102 = vld [vmem:[%s3 + $0x1c8] sm:$0xff]
  %v1103 = vld [vmem:[%s3 + $0x1d0] sm:$0xff]
  %v1104 = vld [vmem:[%s3 + $0x1d8] sm:$0xff]
  %v1105 = vld [vmem:[%s3 + $0x1e0] sm:$0xff]
  %v1106 = vld [vmem:[%s3 + $0x1e8] sm:$0xff]
  %v1107 = vld [vmem:[%s3 + $0x1f0] sm:$0xff]
  %v1108 = vld [vmem:[%s3 + $0x1f8] sm:$0xff]
  %v1109 = vld [vmem:[%s3 + $0x200] sm:$0xff]
  %v1110 = vld [vmem:[%s3 + $0x208] sm:$0xff]
  %v1111 = vld [vmem:[%s3 + $0x210] sm:$0xff]
  %v1112 = vld [vmem:[%s3 + $0x218] sm:$0xff]
  %v1113 = vld [vmem:[%s3 + $0x220] sm:$0xff]
  %v1114 = vld [vmem:[%s3 + $0x228] sm:$0xff]
  %v1115 = vld [vmem:[%s3 + $0x230] sm:$0xff]
  %v1116 = vld [vmem:[%s3 + $0x238] sm:$0xff]
  %v1117 = vld [vmem:[%s3 + $0x240] sm:$0xff]
  %v1118 = vld [vmem:[%s3 + $0x248] sm:$0xff]
  %v1119 = vld [vmem:[%s3 + $0x250] sm:$0xff]
  %v1120 = vld [vmem:[%s3 + $0x258] sm:$0xff]
  %v1121 = vld [vmem:[%s3 + $0x260] sm:$0xff]
  %v1122 = vld [vmem:[%s3 + $0x268] sm:$0xff]
  %v1123 = vld [vmem:[%s3 + $0x270] sm:$0xff]
  %v1124 = vld [vmem:[%s3 + $0x278] sm:$0xff]
  %v1125 = vld [vmem:[%s3 + $0x280] sm:$0xff]
  %v1126 = vld [vmem:[%s3 + $0x288] sm:$0xff]
  %v1127 = vld [vmem:[%s3 + $0x290] sm:$0xff]
  %v1128 = vld [vmem:[%s3 + $0x298] sm:$0xff]
  %v1129 = vld [vmem:[%s3 + $0x2a0] sm:$0xff]
  %v1130 = vld [vmem:[%s3 + $0x2a8] sm:$0xff]
  %v1131 = vld [vmem:[%s3 + $0x2b0] sm:$0xff]
  %v1132 = vld [vmem:[%s3 + $0x2b8] sm:$0xff]
  %v1133 = vld [vmem:[%s3 + $0x2c0] sm:$0xff]
  %v1134 = vld [vmem:[%s3 + $0x2c8] sm:$0xff]
  %v1135 = vld [vmem:[%s3 + $0x2d0] sm:$0xff]
  %v1136 = vld [vmem:[%s3 + $0x2d8] sm:$0xff]
  %v1137 = vld [vmem:[%s3 + $0x2e0] sm:$0xff]
  %v1138 = vld [vmem:[%s3 + $0x2e8] sm:$0xff]
  %v1139 = vld [vmem:[%s3 + $0x2f0] sm:$0xff]
  %v1140 = vld [vmem:[%s3 + $0x2f8] sm:$0xff]
  %v1141 = vld [vmem:[%s3 + $0x300] sm:$0xff]
  %v1142 = vld [vmem:[%s3 + $0x308] sm:$0xff]
  %v1143 = vld [vmem:[%s3 + $0x310] sm:$0xff]
  %v1144 = vld [vmem:[%s3 + $0x318] sm:$0xff]
  %v1145 = vld [vmem:[%s3 + $0x320] sm:$0xff]
  %v1146 = vld [vmem:[%s3 + $0x328] sm:$0xff]
  %v1147 = vld [vmem:[%s3 + $0x330] sm:$0xff]
  %v1148 = vld [vmem:[%s3 + $0x338] sm:$0xff]
  %v1149 = vld [vmem:[%s3 + $0x340] sm:$0xff]
  %v1150 = vld [vmem:[%s3 + $0x348] sm:$0xff]
  %v1151 = vld [vmem:[%s3 + $0x350] sm:$0xff]
  %v1152 = vld [vmem:[%s3 + $0x358] sm:$0xff]
  %v1153 = vld [vmem:[%s3 + $0x360] sm:$0xff]
  %v1154 = vld [vmem:[%s3 + $0x368] sm:$0xff]
  %v1155 = vld [vmem:[%s3 + $0x370] sm:$0xff]
  %v1156 = vld [vmem:[%s3 + $0x378] sm:$0xff]
  %v1157 = vld [vmem:[%s3 + $0x380] sm:$0xff]
  %v1158 = vld [vmem:[%s3 + $0x388] sm:$0xff]
  %v1159 = vld [vmem:[%s3 + $0x390] sm:$0xff]
  %v1160 = vld [vmem:[%s3 + $0x398] sm:$0xff]
  %v1161 = vld [vmem:[%s3 + $0x3a0] sm:$0xff]
  %v1162 = vld [vmem:[%s3 + $0x3a8] sm:$0xff]
  %v1163 = vld [vmem:[%s3 + $0x3b0] sm:$0xff]
  %v1164 = vld [vmem:[%s3 + $0x3b8] sm:$0xff]
  %v1165 = vld [vmem:[%s3 + $0x3c0] sm:$0xff]
  %v1166 = vld [vmem:[%s3 + $0x3c8] sm:$0xff]
  %v1167 = vld [vmem:[%s3 + $0x3d0] sm:$0xff]
  %v1168 = vld [vmem:[%s3 + $0x3d8] sm:$0xff]
  %v1169 = vld [vmem:[%s3 + $0x3e0] sm:$0xff]
  %v1170 = vld [vmem:[%s3 + $0x3e8] sm:$0xff]
  %v1171 = vld [vmem:[%s3 + $0x3f0] sm:$0xff]
  %v1172 = vld [vmem:[%s3 + $0x3f8] sm:$0xff]
  %v1173 = vld [vmem:[%s3 + $0x400] sm:$0xff]
  %v1174 = vld [vmem:[%s3 + $0x408] sm:$0xff]
  %v1175 = vld [vmem:[%s3 + $0x410] sm:$0xff]
  %v1176 = vld [vmem:[%s3 + $0x418] sm:$0xff]
  %v1177 = vld [vmem:[%s3 + $0x420] sm:$0xff]
  %v1178 = vld [vmem:[%s3 + $0x428] sm:$0xff]
  %v1179 = vld [vmem:[%s3 + $0x430] sm:$0xff]
  %v1180 = vld [vmem:[%s3 + $0x438] sm:$0xff]
  %v1181 = vld [vmem:[%s3 + $0x440] sm:$0xff]
  %v1182 = vld [vmem:[%s3 + $0x448] sm:$0xff]
  %v1183 = vld [vmem:[%s3 + $0x450] sm:$0xff]
  %v1184 = vld [vmem:[%s3 + $0x458] sm:$0xff]
  %v1185 = vld [vmem:[%s3 + $0x460] sm:$0xff]
  %v1186 = vld [vmem:[%s3 + $0x468] sm:$0xff]
  %v1187 = vld [vmem:[%s3 + $0x470] sm:$0xff]
  %v1188 = vld [vmem:[%s3 + $0x478] sm:$0xff]
  %v1189 = vld [vmem:[%s3 + $0x480] sm:$0xff]
  %v1190 = vld [vmem:[%s3 + $0x488] sm:$0xff]
  %v1191 = vld [vmem:[%s3 + $0x490] sm:$0xff]
  %v1192 = vld [vmem:[%s3 + $0x498] sm:$0xff]
  %v1193 = vld [vmem:[%s3 + $0x4a0] sm:$0xff]
  %v1194 = vld [vmem:[%s3 + $0x4a8] sm:$0xff]
  %v1195 = vld [vmem:[%s3 + $0x4b0] sm:$0xff]
  %v1196 = vld [vmem:[%s3 + $0x4b8] sm:$0xff]
  %v1197 = vld [vmem:[%s3 + $0x4c0] sm:$0xff]
  %v1198 = vld [vmem:[%s3 + $0x4c8] sm:$0xff]
  %v1199 = vld [vmem:[%s3 + $0x4d0] sm:$0xff]
  %v1200 = vld [vmem:[%s3 + $0x4d8] sm:$0xff]
  %v1201 = vld [vmem:[%s3 + $0x4e0] sm:$0xff]
  %v1202 = vld [vmem:[%s3 + $0x4e8] sm:$0xff]
  %v1203 = vld [vmem:[%s3 + $0x4f0] sm:$0xff]
  %v1204 = vld [vmem:[%s3 + $0x4f8] sm:$0xff]
  %v1205 = vld [vmem:[%s3 + $0x500] sm:$0xff]
  %v1206 = vld [vmem:[%s3 + $0x508] sm:$0xff]
  %v1207 = vld [vmem:[%s3 + $0x510] sm:$0xff]
  %v1208 = vld [vmem:[%s3 + $0x518] sm:$0xff]
  %v1209 = vld [vmem:[%s3 + $0x520] sm:$0xff]
  %v1210 = vld [vmem:[%s3 + $0x528] sm:$0xff]
  %v1211 = vld [vmem:[%s3 + $0x530] sm:$0xff]
  %v1212 = vld [vmem:[%s3 + $0x538] sm:$0xff]
  %v1213 = vld [vmem:[%s3 + $0x540] sm:$0xff]
  %v1214 = vld [vmem:[%s3 + $0x548] sm:$0xff]
  %v1215 = vld [vmem:[%s3 + $0x550] sm:$0xff]
  %v1216 = vld [vmem:[%s3 + $0x558] sm:$0xff]
  %v1217 = vld [vmem:[%s3 + $0x560] sm:$0xff]
  %v1218 = vld [vmem:[%s3 + $0x568] sm:$0xff]
  %v1219 = vld [vmem:[%s3 + $0x570] sm:$0xff]
  %v1220 = vld [vmem:[%s3 + $0x578] sm:$0xff]
  %v1221 = vld [vmem:[%s3 + $0x580] sm:$0xff]
  %v1222 = vld [vmem:[%s3 + $0x588] sm:$0xff]
  %v1223 = vld [vmem:[%s3 + $0x590] sm:$0xff]
  %v1224 = vld [vmem:[%s3 + $0x598] sm:$0xff]
  %v1225 = vld [vmem:[%s3 + $0x5a0] sm:$0xff]
  %v1226 = vld [vmem:[%s3 + $0x5a8] sm:$0xff]
  %v1227 = vld [vmem:[%s3 + $0x5b0] sm:$0xff]
  %v1228 = vld [vmem:[%s3 + $0x5b8] sm:$0xff]
  %v1229 = vld [vmem:[%s3 + $0x5c0] sm:$0xff]
  %v1230 = vld [vmem:[%s3 + $0x5c8] sm:$0xff]
  %v1231 = vld [vmem:[%s3 + $0x5d0] sm:$0xff]
  %v1232 = vld [vmem:[%s3 + $0x5d8] sm:$0xff]
  %v1233 = vld [vmem:[%s3 + $0x5e0] sm:$0xff]
  %v1234 = vld [vmem:[%s3 + $0x5e8] sm:$0xff]
  %v1235 = vld [vmem:[%s3 + $0x5f0] sm:$0xff]
  %v1236 = vld [vmem:[%s3 + $0x5f8] sm:$0xff]
  %v1237 = vld [vmem:[%s3 + $0x600] sm:$0xff]
  %v1238 = vld [vmem:[%s3 + $0x608] sm:$0xff]
  %v1239 = vld [vmem:[%s3 + $0x610] sm:$0xff]
  %v1240 = vld [vmem:[%s3 + $0x618] sm:$0xff]
  %v1241 = vld [vmem:[%s3 + $0x620] sm:$0xff]
  %v1242 = vld [vmem:[%s3 + $0x628] sm:$0xff]
  %v1243 = vld [vmem:[%s3 + $0x630] sm:$0xff]
  %v1244 = vld [vmem:[%s3 + $0x638] sm:$0xff]
  %v1245 = vld [vmem:[%s3 + $0x640] sm:$0xff]
  %v1246 = vld [vmem:[%s3 + $0x648] sm:$0xff]
  %v1247 = vld [vmem:[%s3 + $0x650] sm:$0xff]
  %v1248 = vld [vmem:[%s3 + $0x658] sm:$0xff]
  %v1249 = vld [vmem:[%s3 + $0x660] sm:$0xff]
  %v1250 = vld [vmem:[%s3 + $0x668] sm:$0xff]
  %v1251 = vld [vmem:[%s3 + $0x670] sm:$0xff]
  %v1252 = vld [vmem:[%s3 + $0x678] sm:$0xff]
  %v1253 = vld [vmem:[%s3 + $0x680] sm:$0xff]
  %v1254 = vld [vmem:[%s3 + $0x688] sm:$0xff]
  %v1255 = vld [vmem:[%s3 + $0x690] sm:$0xff]
  %v1256 = vld [vmem:[%s3 + $0x698] sm:$0xff]
  %v1257 = vld [vmem:[%s3 + $0x6a0] sm:$0xff]
  %v1258 = vld [vmem:[%s3 + $0x6a8] sm:$0xff]
  %v1259 = vld [vmem:[%s3 + $0x6b0] sm:$0xff]
  %v1260 = vld [vmem:[%s3 + $0x6b8] sm:$0xff]
  %v1261 = vld [vmem:[%s3 + $0x6c0] sm:$0xff]
  %v1262 = vld [vmem:[%s3 + $0x6c8] sm:$0xff]
  %v1263 = vld [vmem:[%s3 + $0x6d0] sm:$0xff]
  %v1264 = vld [vmem:[%s3 + $0x6d8] sm:$0xff]
  %v1265 = vld [vmem:[%s3 + $0x6e0] sm:$0xff]
  %v1266 = vld [vmem:[%s3 + $0x6e8] sm:$0xff]
  %v1267 = vld [vmem:[%s3 + $0x6f0] sm:$0xff]
  %v1268 = vld [vmem:[%s3 + $0x6f8] sm:$0xff]
  %v1269 = vld [vmem:[%s3 + $0x700] sm:$0xff]
  %v1270 = vld [vmem:[%s3 + $0x708] sm:$0xff]
  %v1271 = vld [vmem:[%s3 + $0x710] sm:$0xff]
  %v1272 = vld [vmem:[%s3 + $0x718] sm:$0xff]
  %v1273 = vld [vmem:[%s3 + $0x720] sm:$0xff]
  %v1274 = vld [vmem:[%s3 + $0x728] sm:$0xff]
  %v1275 = vld [vmem:[%s3 + $0x730] sm:$0xff]
  %v1276 = vld [vmem:[%s3 + $0x738] sm:$0xff]
  %v1277 = vld [vmem:[%s3 + $0x740] sm:$0xff]
  %v1278 = vld [vmem:[%s3 + $0x748] sm:$0xff]
  %v1279 = vld [vmem:[%s3 + $0x750] sm:$0xff]
  %v1280 = vld [vmem:[%s3 + $0x758] sm:$0xff]
  %v1281 = vld [vmem:[%s3 + $0x760] sm:$0xff]
  %v1282 = vld [vmem:[%s3 + $0x768] sm:$0xff]
  %v1283 = vld [vmem:[%s3 + $0x770] sm:$0xff]
  %v1284 = vld [vmem:[%s3 + $0x778] sm:$0xff]
  %v1285 = vld [vmem:[%s3 + $0x780] sm:$0xff]
  %v1286 = vld [vmem:[%s3 + $0x788] sm:$0xff]
  %v1287 = vld [vmem:[%s3 + $0x790] sm:$0xff]
  %v1288 = vld [vmem:[%s3 + $0x798] sm:$0xff]
  %v1289 = vld [vmem:[%s3 + $0x7a0] sm:$0xff]
  %v1290 = vld [vmem:[%s3 + $0x7a8] sm:$0xff]
  %v1291 = vld [vmem:[%s3 + $0x7b0] sm:$0xff]
  %v1292 = vld [vmem:[%s3 + $0x7b8] sm:$0xff]
  %v1293 = vld [vmem:[%s3 + $0x7c0] sm:$0xff]
  %v1294 = vld [vmem:[%s3 + $0x7c8] sm:$0xff]
  %v1295 = vld [vmem:[%s3 + $0x7d0] sm:$0xff]
  %v1296 = vld [vmem:[%s3 + $0x7d8] sm:$0xff]
  %v1297 = vld [vmem:[%s3 + $0x7e0] sm:$0xff]
  %v1298 = vld [vmem:[%s3 + $0x7e8] sm:$0xff]
  %v1299 = vld [vmem:[%s3 + $0x7f0] sm:$0xff]
  %v1300 = vld [vmem:[%s3 + $0x7f8] sm:$0xff]
  %v1301 = vld [vmem:[%s3 + $0x800] sm:$0xff]
  %v1302 = vld [vmem:[%s3 + $0x808] sm:$0xff]
  %v1303 = vld [vmem:[%s3 + $0x810] sm:$0xff]
  %v1304 = vld [vmem:[%s3 + $0x818] sm:$0xff]
  %v1305 = vld [vmem:[%s3 + $0x820] sm:$0xff]
  %v1306 = vld [vmem:[%s3 + $0x828] sm:$0xff]
  %v1307 = vld [vmem:[%s3 + $0x830] sm:$0xff]
  %v1308 = vld [vmem:[%s3 + $0x838] sm:$0xff]
  %v1309 = vld [vmem:[%s3 + $0x840] sm:$0xff]
  %v1310 = vld [vmem:[%s3 + $0x848] sm:$0xff]
  %v1311 = vld [vmem:[%s3 + $0x850] sm:$0xff]
  %v1312 = vld [vmem:[%s3 + $0x858] sm:$0xff]
  %v1313 = vld [vmem:[%s3 + $0x860] sm:$0xff]
  %v1314 = vld [vmem:[%s3 + $0x868] sm:$0xff]
  %v1315 = vld [vmem:[%s3 + $0x870] sm:$0xff]
  %v1316 = vld [vmem:[%s3 + $0x878] sm:$0xff]
  %v1317 = vld [vmem:[%s3 + $0x880] sm:$0xff]
  %v1318 = vld [vmem:[%s3 + $0x888] sm:$0xff]
  %v1319 = vld [vmem:[%s3 + $0x890] sm:$0xff]
  %v1320 = vld [vmem:[%s3 + $0x898] sm:$0xff]
  %v1321 = vld [vmem:[%s3 + $0x8a0] sm:$0xff]
  %v1322 = vld [vmem:[%s3 + $0x8a8] sm:$0xff]
  %v1323 = vld [vmem:[%s3 + $0x8b0] sm:$0xff]
  %v1324 = vld [vmem:[%s3 + $0x8b8] sm:$0xff]
  %v1325 = vld [vmem:[%s3 + $0x8c0] sm:$0xff]
  %v1326 = vld [vmem:[%s3 + $0x8c8] sm:$0xff]
  %v1327 = vld [vmem:[%s3 + $0x8d0] sm:$0xff]
  %v1328 = vld [vmem:[%s3 + $0x8d8] sm:$0xff]
  %v1329 = vld [vmem:[%s3 + $0x8e0] sm:$0xff]
  %v1330 = vld [vmem:[%s3 + $0x8e8] sm:$0xff]
  %v1331 = vld [vmem:[%s3 + $0x8f0] sm:$0xff]
  %v1332 = vld [vmem:[%s3 + $0x8f8] sm:$0xff]
  %v1333 = vld [vmem:[%s3 + $0x900] sm:$0xff]
  %v1334 = vld [vmem:[%s3 + $0x908] sm:$0xff]
  %v1335 = vld [vmem:[%s3 + $0x910] sm:$0xff]
  %v1336 = vld [vmem:[%s3 + $0x918] sm:$0xff]
  %v1337 = vld [vmem:[%s3 + $0x920] sm:$0xff]
  %v1338 = vld [vmem:[%s3 + $0x928] sm:$0xff]
  %v1339 = vld [vmem:[%s3 + $0x930] sm:$0xff]
  %v1340 = vld [vmem:[%s3 + $0x938] sm:$0xff]
  %v1341 = vld [vmem:[%s3 + $0x940] sm:$0xff]
  %v1342 = vld [vmem:[%s3 + $0x948] sm:$0xff]
  %v1343 = vld [vmem:[%s3 + $0x950] sm:$0xff]
  %v1344 = vld [vmem:[%s3 + $0x958] sm:$0xff]
  %v1345 = vld [vmem:[%s3 + $0x960] sm:$0xff]
  %v1346 = vld [vmem:[%s3 + $0x968] sm:$0xff]
  %v1347 = vld [vmem:[%s3 + $0x970] sm:$0xff]
  %v1348 = vld [vmem:[%s3 + $0x978] sm:$0xff]
  %v1349 = vld [vmem:[%s3 + $0x980] sm:$0xff]
  %v1350 = vld [vmem:[%s3 + $0x988] sm:$0xff]
  %v1351 = vld [vmem:[%s3 + $0x990] sm:$0xff]
  %v1352 = vld [vmem:[%s3 + $0x998] sm:$0xff]
  %v1353 = vld [vmem:[%s3 + $0x9a0] sm:$0xff]
  %v1354 = vld [vmem:[%s3 + $0x9a8] sm:$0xff]
  %v1355 = vld [vmem:[%s3 + $0x9b0] sm:$0xff]
  %v1356 = vld [vmem:[%s3 + $0x9b8] sm:$0xff]
  %v1357 = vld [vmem:[%s3 + $0x9c0] sm:$0xff]
  %v1358 = vld [vmem:[%s3 + $0x9c8] sm:$0xff]
  %v1359 = vld [vmem:[%s3 + $0x9d0] sm:$0xff]
  %v1360 = vld [vmem:[%s3 + $0x9d8] sm:$0xff]
  %v1361 = vld [vmem:[%s3 + $0x9e0] sm:$0xff]
  %v1362 = vld [vmem:[%s3 + $0x9e8] sm:$0xff]
  %v1363 = vld [vmem:[%s3 + $0x9f0] sm:$0xff]
  %v1364 = vld [vmem:[%s3 + $0x9f8] sm:$0xff]
  %v1365 = vld [vmem:[%s3 + $0xa00] sm:$0xff]
  %v1366 = vld [vmem:[%s3 + $0xa08] sm:$0xff]
  %v1367 = vld [vmem:[%s3 + $0xa10] sm:$0xff]
  %v1368 = vld [vmem:[%s3 + $0xa18] sm:$0xff]
  %v1369 = vld [vmem:[%s3 + $0xa20] sm:$0xff]
  %v1370 = vld [vmem:[%s3 + $0xa28] sm:$0xff]
  %v1371 = vld [vmem:[%s3 + $0xa30] sm:$0xff]
  %v1372 = vld [vmem:[%s3 + $0xa38] sm:$0xff]
  %v1373 = vld [vmem:[%s3 + $0xa40] sm:$0xff]
  %v1374 = vld [vmem:[%s3 + $0xa48] sm:$0xff]
  %v1375 = vld [vmem:[%s3 + $0xa50] sm:$0xff]
  %v1376 = vld [vmem:[%s3 + $0xa58] sm:$0xff]
  %v1377 = vld [vmem:[%s3 + $0xa60] sm:$0xff]
  %v1378 = vld [vmem:[%s3 + $0xa68] sm:$0xff]
  %v1379 = vld [vmem:[%s3 + $0xa70] sm:$0xff]
  %v1380 = vld [vmem:[%s3 + $0xa78] sm:$0xff]
  %v1381 = vld [vmem:[%s3 + $0xa80] sm:$0xff]
  %v1382 = vld [vmem:[%s3 + $0xa88] sm:$0xff]
  %v1383 = vld [vmem:[%s3 + $0xa90] sm:$0xff]
  %v1384 = vld [vmem:[%s3 + $0xa98] sm:$0xff]
  %v1385 = vld [vmem:[%s3 + $0xaa0] sm:$0xff]
  %v1386 = vld [vmem:[%s3 + $0xaa8] sm:$0xff]
  %v1387 = vld [vmem:[%s3 + $0xab0] sm:$0xff]
  %v1388 = vld [vmem:[%s3 + $0xab8] sm:$0xff]
  %v1389 = vld [vmem:[%s3 + $0xac0] sm:$0xff]
  %v1390 = vld [vmem:[%s3 + $0xac8] sm:$0xff]
  %v1391 = vld [vmem:[%s3 + $0xad0] sm:$0xff]
  %v1392 = vld [vmem:[%s3 + $0xad8] sm:$0xff]
  %v1393 = vld [vmem:[%s3 + $0xae0] sm:$0xff]
  %v1394 = vld [vmem:[%s3 + $0xae8] sm:$0xff]
  %v1395 = vld [vmem:[%s3 + $0xaf0] sm:$0xff]
  %v1396 = vld [vmem:[%s3 + $0xaf8] sm:$0xff]
  %v1397 = vld [vmem:[%s3 + $0xb00] sm:$0xff]
  %v1398 = vld [vmem:[%s3 + $0xb08] sm:$0xff]
  %v1399 = vld [vmem:[%s3 + $0xb10] sm:$0xff]
  %v1400 = vld [vmem:[%s3 + $0xb18] sm:$0xff]
  %v1401 = vld [vmem:[%s3 + $0xb20] sm:$0xff]
  %v1402 = vld [vmem:[%s3 + $0xb28] sm:$0xff]
  %v1403 = vld [vmem:[%s3 + $0xb30] sm:$0xff]
  %v1404 = vld [vmem:[%s3 + $0xb38] sm:$0xff]
  %v1405 = vld [vmem:[%s3 + $0xb40] sm:$0xff]
  %v1406 = vld [vmem:[%s3 + $0xb48] sm:$0xff]
  %v1407 = vld [vmem:[%s3 + $0xb50] sm:$0xff]
  %v1408 = vld [vmem:[%s3 + $0xb58] sm:$0xff]
  %v1409 = vld [vmem:[%s3 + $0xb60] sm:$0xff]
  %v1410 = vld [vmem:[%s3 + $0xb68] sm:$0xff]
  %v1411 = vld [vmem:[%s3 + $0xb70] sm:$0xff]
  %v1412 = vld [vmem:[%s3 + $0xb78] sm:$0xff]
  %v1413 = vld [vmem:[%s3 + $0xb80] sm:$0xff]
  %v1414 = vld [vmem:[%s3 + $0xb88] sm:$0xff]
  %v1415 = vld [vmem:[%s3 + $0xb90] sm:$0xff]
  %v1416 = vld [vmem:[%s3 + $0xb98] sm:$0xff]
  %v1417 = vld [vmem:[%s3 + $0xba0] sm:$0xff]
  %v1418 = vld [vmem:[%s3 + $0xba8] sm:$0xff]
  %v1419 = vld [vmem:[%s3 + $0xbb0] sm:$0xff]
  %v1420 = vld [vmem:[%s3 + $0xbb8] sm:$0xff]
  %v1421 = vld [vmem:[%s3 + $0xbc0] sm:$0xff]
  %v1422 = vld [vmem:[%s3 + $0xbc8] sm:$0xff]
  %v1423 = vld [vmem:[%s3 + $0xbd0] sm:$0xff]
  %v1424 = vld [vmem:[%s3 + $0xbd8] sm:$0xff]
  %v1425 = vld [vmem:[%s3 + $0xbe0] sm:$0xff]
  %v1426 = vld [vmem:[%s3 + $0xbe8] sm:$0xff]
  %v1427 = vld [vmem:[%s3 + $0xbf0] sm:$0xff]
  %v1428 = vld [vmem:[%s3 + $0xbf8] sm:$0xff]
  %v1429 = vld [vmem:[%s3 + $0xc00] sm:$0xff]
  %v1430 = vld [vmem:[%s3 + $0xc08] sm:$0xff]
  %v1431 = vld [vmem:[%s3 + $0xc10] sm:$0xff]
  %v1432 = vld [vmem:[%s3 + $0xc18] sm:$0xff]
  %v1433 = vld [vmem:[%s3 + $0xc20] sm:$0xff]
  %v1434 = vld [vmem:[%s3 + $0xc28] sm:$0xff]
  %v1435 = vld [vmem:[%s3 + $0xc30] sm:$0xff]
  %v1436 = vld [vmem:[%s3 + $0xc38] sm:$0xff]
  %v1437 = vld [vmem:[%s3 + $0xc40] sm:$0xff]
  %v1438 = vld [vmem:[%s3 + $0xc48] sm:$0xff]
  %v1439 = vld [vmem:[%s3 + $0xc50] sm:$0xff]
  %v1440 = vld [vmem:[%s3 + $0xc58] sm:$0xff]
  %v1441 = vld [vmem:[%s3 + $0xc60] sm:$0xff]
  %v1442 = vld [vmem:[%s3 + $0xc68] sm:$0xff]
  %v1443 = vld [vmem:[%s3 + $0xc70] sm:$0xff]
  %v1444 = vld [vmem:[%s3 + $0xc78] sm:$0xff]
  %v1445 = vld [vmem:[%s3 + $0xc80] sm:$0xff]
  %v1446 = vld [vmem:[%s3 + $0xc88] sm:$0xff]
  %v1447 = vld [vmem:[%s3 + $0xc90] sm:$0xff]
  %v1448 = vld [vmem:[%s3 + $0xc98] sm:$0xff]
  %v1449 = vld [vmem:[%s3 + $0xca0] sm:$0xff]
  %v1450 = vld [vmem:[%s3 + $0xca8] sm:$0xff]
  %v1451 = vld [vmem:[%s3 + $0xcb0] sm:$0xff]
  %v1452 = vld [vmem:[%s3 + $0xcb8] sm:$0xff]
  %v1453 = vld [vmem:[%s3 + $0xcc0] sm:$0xff]
  %v1454 = vld [vmem:[%s3 + $0xcc8] sm:$0xff]
  %v1455 = vld [vmem:[%s3 + $0xcd0] sm:$0xff]
  %v1456 = vld [vmem:[%s3 + $0xcd8] sm:$0xff]
  %v1457 = vld [vmem:[%s3 + $0xce0] sm:$0xff]
  %v1458 = vld [vmem:[%s3 + $0xce8] sm:$0xff]
  %v1459 = vld [vmem:[%s3 + $0xcf0] sm:$0xff]
  %v1460 = vld [vmem:[%s3 + $0xcf8] sm:$0xff]
  %v1461 = vld [vmem:[%s3 + $0xd00] sm:$0xff]
  %v1462 = vld [vmem:[%s3 + $0xd08] sm:$0xff]
  %v1463 = vld [vmem:[%s3 + $0xd10] sm:$0xff]
  %v1464 = vld [vmem:[%s3 + $0xd18] sm:$0xff]
  %v1465 = vld [vmem:[%s3 + $0xd20] sm:$0xff]
  %v1466 = vld [vmem:[%s3 + $0xd28] sm:$0xff]
  %v1467 = vld [vmem:[%s3 + $0xd30] sm:$0xff]
  %v1468 = vld [vmem:[%s3 + $0xd38] sm:$0xff]
  %v1469 = vld [vmem:[%s3 + $0xd40] sm:$0xff]
  %v1470 = vld [vmem:[%s3 + $0xd48] sm:$0xff]
  %v1471 = vld [vmem:[%s3 + $0xd50] sm:$0xff]
  %v1472 = vld [vmem:[%s3 + $0xd58] sm:$0xff]
  %v1473 = vld [vmem:[%s3 + $0xd60] sm:$0xff]
  %v1474 = vld [vmem:[%s3 + $0xd68] sm:$0xff]
  %v1475 = vld [vmem:[%s3 + $0xd70] sm:$0xff]
  %v1476 = vld [vmem:[%s3 + $0xd78] sm:$0xff]
  %v1477 = vld [vmem:[%s3 + $0xd80] sm:$0xff]
  %v1478 = vld [vmem:[%s3 + $0xd88] sm:$0xff]
  %v1479 = vld [vmem:[%s3 + $0xd90] sm:$0xff]
  %v1480 = vld [vmem:[%s3 + $0xd98] sm:$0xff]
  %v1481 = vld [vmem:[%s3 + $0xda0] sm:$0xff]
  %v1482 = vld [vmem:[%s3 + $0xda8] sm:$0xff]
  %v1483 = vld [vmem:[%s3 + $0xdb0] sm:$0xff]
  %v1484 = vld [vmem:[%s3 + $0xdb8] sm:$0xff]
  %v1485 = vld [vmem:[%s3 + $0xdc0] sm:$0xff]
  %v1486 = vld [vmem:[%s3 + $0xdc8] sm:$0xff]
  %v1487 = vld [vmem:[%s3 + $0xdd0] sm:$0xff]
  %v1488 = vld [vmem:[%s3 + $0xdd8] sm:$0xff]
  %v1489 = vld [vmem:[%s3 + $0xde0] sm:$0xff]
  %v1490 = vld [vmem:[%s3 + $0xde8] sm:$0xff]
  %v1491 = vld [vmem:[%s3 + $0xdf0] sm:$0xff]
  %v1492 = vld [vmem:[%s3 + $0xdf8] sm:$0xff]
  %v1493 = vld [vmem:[%s3 + $0xe00] sm:$0xff]
  %v1494 = vld [vmem:[%s3 + $0xe08] sm:$0xff]
  %v1495 = vld [vmem:[%s3 + $0xe10] sm:$0xff]
  %v1496 = vld [vmem:[%s3 + $0xe18] sm:$0xff]
  %v1497 = vld [vmem:[%s3 + $0xe20] sm:$0xff]
  %v1498 = vld [vmem:[%s3 + $0xe28] sm:$0xff]
  %v1499 = vld [vmem:[%s3 + $0xe30] sm:$0xff]
  %v1500 = vld [vmem:[%s3 + $0xe38] sm:$0xff]
  %v1501 = vld [vmem:[%s3 + $0xe40] sm:$0xff]
  %v1502 = vld [vmem:[%s3 + $0xe48] sm:$0xff]
  %v1503 = vld [vmem:[%s3 + $0xe50] sm:$0xff]
  %v1504 = vld [vmem:[%s3 + $0xe58] sm:$0xff]
  %v1505 = vld [vmem:[%s3 + $0xe60] sm:$0xff]
  %v1506 = vld [vmem:[%s3 + $0xe68] sm:$0xff]
  %v1507 = vld [vmem:[%s3 + $0xe70] sm:$0xff]
  %v1508 = vld [vmem:[%s3 + $0xe78] sm:$0xff]
  %v1509 = vld [vmem:[%s3 + $0xe80] sm:$0xff]
  %v1510 = vld [vmem:[%s3 + $0xe88] sm:$0xff]
  %v1511 = vld [vmem:[%s3 + $0xe90] sm:$0xff]
  %v1512 = vld [vmem:[%s3 + $0xe98] sm:$0xff]
  %v1513 = vld [vmem:[%s3 + $0xea0] sm:$0xff]
  %v1514 = vld [vmem:[%s3 + $0xea8] sm:$0xff]
  %v1515 = vld [vmem:[%s3 + $0xeb0] sm:$0xff]
  %v1516 = vld [vmem:[%s3 + $0xeb8] sm:$0xff]
  %v1517 = vld [vmem:[%s3 + $0xec0] sm:$0xff]
  %v1518 = vld [vmem:[%s3 + $0xec8] sm:$0xff]
  %v1519 = vld [vmem:[%s3 + $0xed0] sm:$0xff]
  %v1520 = vld [vmem:[%s3 + $0xed8] sm:$0xff]
  %v1521 = vld [vmem:[%s3 + $0xee0] sm:$0xff]
  %v1522 = vld [vmem:[%s3 + $0xee8] sm:$0xff]
  %v1523 = vld [vmem:[%s3 + $0xef0] sm:$0xff]
  %v1524 = vld [vmem:[%s3 + $0xef8] sm:$0xff]
  %v1525 = vld [vmem:[%s3 + $0xf00] sm:$0xff]
  %v1526 = vld [vmem:[%s3 + $0xf08] sm:$0xff]
  %v1527 = vld [vmem:[%s3 + $0xf10] sm:$0xff]
  %v1528 = vld [vmem:[%s3 + $0xf18] sm:$0xff]
  %v1529 = vld [vmem:[%s3 + $0xf20] sm:$0xff]
  %v1530 = vld [vmem:[%s3 + $0xf28] sm:$0xff]
  %v1531 = vld [vmem:[%s3 + $0xf30] sm:$0xff]
  %v1532 = vld [vmem:[%s3 + $0xf38] sm:$0xff]
  %v1533 = vld [vmem:[%s3 + $0xf40] sm:$0xff]
  %v1534 = vld [vmem:[%s3 + $0xf48] sm:$0xff]
  %v1535 = vld [vmem:[%s3 + $0xf50] sm:$0xff]
  %v1536 = vld [vmem:[%s3 + $0xf58] sm:$0xff]
  %v1537 = vld [vmem:[%s3 + $0xf60] sm:$0xff]
  %v1538 = vld [vmem:[%s3 + $0xf68] sm:$0xff]
  %v1539 = vld [vmem:[%s3 + $0xf70] sm:$0xff]
  %v1540 = vld [vmem:[%s3 + $0xf78] sm:$0xff]
  %v1541 = vld [vmem:[%s3 + $0xf80] sm:$0xff]
  %v1542 = vld [vmem:[%s3 + $0xf88] sm:$0xff]
  %v1543 = vld [vmem:[%s3 + $0xf90] sm:$0xff]
  %v1544 = vld [vmem:[%s3 + $0xf98] sm:$0xff]
  %v1545 = vld [vmem:[%s3 + $0xfa0] sm:$0xff]
  %v1546 = vld [vmem:[%s3 + $0xfa8] sm:$0xff]
  %v1547 = vld [vmem:[%s3 + $0xfb0] sm:$0xff]
  %v1548 = vld [vmem:[%s3 + $0xfb8] sm:$0xff]
  %v1549 = vld [vmem:[%s3 + $0xfc0] sm:$0xff]
  %v1550 = vld [vmem:[%s3 + $0xfc8] sm:$0xff]
  %v1551 = vld [vmem:[%s3 + $0xfd0] sm:$0xff]
  %v1552 = vld [vmem:[%s3 + $0xfd8] sm:$0xff]
  %v1553 = vld [vmem:[%s3 + $0xfe0] sm:$0xff]
  %v1554 = vld [vmem:[%s3 + $0xfe8] sm:$0xff]
  %v1555 = vld [vmem:[%s3 + $0xff0] sm:$0xff]
  %v1556 = vld [vmem:[%s3 + $0xff8] sm:$0xff]
  %v1557 = vld [vmem:[%s4] sm:$0xff]
  %v1559 = vlaneseq
  %v1560 = vshrl.u32 %v1559, 7
  %v1561 = vsub.s32 0, %v1560
  %v1562 = vrot.slane %v1557, %v1561
  %v1563 = vlaneseq
  %v1564 = vshrl.u32 %v1563, 7
  %v1565 = vsub.s32 1, %v1564
  %v1566 = vrot.slane %v1557, %v1565
  %v1567 = vlaneseq
  %v1568 = vshrl.u32 %v1567, 7
  %v1569 = vsub.s32 2, %v1568
  %v1570 = vrot.slane %v1557, %v1569
  %v1571 = vlaneseq
  %v1572 = vshrl.u32 %v1571, 7
  %v1573 = vsub.s32 3, %v1572
  %v1574 = vrot.slane %v1557, %v1573
  %v1575 = vlaneseq
  %v1576 = vshrl.u32 %v1575, 7
  %v1577 = vsub.s32 4, %v1576
  %v1578 = vrot.slane %v1557, %v1577
  %v1579 = vlaneseq
  %v1580 = vshrl.u32 %v1579, 7
  %v1581 = vsub.s32 5, %v1580
  %v1582 = vrot.slane %v1557, %v1581
  %v1583 = vlaneseq
  %v1584 = vshrl.u32 %v1583, 7
  %v1585 = vsub.s32 6, %v1584
  %v1586 = vrot.slane %v1557, %v1585
  %v1587 = vlaneseq
  %v1588 = vshrl.u32 %v1587, 7
  %v1589 = vsub.s32 7, %v1588
  %v1590 = vrot.slane %v1557, %v1589
  %v2111 = vunpack.c.l.b16 %v1045
  %v2112 = vunpack.c.h.b16 %v1045
  %v2113 = vunpack.c.l.b16 %v1046
  %v2114 = vunpack.c.h.b16 %v1046
  %v2115 = vunpack.c.l.b16 %v1047
  %v2116 = vunpack.c.h.b16 %v1047
  %v2117 = vunpack.c.l.b16 %v1048
  %v2118 = vunpack.c.h.b16 %v1048
  %v2119 = vunpack.c.l.b16 %v1049
  %v2120 = vunpack.c.h.b16 %v1049
  %v2121 = vunpack.c.l.b16 %v1050
  %v2122 = vunpack.c.h.b16 %v1050
  %v2123 = vunpack.c.l.b16 %v1051
  %v2124 = vunpack.c.h.b16 %v1051
  %v2125 = vunpack.c.l.b16 %v1052
  %v2126 = vunpack.c.h.b16 %v1052
  %v2127 = vunpack.c.l.b16 %v1053
  %v2128 = vunpack.c.h.b16 %v1053
  %v2129 = vunpack.c.l.b16 %v1054
  %v2130 = vunpack.c.h.b16 %v1054
  %v2131 = vunpack.c.l.b16 %v1055
  %v2132 = vunpack.c.h.b16 %v1055
  %v2133 = vunpack.c.l.b16 %v1056
  %v2134 = vunpack.c.h.b16 %v1056
  %v2135 = vunpack.c.l.b16 %v1057
  %v2136 = vunpack.c.h.b16 %v1057
  %v2137 = vunpack.c.l.b16 %v1058
  %v2138 = vunpack.c.h.b16 %v1058
  %v2139 = vunpack.c.l.b16 %v1059
  %v2140 = vunpack.c.h.b16 %v1059
  %v2141 = vunpack.c.l.b16 %v1060
  %v2142 = vunpack.c.h.b16 %v1060
  %v2143 = vunpack.c.l.b16 %v1061
  %v2144 = vunpack.c.h.b16 %v1061
  %v2145 = vunpack.c.l.b16 %v1062
  %v2146 = vunpack.c.h.b16 %v1062
  %v2147 = vunpack.c.l.b16 %v1063
  %v2148 = vunpack.c.h.b16 %v1063
  %v2149 = vunpack.c.l.b16 %v1064
  %v2150 = vunpack.c.h.b16 %v1064
  %v2151 = vunpack.c.l.b16 %v1065
  %v2152 = vunpack.c.h.b16 %v1065
  %v2153 = vunpack.c.l.b16 %v1066
  %v2154 = vunpack.c.h.b16 %v1066
  %v2155 = vunpack.c.l.b16 %v1067
  %v2156 = vunpack.c.h.b16 %v1067
  %v2157 = vunpack.c.l.b16 %v1068
  %v2158 = vunpack.c.h.b16 %v1068
  %v2159 = vunpack.c.l.b16 %v1069
  %v2160 = vunpack.c.h.b16 %v1069
  %v2161 = vunpack.c.l.b16 %v1070
  %v2162 = vunpack.c.h.b16 %v1070
  %v2163 = vunpack.c.l.b16 %v1071
  %v2164 = vunpack.c.h.b16 %v1071
  %v2165 = vunpack.c.l.b16 %v1072
  %v2166 = vunpack.c.h.b16 %v1072
  %v2167 = vunpack.c.l.b16 %v1073
  %v2168 = vunpack.c.h.b16 %v1073
  %v2169 = vunpack.c.l.b16 %v1074
  %v2170 = vunpack.c.h.b16 %v1074
  %v2171 = vunpack.c.l.b16 %v1075
  %v2172 = vunpack.c.h.b16 %v1075
  %v2173 = vunpack.c.l.b16 %v1076
  %v2174 = vunpack.c.h.b16 %v1076
  %v2175 = vunpack.c.l.b16 %v1077
  %v2176 = vunpack.c.h.b16 %v1077
  %v2177 = vunpack.c.l.b16 %v1078
  %v2178 = vunpack.c.h.b16 %v1078
  %v2179 = vunpack.c.l.b16 %v1079
  %v2180 = vunpack.c.h.b16 %v1079
  %v2181 = vunpack.c.l.b16 %v1080
  %v2182 = vunpack.c.h.b16 %v1080
  %v2183 = vunpack.c.l.b16 %v1081
  %v2184 = vunpack.c.h.b16 %v1081
  %v2185 = vunpack.c.l.b16 %v1082
  %v2186 = vunpack.c.h.b16 %v1082
  %v2187 = vunpack.c.l.b16 %v1083
  %v2188 = vunpack.c.h.b16 %v1083
  %v2189 = vunpack.c.l.b16 %v1084
  %v2190 = vunpack.c.h.b16 %v1084
  %v2191 = vunpack.c.l.b16 %v1085
  %v2192 = vunpack.c.h.b16 %v1085
  %v2193 = vunpack.c.l.b16 %v1086
  %v2194 = vunpack.c.h.b16 %v1086
  %v2195 = vunpack.c.l.b16 %v1087
  %v2196 = vunpack.c.h.b16 %v1087
  %v2197 = vunpack.c.l.b16 %v1088
  %v2198 = vunpack.c.h.b16 %v1088
  %v2199 = vunpack.c.l.b16 %v1089
  %v2200 = vunpack.c.h.b16 %v1089
  %v2201 = vunpack.c.l.b16 %v1090
  %v2202 = vunpack.c.h.b16 %v1090
  %v2203 = vunpack.c.l.b16 %v1091
  %v2204 = vunpack.c.h.b16 %v1091
  %v2205 = vunpack.c.l.b16 %v1092
  %v2206 = vunpack.c.h.b16 %v1092
  %v2207 = vunpack.c.l.b16 %v1093
  %v2208 = vunpack.c.h.b16 %v1093
  %v2209 = vunpack.c.l.b16 %v1094
  %v2210 = vunpack.c.h.b16 %v1094
  %v2211 = vunpack.c.l.b16 %v1095
  %v2212 = vunpack.c.h.b16 %v1095
  %v2213 = vunpack.c.l.b16 %v1096
  %v2214 = vunpack.c.h.b16 %v1096
  %v2215 = vunpack.c.l.b16 %v1097
  %v2216 = vunpack.c.h.b16 %v1097
  %v2217 = vunpack.c.l.b16 %v1098
  %v2218 = vunpack.c.h.b16 %v1098
  %v2219 = vunpack.c.l.b16 %v1099
  %v2220 = vunpack.c.h.b16 %v1099
  %v2221 = vunpack.c.l.b16 %v1100
  %v2222 = vunpack.c.h.b16 %v1100
  %v2223 = vunpack.c.l.b16 %v1101
  %v2224 = vunpack.c.h.b16 %v1101
  %v2225 = vunpack.c.l.b16 %v1102
  %v2226 = vunpack.c.h.b16 %v1102
  %v2227 = vunpack.c.l.b16 %v1103
  %v2228 = vunpack.c.h.b16 %v1103
  %v2229 = vunpack.c.l.b16 %v1104
  %v2230 = vunpack.c.h.b16 %v1104
  %v2231 = vunpack.c.l.b16 %v1105
  %v2232 = vunpack.c.h.b16 %v1105
  %v2233 = vunpack.c.l.b16 %v1106
  %v2234 = vunpack.c.h.b16 %v1106
  %v2235 = vunpack.c.l.b16 %v1107
  %v2236 = vunpack.c.h.b16 %v1107
  %v2237 = vunpack.c.l.b16 %v1108
  %v2238 = vunpack.c.h.b16 %v1108
  %v2239 = vunpack.c.l.b16 %v1109
  %v2240 = vunpack.c.h.b16 %v1109
  %v2241 = vunpack.c.l.b16 %v1110
  %v2242 = vunpack.c.h.b16 %v1110
  %v2243 = vunpack.c.l.b16 %v1111
  %v2244 = vunpack.c.h.b16 %v1111
  %v2245 = vunpack.c.l.b16 %v1112
  %v2246 = vunpack.c.h.b16 %v1112
  %v2247 = vunpack.c.l.b16 %v1113
  %v2248 = vunpack.c.h.b16 %v1113
  %v2249 = vunpack.c.l.b16 %v1114
  %v2250 = vunpack.c.h.b16 %v1114
  %v2251 = vunpack.c.l.b16 %v1115
  %v2252 = vunpack.c.h.b16 %v1115
  %v2253 = vunpack.c.l.b16 %v1116
  %v2254 = vunpack.c.h.b16 %v1116
  %v2255 = vunpack.c.l.b16 %v1117
  %v2256 = vunpack.c.h.b16 %v1117
  %v2257 = vunpack.c.l.b16 %v1118
  %v2258 = vunpack.c.h.b16 %v1118
  %v2259 = vunpack.c.l.b16 %v1119
  %v2260 = vunpack.c.h.b16 %v1119
  %v2261 = vunpack.c.l.b16 %v1120
  %v2262 = vunpack.c.h.b16 %v1120
  %v2263 = vunpack.c.l.b16 %v1121
  %v2264 = vunpack.c.h.b16 %v1121
  %v2265 = vunpack.c.l.b16 %v1122
  %v2266 = vunpack.c.h.b16 %v1122
  %v2267 = vunpack.c.l.b16 %v1123
  %v2268 = vunpack.c.h.b16 %v1123
  %v2269 = vunpack.c.l.b16 %v1124
  %v2270 = vunpack.c.h.b16 %v1124
  %v2271 = vunpack.c.l.b16 %v1125
  %v2272 = vunpack.c.h.b16 %v1125
  %v2273 = vunpack.c.l.b16 %v1126
  %v2274 = vunpack.c.h.b16 %v1126
  %v2275 = vunpack.c.l.b16 %v1127
  %v2276 = vunpack.c.h.b16 %v1127
  %v2277 = vunpack.c.l.b16 %v1128
  %v2278 = vunpack.c.h.b16 %v1128
  %v2279 = vunpack.c.l.b16 %v1129
  %v2280 = vunpack.c.h.b16 %v1129
  %v2281 = vunpack.c.l.b16 %v1130
  %v2282 = vunpack.c.h.b16 %v1130
  %v2283 = vunpack.c.l.b16 %v1131
  %v2284 = vunpack.c.h.b16 %v1131
  %v2285 = vunpack.c.l.b16 %v1132
  %v2286 = vunpack.c.h.b16 %v1132
  %v2287 = vunpack.c.l.b16 %v1133
  %v2288 = vunpack.c.h.b16 %v1133
  %v2289 = vunpack.c.l.b16 %v1134
  %v2290 = vunpack.c.h.b16 %v1134
  %v2291 = vunpack.c.l.b16 %v1135
  %v2292 = vunpack.c.h.b16 %v1135
  %v2293 = vunpack.c.l.b16 %v1136
  %v2294 = vunpack.c.h.b16 %v1136
  %v2295 = vunpack.c.l.b16 %v1137
  %v2296 = vunpack.c.h.b16 %v1137
  %v2297 = vunpack.c.l.b16 %v1138
  %v2298 = vunpack.c.h.b16 %v1138
  %v2299 = vunpack.c.l.b16 %v1139
  %v2300 = vunpack.c.h.b16 %v1139
  %v2301 = vunpack.c.l.b16 %v1140
  %v2302 = vunpack.c.h.b16 %v1140
  %v2303 = vunpack.c.l.b16 %v1141
  %v2304 = vunpack.c.h.b16 %v1141
  %v2305 = vunpack.c.l.b16 %v1142
  %v2306 = vunpack.c.h.b16 %v1142
  %v2307 = vunpack.c.l.b16 %v1143
  %v2308 = vunpack.c.h.b16 %v1143
  %v2309 = vunpack.c.l.b16 %v1144
  %v2310 = vunpack.c.h.b16 %v1144
  %v2311 = vunpack.c.l.b16 %v1145
  %v2312 = vunpack.c.h.b16 %v1145
  %v2313 = vunpack.c.l.b16 %v1146
  %v2314 = vunpack.c.h.b16 %v1146
  %v2315 = vunpack.c.l.b16 %v1147
  %v2316 = vunpack.c.h.b16 %v1147
  %v2317 = vunpack.c.l.b16 %v1148
  %v2318 = vunpack.c.h.b16 %v1148
  %v2319 = vunpack.c.l.b16 %v1149
  %v2320 = vunpack.c.h.b16 %v1149
  %v2321 = vunpack.c.l.b16 %v1150
  %v2322 = vunpack.c.h.b16 %v1150
  %v2323 = vunpack.c.l.b16 %v1151
  %v2324 = vunpack.c.h.b16 %v1151
  %v2325 = vunpack.c.l.b16 %v1152
  %v2326 = vunpack.c.h.b16 %v1152
  %v2327 = vunpack.c.l.b16 %v1153
  %v2328 = vunpack.c.h.b16 %v1153
  %v2329 = vunpack.c.l.b16 %v1154
  %v2330 = vunpack.c.h.b16 %v1154
  %v2331 = vunpack.c.l.b16 %v1155
  %v2332 = vunpack.c.h.b16 %v1155
  %v2333 = vunpack.c.l.b16 %v1156
  %v2334 = vunpack.c.h.b16 %v1156
  %v2335 = vunpack.c.l.b16 %v1157
  %v2336 = vunpack.c.h.b16 %v1157
  %v2337 = vunpack.c.l.b16 %v1158
  %v2338 = vunpack.c.h.b16 %v1158
  %v2339 = vunpack.c.l.b16 %v1159
  %v2340 = vunpack.c.h.b16 %v1159
  %v2341 = vunpack.c.l.b16 %v1160
  %v2342 = vunpack.c.h.b16 %v1160
  %v2343 = vunpack.c.l.b16 %v1161
  %v2344 = vunpack.c.h.b16 %v1161
  %v2345 = vunpack.c.l.b16 %v1162
  %v2346 = vunpack.c.h.b16 %v1162
  %v2347 = vunpack.c.l.b16 %v1163
  %v2348 = vunpack.c.h.b16 %v1163
  %v2349 = vunpack.c.l.b16 %v1164
  %v2350 = vunpack.c.h.b16 %v1164
  %v2351 = vunpack.c.l.b16 %v1165
  %v2352 = vunpack.c.h.b16 %v1165
  %v2353 = vunpack.c.l.b16 %v1166
  %v2354 = vunpack.c.h.b16 %v1166
  %v2355 = vunpack.c.l.b16 %v1167
  %v2356 = vunpack.c.h.b16 %v1167
  %v2357 = vunpack.c.l.b16 %v1168
  %v2358 = vunpack.c.h.b16 %v1168
  %v2359 = vunpack.c.l.b16 %v1169
  %v2360 = vunpack.c.h.b16 %v1169
  %v2361 = vunpack.c.l.b16 %v1170
  %v2362 = vunpack.c.h.b16 %v1170
  %v2363 = vunpack.c.l.b16 %v1171
  %v2364 = vunpack.c.h.b16 %v1171
  %v2365 = vunpack.c.l.b16 %v1172
  %v2366 = vunpack.c.h.b16 %v1172
  %v2367 = vunpack.c.l.b16 %v1173
  %v2368 = vunpack.c.h.b16 %v1173
  %v2369 = vunpack.c.l.b16 %v1174
  %v2370 = vunpack.c.h.b16 %v1174
  %v2371 = vunpack.c.l.b16 %v1175
  %v2372 = vunpack.c.h.b16 %v1175
  %v2373 = vunpack.c.l.b16 %v1176
  %v2374 = vunpack.c.h.b16 %v1176
  %v2375 = vunpack.c.l.b16 %v1177
  %v2376 = vunpack.c.h.b16 %v1177
  %v2377 = vunpack.c.l.b16 %v1178
  %v2378 = vunpack.c.h.b16 %v1178
  %v2379 = vunpack.c.l.b16 %v1179
  %v2380 = vunpack.c.h.b16 %v1179
  %v2381 = vunpack.c.l.b16 %v1180
  %v2382 = vunpack.c.h.b16 %v1180
  %v2383 = vunpack.c.l.b16 %v1181
  %v2384 = vunpack.c.h.b16 %v1181
  %v2385 = vunpack.c.l.b16 %v1182
  %v2386 = vunpack.c.h.b16 %v1182
  %v2387 = vunpack.c.l.b16 %v1183
  %v2388 = vunpack.c.h.b16 %v1183
  %v2389 = vunpack.c.l.b16 %v1184
  %v2390 = vunpack.c.h.b16 %v1184
  %v2391 = vunpack.c.l.b16 %v1185
  %v2392 = vunpack.c.h.b16 %v1185
  %v2393 = vunpack.c.l.b16 %v1186
  %v2394 = vunpack.c.h.b16 %v1186
  %v2395 = vunpack.c.l.b16 %v1187
  %v2396 = vunpack.c.h.b16 %v1187
  %v2397 = vunpack.c.l.b16 %v1188
  %v2398 = vunpack.c.h.b16 %v1188
  %v2399 = vunpack.c.l.b16 %v1189
  %v2400 = vunpack.c.h.b16 %v1189
  %v2401 = vunpack.c.l.b16 %v1190
  %v2402 = vunpack.c.h.b16 %v1190
  %v2403 = vunpack.c.l.b16 %v1191
  %v2404 = vunpack.c.h.b16 %v1191
  %v2405 = vunpack.c.l.b16 %v1192
  %v2406 = vunpack.c.h.b16 %v1192
  %v2407 = vunpack.c.l.b16 %v1193
  %v2408 = vunpack.c.h.b16 %v1193
  %v2409 = vunpack.c.l.b16 %v1194
  %v2410 = vunpack.c.h.b16 %v1194
  %v2411 = vunpack.c.l.b16 %v1195
  %v2412 = vunpack.c.h.b16 %v1195
  %v2413 = vunpack.c.l.b16 %v1196
  %v2414 = vunpack.c.h.b16 %v1196
  %v2415 = vunpack.c.l.b16 %v1197
  %v2416 = vunpack.c.h.b16 %v1197
  %v2417 = vunpack.c.l.b16 %v1198
  %v2418 = vunpack.c.h.b16 %v1198
  %v2419 = vunpack.c.l.b16 %v1199
  %v2420 = vunpack.c.h.b16 %v1199
  %v2421 = vunpack.c.l.b16 %v1200
  %v2422 = vunpack.c.h.b16 %v1200
  %v2423 = vunpack.c.l.b16 %v1201
  %v2424 = vunpack.c.h.b16 %v1201
  %v2425 = vunpack.c.l.b16 %v1202
  %v2426 = vunpack.c.h.b16 %v1202
  %v2427 = vunpack.c.l.b16 %v1203
  %v2428 = vunpack.c.h.b16 %v1203
  %v2429 = vunpack.c.l.b16 %v1204
  %v2430 = vunpack.c.h.b16 %v1204
  %v2431 = vunpack.c.l.b16 %v1205
  %v2432 = vunpack.c.h.b16 %v1205
  %v2433 = vunpack.c.l.b16 %v1206
  %v2434 = vunpack.c.h.b16 %v1206
  %v2435 = vunpack.c.l.b16 %v1207
  %v2436 = vunpack.c.h.b16 %v1207
  %v2437 = vunpack.c.l.b16 %v1208
  %v2438 = vunpack.c.h.b16 %v1208
  %v2439 = vunpack.c.l.b16 %v1209
  %v2440 = vunpack.c.h.b16 %v1209
  %v2441 = vunpack.c.l.b16 %v1210
  %v2442 = vunpack.c.h.b16 %v1210
  %v2443 = vunpack.c.l.b16 %v1211
  %v2444 = vunpack.c.h.b16 %v1211
  %v2445 = vunpack.c.l.b16 %v1212
  %v2446 = vunpack.c.h.b16 %v1212
  %v2447 = vunpack.c.l.b16 %v1213
  %v2448 = vunpack.c.h.b16 %v1213
  %v2449 = vunpack.c.l.b16 %v1214
  %v2450 = vunpack.c.h.b16 %v1214
  %v2451 = vunpack.c.l.b16 %v1215
  %v2452 = vunpack.c.h.b16 %v1215
  %v2453 = vunpack.c.l.b16 %v1216
  %v2454 = vunpack.c.h.b16 %v1216
  %v2455 = vunpack.c.l.b16 %v1217
  %v2456 = vunpack.c.h.b16 %v1217
  %v2457 = vunpack.c.l.b16 %v1218
  %v2458 = vunpack.c.h.b16 %v1218
  %v2459 = vunpack.c.l.b16 %v1219
  %v2460 = vunpack.c.h.b16 %v1219
  %v2461 = vunpack.c.l.b16 %v1220
  %v2462 = vunpack.c.h.b16 %v1220
  %v2463 = vunpack.c.l.b16 %v1221
  %v2464 = vunpack.c.h.b16 %v1221
  %v2465 = vunpack.c.l.b16 %v1222
  %v2466 = vunpack.c.h.b16 %v1222
  %v2467 = vunpack.c.l.b16 %v1223
  %v2468 = vunpack.c.h.b16 %v1223
  %v2469 = vunpack.c.l.b16 %v1224
  %v2470 = vunpack.c.h.b16 %v1224
  %v2471 = vunpack.c.l.b16 %v1225
  %v2472 = vunpack.c.h.b16 %v1225
  %v2473 = vunpack.c.l.b16 %v1226
  %v2474 = vunpack.c.h.b16 %v1226
  %v2475 = vunpack.c.l.b16 %v1227
  %v2476 = vunpack.c.h.b16 %v1227
  %v2477 = vunpack.c.l.b16 %v1228
  %v2478 = vunpack.c.h.b16 %v1228
  %v2479 = vunpack.c.l.b16 %v1229
  %v2480 = vunpack.c.h.b16 %v1229
  %v2481 = vunpack.c.l.b16 %v1230
  %v2482 = vunpack.c.h.b16 %v1230
  %v2483 = vunpack.c.l.b16 %v1231
  %v2484 = vunpack.c.h.b16 %v1231
  %v2485 = vunpack.c.l.b16 %v1232
  %v2486 = vunpack.c.h.b16 %v1232
  %v2487 = vunpack.c.l.b16 %v1233
  %v2488 = vunpack.c.h.b16 %v1233
  %v2489 = vunpack.c.l.b16 %v1234
  %v2490 = vunpack.c.h.b16 %v1234
  %v2491 = vunpack.c.l.b16 %v1235
  %v2492 = vunpack.c.h.b16 %v1235
  %v2493 = vunpack.c.l.b16 %v1236
  %v2494 = vunpack.c.h.b16 %v1236
  %v2495 = vunpack.c.l.b16 %v1237
  %v2496 = vunpack.c.h.b16 %v1237
  %v2497 = vunpack.c.l.b16 %v1238
  %v2498 = vunpack.c.h.b16 %v1238
  %v2499 = vunpack.c.l.b16 %v1239
  %v2500 = vunpack.c.h.b16 %v1239
  %v2501 = vunpack.c.l.b16 %v1240
  %v2502 = vunpack.c.h.b16 %v1240
  %v2503 = vunpack.c.l.b16 %v1241
  %v2504 = vunpack.c.h.b16 %v1241
  %v2505 = vunpack.c.l.b16 %v1242
  %v2506 = vunpack.c.h.b16 %v1242
  %v2507 = vunpack.c.l.b16 %v1243
  %v2508 = vunpack.c.h.b16 %v1243
  %v2509 = vunpack.c.l.b16 %v1244
  %v2510 = vunpack.c.h.b16 %v1244
  %v2511 = vunpack.c.l.b16 %v1245
  %v2512 = vunpack.c.h.b16 %v1245
  %v2513 = vunpack.c.l.b16 %v1246
  %v2514 = vunpack.c.h.b16 %v1246
  %v2515 = vunpack.c.l.b16 %v1247
  %v2516 = vunpack.c.h.b16 %v1247
  %v2517 = vunpack.c.l.b16 %v1248
  %v2518 = vunpack.c.h.b16 %v1248
  %v2519 = vunpack.c.l.b16 %v1249
  %v2520 = vunpack.c.h.b16 %v1249
  %v2521 = vunpack.c.l.b16 %v1250
  %v2522 = vunpack.c.h.b16 %v1250
  %v2523 = vunpack.c.l.b16 %v1251
  %v2524 = vunpack.c.h.b16 %v1251
  %v2525 = vunpack.c.l.b16 %v1252
  %v2526 = vunpack.c.h.b16 %v1252
  %v2527 = vunpack.c.l.b16 %v1253
  %v2528 = vunpack.c.h.b16 %v1253
  %v2529 = vunpack.c.l.b16 %v1254
  %v2530 = vunpack.c.h.b16 %v1254
  %v2531 = vunpack.c.l.b16 %v1255
  %v2532 = vunpack.c.h.b16 %v1255
  %v2533 = vunpack.c.l.b16 %v1256
  %v2534 = vunpack.c.h.b16 %v1256
  %v2535 = vunpack.c.l.b16 %v1257
  %v2536 = vunpack.c.h.b16 %v1257
  %v2537 = vunpack.c.l.b16 %v1258
  %v2538 = vunpack.c.h.b16 %v1258
  %v2539 = vunpack.c.l.b16 %v1259
  %v2540 = vunpack.c.h.b16 %v1259
  %v2541 = vunpack.c.l.b16 %v1260
  %v2542 = vunpack.c.h.b16 %v1260
  %v2543 = vunpack.c.l.b16 %v1261
  %v2544 = vunpack.c.h.b16 %v1261
  %v2545 = vunpack.c.l.b16 %v1262
  %v2546 = vunpack.c.h.b16 %v1262
  %v2547 = vunpack.c.l.b16 %v1263
  %v2548 = vunpack.c.h.b16 %v1263
  %v2549 = vunpack.c.l.b16 %v1264
  %v2550 = vunpack.c.h.b16 %v1264
  %v2551 = vunpack.c.l.b16 %v1265
  %v2552 = vunpack.c.h.b16 %v1265
  %v2553 = vunpack.c.l.b16 %v1266
  %v2554 = vunpack.c.h.b16 %v1266
  %v2555 = vunpack.c.l.b16 %v1267
  %v2556 = vunpack.c.h.b16 %v1267
  %v2557 = vunpack.c.l.b16 %v1268
  %v2558 = vunpack.c.h.b16 %v1268
  %v2559 = vunpack.c.l.b16 %v1269
  %v2560 = vunpack.c.h.b16 %v1269
  %v2561 = vunpack.c.l.b16 %v1270
  %v2562 = vunpack.c.h.b16 %v1270
  %v2563 = vunpack.c.l.b16 %v1271
  %v2564 = vunpack.c.h.b16 %v1271
  %v2565 = vunpack.c.l.b16 %v1272
  %v2566 = vunpack.c.h.b16 %v1272
  %v2567 = vunpack.c.l.b16 %v1273
  %v2568 = vunpack.c.h.b16 %v1273
  %v2569 = vunpack.c.l.b16 %v1274
  %v2570 = vunpack.c.h.b16 %v1274
  %v2571 = vunpack.c.l.b16 %v1275
  %v2572 = vunpack.c.h.b16 %v1275
  %v2573 = vunpack.c.l.b16 %v1276
  %v2574 = vunpack.c.h.b16 %v1276
  %v2575 = vunpack.c.l.b16 %v1277
  %v2576 = vunpack.c.h.b16 %v1277
  %v2577 = vunpack.c.l.b16 %v1278
  %v2578 = vunpack.c.h.b16 %v1278
  %v2579 = vunpack.c.l.b16 %v1279
  %v2580 = vunpack.c.h.b16 %v1279
  %v2581 = vunpack.c.l.b16 %v1280
  %v2582 = vunpack.c.h.b16 %v1280
  %v2583 = vunpack.c.l.b16 %v1281
  %v2584 = vunpack.c.h.b16 %v1281
  %v2585 = vunpack.c.l.b16 %v1282
  %v2586 = vunpack.c.h.b16 %v1282
  %v2587 = vunpack.c.l.b16 %v1283
  %v2588 = vunpack.c.h.b16 %v1283
  %v2589 = vunpack.c.l.b16 %v1284
  %v2590 = vunpack.c.h.b16 %v1284
  %v2591 = vunpack.c.l.b16 %v1285
  %v2592 = vunpack.c.h.b16 %v1285
  %v2593 = vunpack.c.l.b16 %v1286
  %v2594 = vunpack.c.h.b16 %v1286
  %v2595 = vunpack.c.l.b16 %v1287
  %v2596 = vunpack.c.h.b16 %v1287
  %v2597 = vunpack.c.l.b16 %v1288
  %v2598 = vunpack.c.h.b16 %v1288
  %v2599 = vunpack.c.l.b16 %v1289
  %v2600 = vunpack.c.h.b16 %v1289
  %v2601 = vunpack.c.l.b16 %v1290
  %v2602 = vunpack.c.h.b16 %v1290
  %v2603 = vunpack.c.l.b16 %v1291
  %v2604 = vunpack.c.h.b16 %v1291
  %v2605 = vunpack.c.l.b16 %v1292
  %v2606 = vunpack.c.h.b16 %v1292
  %v2607 = vunpack.c.l.b16 %v1293
  %v2608 = vunpack.c.h.b16 %v1293
  %v2609 = vunpack.c.l.b16 %v1294
  %v2610 = vunpack.c.h.b16 %v1294
  %v2611 = vunpack.c.l.b16 %v1295
  %v2612 = vunpack.c.h.b16 %v1295
  %v2613 = vunpack.c.l.b16 %v1296
  %v2614 = vunpack.c.h.b16 %v1296
  %v2615 = vunpack.c.l.b16 %v1297
  %v2616 = vunpack.c.h.b16 %v1297
  %v2617 = vunpack.c.l.b16 %v1298
  %v2618 = vunpack.c.h.b16 %v1298
  %v2619 = vunpack.c.l.b16 %v1299
  %v2620 = vunpack.c.h.b16 %v1299
  %v2621 = vunpack.c.l.b16 %v1300
  %v2622 = vunpack.c.h.b16 %v1300
  %v2623 = vunpack.c.l.b16 %v1301
  %v2624 = vunpack.c.h.b16 %v1301
  %v2625 = vunpack.c.l.b16 %v1302
  %v2626 = vunpack.c.h.b16 %v1302
  %v2627 = vunpack.c.l.b16 %v1303
  %v2628 = vunpack.c.h.b16 %v1303
  %v2629 = vunpack.c.l.b16 %v1304
  %v2630 = vunpack.c.h.b16 %v1304
  %v2631 = vunpack.c.l.b16 %v1305
  %v2632 = vunpack.c.h.b16 %v1305
  %v2633 = vunpack.c.l.b16 %v1306
  %v2634 = vunpack.c.h.b16 %v1306
  %v2635 = vunpack.c.l.b16 %v1307
  %v2636 = vunpack.c.h.b16 %v1307
  %v2637 = vunpack.c.l.b16 %v1308
  %v2638 = vunpack.c.h.b16 %v1308
  %v2639 = vunpack.c.l.b16 %v1309
  %v2640 = vunpack.c.h.b16 %v1309
  %v2641 = vunpack.c.l.b16 %v1310
  %v2642 = vunpack.c.h.b16 %v1310
  %v2643 = vunpack.c.l.b16 %v1311
  %v2644 = vunpack.c.h.b16 %v1311
  %v2645 = vunpack.c.l.b16 %v1312
  %v2646 = vunpack.c.h.b16 %v1312
  %v2647 = vunpack.c.l.b16 %v1313
  %v2648 = vunpack.c.h.b16 %v1313
  %v2649 = vunpack.c.l.b16 %v1314
  %v2650 = vunpack.c.h.b16 %v1314
  %v2651 = vunpack.c.l.b16 %v1315
  %v2652 = vunpack.c.h.b16 %v1315
  %v2653 = vunpack.c.l.b16 %v1316
  %v2654 = vunpack.c.h.b16 %v1316
  %v2655 = vunpack.c.l.b16 %v1317
  %v2656 = vunpack.c.h.b16 %v1317
  %v2657 = vunpack.c.l.b16 %v1318
  %v2658 = vunpack.c.h.b16 %v1318
  %v2659 = vunpack.c.l.b16 %v1319
  %v2660 = vunpack.c.h.b16 %v1319
  %v2661 = vunpack.c.l.b16 %v1320
  %v2662 = vunpack.c.h.b16 %v1320
  %v2663 = vunpack.c.l.b16 %v1321
  %v2664 = vunpack.c.h.b16 %v1321
  %v2665 = vunpack.c.l.b16 %v1322
  %v2666 = vunpack.c.h.b16 %v1322
  %v2667 = vunpack.c.l.b16 %v1323
  %v2668 = vunpack.c.h.b16 %v1323
  %v2669 = vunpack.c.l.b16 %v1324
  %v2670 = vunpack.c.h.b16 %v1324
  %v2671 = vunpack.c.l.b16 %v1325
  %v2672 = vunpack.c.h.b16 %v1325
  %v2673 = vunpack.c.l.b16 %v1326
  %v2674 = vunpack.c.h.b16 %v1326
  %v2675 = vunpack.c.l.b16 %v1327
  %v2676 = vunpack.c.h.b16 %v1327
  %v2677 = vunpack.c.l.b16 %v1328
  %v2678 = vunpack.c.h.b16 %v1328
  %v2679 = vunpack.c.l.b16 %v1329
  %v2680 = vunpack.c.h.b16 %v1329
  %v2681 = vunpack.c.l.b16 %v1330
  %v2682 = vunpack.c.h.b16 %v1330
  %v2683 = vunpack.c.l.b16 %v1331
  %v2684 = vunpack.c.h.b16 %v1331
  %v2685 = vunpack.c.l.b16 %v1332
  %v2686 = vunpack.c.h.b16 %v1332
  %v2687 = vunpack.c.l.b16 %v1333
  %v2688 = vunpack.c.h.b16 %v1333
  %v2689 = vunpack.c.l.b16 %v1334
  %v2690 = vunpack.c.h.b16 %v1334
  %v2691 = vunpack.c.l.b16 %v1335
  %v2692 = vunpack.c.h.b16 %v1335
  %v2693 = vunpack.c.l.b16 %v1336
  %v2694 = vunpack.c.h.b16 %v1336
  %v2695 = vunpack.c.l.b16 %v1337
  %v2696 = vunpack.c.h.b16 %v1337
  %v2697 = vunpack.c.l.b16 %v1338
  %v2698 = vunpack.c.h.b16 %v1338
  %v2699 = vunpack.c.l.b16 %v1339
  %v2700 = vunpack.c.h.b16 %v1339
  %v2701 = vunpack.c.l.b16 %v1340
  %v2702 = vunpack.c.h.b16 %v1340
  %v2703 = vunpack.c.l.b16 %v1341
  %v2704 = vunpack.c.h.b16 %v1341
  %v2705 = vunpack.c.l.b16 %v1342
  %v2706 = vunpack.c.h.b16 %v1342
  %v2707 = vunpack.c.l.b16 %v1343
  %v2708 = vunpack.c.h.b16 %v1343
  %v2709 = vunpack.c.l.b16 %v1344
  %v2710 = vunpack.c.h.b16 %v1344
  %v2711 = vunpack.c.l.b16 %v1345
  %v2712 = vunpack.c.h.b16 %v1345
  %v2713 = vunpack.c.l.b16 %v1346
  %v2714 = vunpack.c.h.b16 %v1346
  %v2715 = vunpack.c.l.b16 %v1347
  %v2716 = vunpack.c.h.b16 %v1347
  %v2717 = vunpack.c.l.b16 %v1348
  %v2718 = vunpack.c.h.b16 %v1348
  %v2719 = vunpack.c.l.b16 %v1349
  %v2720 = vunpack.c.h.b16 %v1349
  %v2721 = vunpack.c.l.b16 %v1350
  %v2722 = vunpack.c.h.b16 %v1350
  %v2723 = vunpack.c.l.b16 %v1351
  %v2724 = vunpack.c.h.b16 %v1351
  %v2725 = vunpack.c.l.b16 %v1352
  %v2726 = vunpack.c.h.b16 %v1352
  %v2727 = vunpack.c.l.b16 %v1353
  %v2728 = vunpack.c.h.b16 %v1353
  %v2729 = vunpack.c.l.b16 %v1354
  %v2730 = vunpack.c.h.b16 %v1354
  %v2731 = vunpack.c.l.b16 %v1355
  %v2732 = vunpack.c.h.b16 %v1355
  %v2733 = vunpack.c.l.b16 %v1356
  %v2734 = vunpack.c.h.b16 %v1356
  %v2735 = vunpack.c.l.b16 %v1357
  %v2736 = vunpack.c.h.b16 %v1357
  %v2737 = vunpack.c.l.b16 %v1358
  %v2738 = vunpack.c.h.b16 %v1358
  %v2739 = vunpack.c.l.b16 %v1359
  %v2740 = vunpack.c.h.b16 %v1359
  %v2741 = vunpack.c.l.b16 %v1360
  %v2742 = vunpack.c.h.b16 %v1360
  %v2743 = vunpack.c.l.b16 %v1361
  %v2744 = vunpack.c.h.b16 %v1361
  %v2745 = vunpack.c.l.b16 %v1362
  %v2746 = vunpack.c.h.b16 %v1362
  %v2747 = vunpack.c.l.b16 %v1363
  %v2748 = vunpack.c.h.b16 %v1363
  %v2749 = vunpack.c.l.b16 %v1364
  %v2750 = vunpack.c.h.b16 %v1364
  %v2751 = vunpack.c.l.b16 %v1365
  %v2752 = vunpack.c.h.b16 %v1365
  %v2753 = vunpack.c.l.b16 %v1366
  %v2754 = vunpack.c.h.b16 %v1366
  %v2755 = vunpack.c.l.b16 %v1367
  %v2756 = vunpack.c.h.b16 %v1367
  %v2757 = vunpack.c.l.b16 %v1368
  %v2758 = vunpack.c.h.b16 %v1368
  %v2759 = vunpack.c.l.b16 %v1369
  %v2760 = vunpack.c.h.b16 %v1369
  %v2761 = vunpack.c.l.b16 %v1370
  %v2762 = vunpack.c.h.b16 %v1370
  %v2763 = vunpack.c.l.b16 %v1371
  %v2764 = vunpack.c.h.b16 %v1371
  %v2765 = vunpack.c.l.b16 %v1372
  %v2766 = vunpack.c.h.b16 %v1372
  %v2767 = vunpack.c.l.b16 %v1373
  %v2768 = vunpack.c.h.b16 %v1373
  %v2769 = vunpack.c.l.b16 %v1374
  %v2770 = vunpack.c.h.b16 %v1374
  %v2771 = vunpack.c.l.b16 %v1375
  %v2772 = vunpack.c.h.b16 %v1375
  %v2773 = vunpack.c.l.b16 %v1376
  %v2774 = vunpack.c.h.b16 %v1376
  %v2775 = vunpack.c.l.b16 %v1377
  %v2776 = vunpack.c.h.b16 %v1377
  %v2777 = vunpack.c.l.b16 %v1378
  %v2778 = vunpack.c.h.b16 %v1378
  %v2779 = vunpack.c.l.b16 %v1379
  %v2780 = vunpack.c.h.b16 %v1379
  %v2781 = vunpack.c.l.b16 %v1380
  %v2782 = vunpack.c.h.b16 %v1380
  %v2783 = vunpack.c.l.b16 %v1381
  %v2784 = vunpack.c.h.b16 %v1381
  %v2785 = vunpack.c.l.b16 %v1382
  %v2786 = vunpack.c.h.b16 %v1382
  %v2787 = vunpack.c.l.b16 %v1383
  %v2788 = vunpack.c.h.b16 %v1383
  %v2789 = vunpack.c.l.b16 %v1384
  %v2790 = vunpack.c.h.b16 %v1384
  %v2791 = vunpack.c.l.b16 %v1385
  %v2792 = vunpack.c.h.b16 %v1385
  %v2793 = vunpack.c.l.b16 %v1386
  %v2794 = vunpack.c.h.b16 %v1386
  %v2795 = vunpack.c.l.b16 %v1387
  %v2796 = vunpack.c.h.b16 %v1387
  %v2797 = vunpack.c.l.b16 %v1388
  %v2798 = vunpack.c.h.b16 %v1388
  %v2799 = vunpack.c.l.b16 %v1389
  %v2800 = vunpack.c.h.b16 %v1389
  %v2801 = vunpack.c.l.b16 %v1390
  %v2802 = vunpack.c.h.b16 %v1390
  %v2803 = vunpack.c.l.b16 %v1391
  %v2804 = vunpack.c.h.b16 %v1391
  %v2805 = vunpack.c.l.b16 %v1392
  %v2806 = vunpack.c.h.b16 %v1392
  %v2807 = vunpack.c.l.b16 %v1393
  %v2808 = vunpack.c.h.b16 %v1393
  %v2809 = vunpack.c.l.b16 %v1394
  %v2810 = vunpack.c.h.b16 %v1394
  %v2811 = vunpack.c.l.b16 %v1395
  %v2812 = vunpack.c.h.b16 %v1395
  %v2813 = vunpack.c.l.b16 %v1396
  %v2814 = vunpack.c.h.b16 %v1396
  %v2815 = vunpack.c.l.b16 %v1397
  %v2816 = vunpack.c.h.b16 %v1397
  %v2817 = vunpack.c.l.b16 %v1398
  %v2818 = vunpack.c.h.b16 %v1398
  %v2819 = vunpack.c.l.b16 %v1399
  %v2820 = vunpack.c.h.b16 %v1399
  %v2821 = vunpack.c.l.b16 %v1400
  %v2822 = vunpack.c.h.b16 %v1400
  %v2823 = vunpack.c.l.b16 %v1401
  %v2824 = vunpack.c.h.b16 %v1401
  %v2825 = vunpack.c.l.b16 %v1402
  %v2826 = vunpack.c.h.b16 %v1402
  %v2827 = vunpack.c.l.b16 %v1403
  %v2828 = vunpack.c.h.b16 %v1403
  %v2829 = vunpack.c.l.b16 %v1404
  %v2830 = vunpack.c.h.b16 %v1404
  %v2831 = vunpack.c.l.b16 %v1405
  %v2832 = vunpack.c.h.b16 %v1405
  %v2833 = vunpack.c.l.b16 %v1406
  %v2834 = vunpack.c.h.b16 %v1406
  %v2835 = vunpack.c.l.b16 %v1407
  %v2836 = vunpack.c.h.b16 %v1407
  %v2837 = vunpack.c.l.b16 %v1408
  %v2838 = vunpack.c.h.b16 %v1408
  %v2839 = vunpack.c.l.b16 %v1409
  %v2840 = vunpack.c.h.b16 %v1409
  %v2841 = vunpack.c.l.b16 %v1410
  %v2842 = vunpack.c.h.b16 %v1410
  %v2843 = vunpack.c.l.b16 %v1411
  %v2844 = vunpack.c.h.b16 %v1411
  %v2845 = vunpack.c.l.b16 %v1412
  %v2846 = vunpack.c.h.b16 %v1412
  %v2847 = vunpack.c.l.b16 %v1413
  %v2848 = vunpack.c.h.b16 %v1413
  %v2849 = vunpack.c.l.b16 %v1414
  %v2850 = vunpack.c.h.b16 %v1414
  %v2851 = vunpack.c.l.b16 %v1415
  %v2852 = vunpack.c.h.b16 %v1415
  %v2853 = vunpack.c.l.b16 %v1416
  %v2854 = vunpack.c.h.b16 %v1416
  %v2855 = vunpack.c.l.b16 %v1417
  %v2856 = vunpack.c.h.b16 %v1417
  %v2857 = vunpack.c.l.b16 %v1418
  %v2858 = vunpack.c.h.b16 %v1418
  %v2859 = vunpack.c.l.b16 %v1419
  %v2860 = vunpack.c.h.b16 %v1419
  %v2861 = vunpack.c.l.b16 %v1420
  %v2862 = vunpack.c.h.b16 %v1420
  %v2863 = vunpack.c.l.b16 %v1421
  %v2864 = vunpack.c.h.b16 %v1421
  %v2865 = vunpack.c.l.b16 %v1422
  %v2866 = vunpack.c.h.b16 %v1422
  %v2867 = vunpack.c.l.b16 %v1423
  %v2868 = vunpack.c.h.b16 %v1423
  %v2869 = vunpack.c.l.b16 %v1424
  %v2870 = vunpack.c.h.b16 %v1424
  %v2871 = vunpack.c.l.b16 %v1425
  %v2872 = vunpack.c.h.b16 %v1425
  %v2873 = vunpack.c.l.b16 %v1426
  %v2874 = vunpack.c.h.b16 %v1426
  %v2875 = vunpack.c.l.b16 %v1427
  %v2876 = vunpack.c.h.b16 %v1427
  %v2877 = vunpack.c.l.b16 %v1428
  %v2878 = vunpack.c.h.b16 %v1428
  %v2879 = vunpack.c.l.b16 %v1429
  %v2880 = vunpack.c.h.b16 %v1429
  %v2881 = vunpack.c.l.b16 %v1430
  %v2882 = vunpack.c.h.b16 %v1430
  %v2883 = vunpack.c.l.b16 %v1431
  %v2884 = vunpack.c.h.b16 %v1431
  %v2885 = vunpack.c.l.b16 %v1432
  %v2886 = vunpack.c.h.b16 %v1432
  %v2887 = vunpack.c.l.b16 %v1433
  %v2888 = vunpack.c.h.b16 %v1433
  %v2889 = vunpack.c.l.b16 %v1434
  %v2890 = vunpack.c.h.b16 %v1434
  %v2891 = vunpack.c.l.b16 %v1435
  %v2892 = vunpack.c.h.b16 %v1435
  %v2893 = vunpack.c.l.b16 %v1436
  %v2894 = vunpack.c.h.b16 %v1436
  %v2895 = vunpack.c.l.b16 %v1437
  %v2896 = vunpack.c.h.b16 %v1437
  %v2897 = vunpack.c.l.b16 %v1438
  %v2898 = vunpack.c.h.b16 %v1438
  %v2899 = vunpack.c.l.b16 %v1439
  %v2900 = vunpack.c.h.b16 %v1439
  %v2901 = vunpack.c.l.b16 %v1440
  %v2902 = vunpack.c.h.b16 %v1440
  %v2903 = vunpack.c.l.b16 %v1441
  %v2904 = vunpack.c.h.b16 %v1441
  %v2905 = vunpack.c.l.b16 %v1442
  %v2906 = vunpack.c.h.b16 %v1442
  %v2907 = vunpack.c.l.b16 %v1443
  %v2908 = vunpack.c.h.b16 %v1443
  %v2909 = vunpack.c.l.b16 %v1444
  %v2910 = vunpack.c.h.b16 %v1444
  %v2911 = vunpack.c.l.b16 %v1445
  %v2912 = vunpack.c.h.b16 %v1445
  %v2913 = vunpack.c.l.b16 %v1446
  %v2914 = vunpack.c.h.b16 %v1446
  %v2915 = vunpack.c.l.b16 %v1447
  %v2916 = vunpack.c.h.b16 %v1447
  %v2917 = vunpack.c.l.b16 %v1448
  %v2918 = vunpack.c.h.b16 %v1448
  %v2919 = vunpack.c.l.b16 %v1449
  %v2920 = vunpack.c.h.b16 %v1449
  %v2921 = vunpack.c.l.b16 %v1450
  %v2922 = vunpack.c.h.b16 %v1450
  %v2923 = vunpack.c.l.b16 %v1451
  %v2924 = vunpack.c.h.b16 %v1451
  %v2925 = vunpack.c.l.b16 %v1452
  %v2926 = vunpack.c.h.b16 %v1452
  %v2927 = vunpack.c.l.b16 %v1453
  %v2928 = vunpack.c.h.b16 %v1453
  %v2929 = vunpack.c.l.b16 %v1454
  %v2930 = vunpack.c.h.b16 %v1454
  %v2931 = vunpack.c.l.b16 %v1455
  %v2932 = vunpack.c.h.b16 %v1455
  %v2933 = vunpack.c.l.b16 %v1456
  %v2934 = vunpack.c.h.b16 %v1456
  %v2935 = vunpack.c.l.b16 %v1457
  %v2936 = vunpack.c.h.b16 %v1457
  %v2937 = vunpack.c.l.b16 %v1458
  %v2938 = vunpack.c.h.b16 %v1458
  %v2939 = vunpack.c.l.b16 %v1459
  %v2940 = vunpack.c.h.b16 %v1459
  %v2941 = vunpack.c.l.b16 %v1460
  %v2942 = vunpack.c.h.b16 %v1460
  %v2943 = vunpack.c.l.b16 %v1461
  %v2944 = vunpack.c.h.b16 %v1461
  %v2945 = vunpack.c.l.b16 %v1462
  %v2946 = vunpack.c.h.b16 %v1462
  %v2947 = vunpack.c.l.b16 %v1463
  %v2948 = vunpack.c.h.b16 %v1463
  %v2949 = vunpack.c.l.b16 %v1464
  %v2950 = vunpack.c.h.b16 %v1464
  %v2951 = vunpack.c.l.b16 %v1465
  %v2952 = vunpack.c.h.b16 %v1465
  %v2953 = vunpack.c.l.b16 %v1466
  %v2954 = vunpack.c.h.b16 %v1466
  %v2955 = vunpack.c.l.b16 %v1467
  %v2956 = vunpack.c.h.b16 %v1467
  %v2957 = vunpack.c.l.b16 %v1468
  %v2958 = vunpack.c.h.b16 %v1468
  %v2959 = vunpack.c.l.b16 %v1469
  %v2960 = vunpack.c.h.b16 %v1469
  %v2961 = vunpack.c.l.b16 %v1470
  %v2962 = vunpack.c.h.b16 %v1470
  %v2963 = vunpack.c.l.b16 %v1471
  %v2964 = vunpack.c.h.b16 %v1471
  %v2965 = vunpack.c.l.b16 %v1472
  %v2966 = vunpack.c.h.b16 %v1472
  %v2967 = vunpack.c.l.b16 %v1473
  %v2968 = vunpack.c.h.b16 %v1473
  %v2969 = vunpack.c.l.b16 %v1474
  %v2970 = vunpack.c.h.b16 %v1474
  %v2971 = vunpack.c.l.b16 %v1475
  %v2972 = vunpack.c.h.b16 %v1475
  %v2973 = vunpack.c.l.b16 %v1476
  %v2974 = vunpack.c.h.b16 %v1476
  %v2975 = vunpack.c.l.b16 %v1477
  %v2976 = vunpack.c.h.b16 %v1477
  %v2977 = vunpack.c.l.b16 %v1478
  %v2978 = vunpack.c.h.b16 %v1478
  %v2979 = vunpack.c.l.b16 %v1479
  %v2980 = vunpack.c.h.b16 %v1479
  %v2981 = vunpack.c.l.b16 %v1480
  %v2982 = vunpack.c.h.b16 %v1480
  %v2983 = vunpack.c.l.b16 %v1481
  %v2984 = vunpack.c.h.b16 %v1481
  %v2985 = vunpack.c.l.b16 %v1482
  %v2986 = vunpack.c.h.b16 %v1482
  %v2987 = vunpack.c.l.b16 %v1483
  %v2988 = vunpack.c.h.b16 %v1483
  %v2989 = vunpack.c.l.b16 %v1484
  %v2990 = vunpack.c.h.b16 %v1484
  %v2991 = vunpack.c.l.b16 %v1485
  %v2992 = vunpack.c.h.b16 %v1485
  %v2993 = vunpack.c.l.b16 %v1486
  %v2994 = vunpack.c.h.b16 %v1486
  %v2995 = vunpack.c.l.b16 %v1487
  %v2996 = vunpack.c.h.b16 %v1487
  %v2997 = vunpack.c.l.b16 %v1488
  %v2998 = vunpack.c.h.b16 %v1488
  %v2999 = vunpack.c.l.b16 %v1489
  %v3000 = vunpack.c.h.b16 %v1489
  %v3001 = vunpack.c.l.b16 %v1490
  %v3002 = vunpack.c.h.b16 %v1490
  %v3003 = vunpack.c.l.b16 %v1491
  %v3004 = vunpack.c.h.b16 %v1491
  %v3005 = vunpack.c.l.b16 %v1492
  %v3006 = vunpack.c.h.b16 %v1492
  %v3007 = vunpack.c.l.b16 %v1493
  %v3008 = vunpack.c.h.b16 %v1493
  %v3009 = vunpack.c.l.b16 %v1494
  %v3010 = vunpack.c.h.b16 %v1494
  %v3011 = vunpack.c.l.b16 %v1495
  %v3012 = vunpack.c.h.b16 %v1495
  %v3013 = vunpack.c.l.b16 %v1496
  %v3014 = vunpack.c.h.b16 %v1496
  %v3015 = vunpack.c.l.b16 %v1497
  %v3016 = vunpack.c.h.b16 %v1497
  %v3017 = vunpack.c.l.b16 %v1498
  %v3018 = vunpack.c.h.b16 %v1498
  %v3019 = vunpack.c.l.b16 %v1499
  %v3020 = vunpack.c.h.b16 %v1499
  %v3021 = vunpack.c.l.b16 %v1500
  %v3022 = vunpack.c.h.b16 %v1500
  %v3023 = vunpack.c.l.b16 %v1501
  %v3024 = vunpack.c.h.b16 %v1501
  %v3025 = vunpack.c.l.b16 %v1502
  %v3026 = vunpack.c.h.b16 %v1502
  %v3027 = vunpack.c.l.b16 %v1503
  %v3028 = vunpack.c.h.b16 %v1503
  %v3029 = vunpack.c.l.b16 %v1504
  %v3030 = vunpack.c.h.b16 %v1504
  %v3031 = vunpack.c.l.b16 %v1505
  %v3032 = vunpack.c.h.b16 %v1505
  %v3033 = vunpack.c.l.b16 %v1506
  %v3034 = vunpack.c.h.b16 %v1506
  %v3035 = vunpack.c.l.b16 %v1507
  %v3036 = vunpack.c.h.b16 %v1507
  %v3037 = vunpack.c.l.b16 %v1508
  %v3038 = vunpack.c.h.b16 %v1508
  %v3039 = vunpack.c.l.b16 %v1509
  %v3040 = vunpack.c.h.b16 %v1509
  %v3041 = vunpack.c.l.b16 %v1510
  %v3042 = vunpack.c.h.b16 %v1510
  %v3043 = vunpack.c.l.b16 %v1511
  %v3044 = vunpack.c.h.b16 %v1511
  %v3045 = vunpack.c.l.b16 %v1512
  %v3046 = vunpack.c.h.b16 %v1512
  %v3047 = vunpack.c.l.b16 %v1513
  %v3048 = vunpack.c.h.b16 %v1513
  %v3049 = vunpack.c.l.b16 %v1514
  %v3050 = vunpack.c.h.b16 %v1514
  %v3051 = vunpack.c.l.b16 %v1515
  %v3052 = vunpack.c.h.b16 %v1515
  %v3053 = vunpack.c.l.b16 %v1516
  %v3054 = vunpack.c.h.b16 %v1516
  %v3055 = vunpack.c.l.b16 %v1517
  %v3056 = vunpack.c.h.b16 %v1517
  %v3057 = vunpack.c.l.b16 %v1518
  %v3058 = vunpack.c.h.b16 %v1518
  %v3059 = vunpack.c.l.b16 %v1519
  %v3060 = vunpack.c.h.b16 %v1519
  %v3061 = vunpack.c.l.b16 %v1520
  %v3062 = vunpack.c.h.b16 %v1520
  %v3063 = vunpack.c.l.b16 %v1521
  %v3064 = vunpack.c.h.b16 %v1521
  %v3065 = vunpack.c.l.b16 %v1522
  %v3066 = vunpack.c.h.b16 %v1522
  %v3067 = vunpack.c.l.b16 %v1523
  %v3068 = vunpack.c.h.b16 %v1523
  %v3069 = vunpack.c.l.b16 %v1524
  %v3070 = vunpack.c.h.b16 %v1524
  %v3071 = vunpack.c.l.b16 %v1525
  %v3072 = vunpack.c.h.b16 %v1525
  %v3073 = vunpack.c.l.b16 %v1526
  %v3074 = vunpack.c.h.b16 %v1526
  %v3075 = vunpack.c.l.b16 %v1527
  %v3076 = vunpack.c.h.b16 %v1527
  %v3077 = vunpack.c.l.b16 %v1528
  %v3078 = vunpack.c.h.b16 %v1528
  %v3079 = vunpack.c.l.b16 %v1529
  %v3080 = vunpack.c.h.b16 %v1529
  %v3081 = vunpack.c.l.b16 %v1530
  %v3082 = vunpack.c.h.b16 %v1530
  %v3083 = vunpack.c.l.b16 %v1531
  %v3084 = vunpack.c.h.b16 %v1531
  %v3085 = vunpack.c.l.b16 %v1532
  %v3086 = vunpack.c.h.b16 %v1532
  %v3087 = vunpack.c.l.b16 %v1533
  %v3088 = vunpack.c.h.b16 %v1533
  %v3089 = vunpack.c.l.b16 %v1534
  %v3090 = vunpack.c.h.b16 %v1534
  %v3091 = vunpack.c.l.b16 %v1535
  %v3092 = vunpack.c.h.b16 %v1535
  %v3093 = vunpack.c.l.b16 %v1536
  %v3094 = vunpack.c.h.b16 %v1536
  %v3095 = vunpack.c.l.b16 %v1537
  %v3096 = vunpack.c.h.b16 %v1537
  %v3097 = vunpack.c.l.b16 %v1538
  %v3098 = vunpack.c.h.b16 %v1538
  %v3099 = vunpack.c.l.b16 %v1539
  %v3100 = vunpack.c.h.b16 %v1539
  %v3101 = vunpack.c.l.b16 %v1540
  %v3102 = vunpack.c.h.b16 %v1540
  %v3103 = vunpack.c.l.b16 %v1541
  %v3104 = vunpack.c.h.b16 %v1541
  %v3105 = vunpack.c.l.b16 %v1542
  %v3106 = vunpack.c.h.b16 %v1542
  %v3107 = vunpack.c.l.b16 %v1543
  %v3108 = vunpack.c.h.b16 %v1543
  %v3109 = vunpack.c.l.b16 %v1544
  %v3110 = vunpack.c.h.b16 %v1544
  %v3111 = vunpack.c.l.b16 %v1545
  %v3112 = vunpack.c.h.b16 %v1545
  %v3113 = vunpack.c.l.b16 %v1546
  %v3114 = vunpack.c.h.b16 %v1546
  %v3115 = vunpack.c.l.b16 %v1547
  %v3116 = vunpack.c.h.b16 %v1547
  %v3117 = vunpack.c.l.b16 %v1548
  %v3118 = vunpack.c.h.b16 %v1548
  %v3119 = vunpack.c.l.b16 %v1549
  %v3120 = vunpack.c.h.b16 %v1549
  %v3121 = vunpack.c.l.b16 %v1550
  %v3122 = vunpack.c.h.b16 %v1550
  %v3123 = vunpack.c.l.b16 %v1551
  %v3124 = vunpack.c.h.b16 %v1551
  %v3125 = vunpack.c.l.b16 %v1552
  %v3126 = vunpack.c.h.b16 %v1552
  %v3127 = vunpack.c.l.b16 %v1553
  %v3128 = vunpack.c.h.b16 %v1553
  %v3129 = vunpack.c.l.b16 %v1554
  %v3130 = vunpack.c.h.b16 %v1554
  %v3131 = vunpack.c.l.b16 %v1555
  %v3132 = vunpack.c.h.b16 %v1555
  %v3133 = vunpack.c.l.b16 %v1556
  %v3134 = vunpack.c.h.b16 %v1556
  %v3135 = vpack.c.b16 %v2119, %v2111
  %v3136 = vpack.c.b16 %v2120, %v2112
  %v3137 = vpack.c.b16 %v2121, %v2113
  %v3138 = vpack.c.b16 %v2122, %v2114
  %v3139 = vpack.c.b16 %v2123, %v2115
  %v3140 = vpack.c.b16 %v2124, %v2116
  %v3141 = vpack.c.b16 %v2125, %v2117
  %v3142 = vpack.c.b16 %v2126, %v2118
  %v3143 = vpack.c.b16 %v2135, %v2127
  %v3144 = vpack.c.b16 %v2136, %v2128
  %v3145 = vpack.c.b16 %v2137, %v2129
  %v3146 = vpack.c.b16 %v2138, %v2130
  %v3147 = vpack.c.b16 %v2139, %v2131
  %v3148 = vpack.c.b16 %v2140, %v2132
  %v3149 = vpack.c.b16 %v2141, %v2133
  %v3150 = vpack.c.b16 %v2142, %v2134
  %v3151 = vpack.c.b16 %v2151, %v2143
  %v3152 = vpack.c.b16 %v2152, %v2144
  %v3153 = vpack.c.b16 %v2153, %v2145
  %v3154 = vpack.c.b16 %v2154, %v2146
  %v3155 = vpack.c.b16 %v2155, %v2147
  %v3156 = vpack.c.b16 %v2156, %v2148
  %v3157 = vpack.c.b16 %v2157, %v2149
  %v3158 = vpack.c.b16 %v2158, %v2150
  %v3159 = vpack.c.b16 %v2167, %v2159
  %v3160 = vpack.c.b16 %v2168, %v2160
  %v3161 = vpack.c.b16 %v2169, %v2161
  %v3162 = vpack.c.b16 %v2170, %v2162
  %v3163 = vpack.c.b16 %v2171, %v2163
  %v3164 = vpack.c.b16 %v2172, %v2164
  %v3165 = vpack.c.b16 %v2173, %v2165
  %v3166 = vpack.c.b16 %v2174, %v2166
  %v3167 = vpack.c.b16 %v2183, %v2175
  %v3168 = vpack.c.b16 %v2184, %v2176
  %v3169 = vpack.c.b16 %v2185, %v2177
  %v3170 = vpack.c.b16 %v2186, %v2178
  %v3171 = vpack.c.b16 %v2187, %v2179
  %v3172 = vpack.c.b16 %v2188, %v2180
  %v3173 = vpack.c.b16 %v2189, %v2181
  %v3174 = vpack.c.b16 %v2190, %v2182
  %v3175 = vpack.c.b16 %v2199, %v2191
  %v3176 = vpack.c.b16 %v2200, %v2192
  %v3177 = vpack.c.b16 %v2201, %v2193
  %v3178 = vpack.c.b16 %v2202, %v2194
  %v3179 = vpack.c.b16 %v2203, %v2195
  %v3180 = vpack.c.b16 %v2204, %v2196
  %v3181 = vpack.c.b16 %v2205, %v2197
  %v3182 = vpack.c.b16 %v2206, %v2198
  %v3183 = vpack.c.b16 %v2215, %v2207
  %v3184 = vpack.c.b16 %v2216, %v2208
  %v3185 = vpack.c.b16 %v2217, %v2209
  %v3186 = vpack.c.b16 %v2218, %v2210
  %v3187 = vpack.c.b16 %v2219, %v2211
  %v3188 = vpack.c.b16 %v2220, %v2212
  %v3189 = vpack.c.b16 %v2221, %v2213
  %v3190 = vpack.c.b16 %v2222, %v2214
  %v3191 = vpack.c.b16 %v2231, %v2223
  %v3192 = vpack.c.b16 %v2232, %v2224
  %v3193 = vpack.c.b16 %v2233, %v2225
  %v3194 = vpack.c.b16 %v2234, %v2226
  %v3195 = vpack.c.b16 %v2235, %v2227
  %v3196 = vpack.c.b16 %v2236, %v2228
  %v3197 = vpack.c.b16 %v2237, %v2229
  %v3198 = vpack.c.b16 %v2238, %v2230
  %v3199 = vpack.c.b16 %v2247, %v2239
  %v3200 = vpack.c.b16 %v2248, %v2240
  %v3201 = vpack.c.b16 %v2249, %v2241
  %v3202 = vpack.c.b16 %v2250, %v2242
  %v3203 = vpack.c.b16 %v2251, %v2243
  %v3204 = vpack.c.b16 %v2252, %v2244
  %v3205 = vpack.c.b16 %v2253, %v2245
  %v3206 = vpack.c.b16 %v2254, %v2246
  %v3207 = vpack.c.b16 %v2263, %v2255
  %v3208 = vpack.c.b16 %v2264, %v2256
  %v3209 = vpack.c.b16 %v2265, %v2257
  %v3210 = vpack.c.b16 %v2266, %v2258
  %v3211 = vpack.c.b16 %v2267, %v2259
  %v3212 = vpack.c.b16 %v2268, %v2260
  %v3213 = vpack.c.b16 %v2269, %v2261
  %v3214 = vpack.c.b16 %v2270, %v2262
  %v3215 = vpack.c.b16 %v2279, %v2271
  %v3216 = vpack.c.b16 %v2280, %v2272
  %v3217 = vpack.c.b16 %v2281, %v2273
  %v3218 = vpack.c.b16 %v2282, %v2274
  %v3219 = vpack.c.b16 %v2283, %v2275
  %v3220 = vpack.c.b16 %v2284, %v2276
  %v3221 = vpack.c.b16 %v2285, %v2277
  %v3222 = vpack.c.b16 %v2286, %v2278
  %v3223 = vpack.c.b16 %v2295, %v2287
  %v3224 = vpack.c.b16 %v2296, %v2288
  %v3225 = vpack.c.b16 %v2297, %v2289
  %v3226 = vpack.c.b16 %v2298, %v2290
  %v3227 = vpack.c.b16 %v2299, %v2291
  %v3228 = vpack.c.b16 %v2300, %v2292
  %v3229 = vpack.c.b16 %v2301, %v2293
  %v3230 = vpack.c.b16 %v2302, %v2294
  %v3231 = vpack.c.b16 %v2311, %v2303
  %v3232 = vpack.c.b16 %v2312, %v2304
  %v3233 = vpack.c.b16 %v2313, %v2305
  %v3234 = vpack.c.b16 %v2314, %v2306
  %v3235 = vpack.c.b16 %v2315, %v2307
  %v3236 = vpack.c.b16 %v2316, %v2308
  %v3237 = vpack.c.b16 %v2317, %v2309
  %v3238 = vpack.c.b16 %v2318, %v2310
  %v3239 = vpack.c.b16 %v2327, %v2319
  %v3240 = vpack.c.b16 %v2328, %v2320
  %v3241 = vpack.c.b16 %v2329, %v2321
  %v3242 = vpack.c.b16 %v2330, %v2322
  %v3243 = vpack.c.b16 %v2331, %v2323
  %v3244 = vpack.c.b16 %v2332, %v2324
  %v3245 = vpack.c.b16 %v2333, %v2325
  %v3246 = vpack.c.b16 %v2334, %v2326
  %v3247 = vpack.c.b16 %v2343, %v2335
  %v3248 = vpack.c.b16 %v2344, %v2336
  %v3249 = vpack.c.b16 %v2345, %v2337
  %v3250 = vpack.c.b16 %v2346, %v2338
  %v3251 = vpack.c.b16 %v2347, %v2339
  %v3252 = vpack.c.b16 %v2348, %v2340
  %v3253 = vpack.c.b16 %v2349, %v2341
  %v3254 = vpack.c.b16 %v2350, %v2342
  %v3255 = vpack.c.b16 %v2359, %v2351
  %v3256 = vpack.c.b16 %v2360, %v2352
  %v3257 = vpack.c.b16 %v2361, %v2353
  %v3258 = vpack.c.b16 %v2362, %v2354
  %v3259 = vpack.c.b16 %v2363, %v2355
  %v3260 = vpack.c.b16 %v2364, %v2356
  %v3261 = vpack.c.b16 %v2365, %v2357
  %v3262 = vpack.c.b16 %v2366, %v2358
  %v3263 = vpack.c.b16 %v2375, %v2367
  %v3264 = vpack.c.b16 %v2376, %v2368
  %v3265 = vpack.c.b16 %v2377, %v2369
  %v3266 = vpack.c.b16 %v2378, %v2370
  %v3267 = vpack.c.b16 %v2379, %v2371
  %v3268 = vpack.c.b16 %v2380, %v2372
  %v3269 = vpack.c.b16 %v2381, %v2373
  %v3270 = vpack.c.b16 %v2382, %v2374
  %v3271 = vpack.c.b16 %v2391, %v2383
  %v3272 = vpack.c.b16 %v2392, %v2384
  %v3273 = vpack.c.b16 %v2393, %v2385
  %v3274 = vpack.c.b16 %v2394, %v2386
  %v3275 = vpack.c.b16 %v2395, %v2387
  %v3276 = vpack.c.b16 %v2396, %v2388
  %v3277 = vpack.c.b16 %v2397, %v2389
  %v3278 = vpack.c.b16 %v2398, %v2390
  %v3279 = vpack.c.b16 %v2407, %v2399
  %v3280 = vpack.c.b16 %v2408, %v2400
  %v3281 = vpack.c.b16 %v2409, %v2401
  %v3282 = vpack.c.b16 %v2410, %v2402
  %v3283 = vpack.c.b16 %v2411, %v2403
  %v3284 = vpack.c.b16 %v2412, %v2404
  %v3285 = vpack.c.b16 %v2413, %v2405
  %v3286 = vpack.c.b16 %v2414, %v2406
  %v3287 = vpack.c.b16 %v2423, %v2415
  %v3288 = vpack.c.b16 %v2424, %v2416
  %v3289 = vpack.c.b16 %v2425, %v2417
  %v3290 = vpack.c.b16 %v2426, %v2418
  %v3291 = vpack.c.b16 %v2427, %v2419
  %v3292 = vpack.c.b16 %v2428, %v2420
  %v3293 = vpack.c.b16 %v2429, %v2421
  %v3294 = vpack.c.b16 %v2430, %v2422
  %v3295 = vpack.c.b16 %v2439, %v2431
  %v3296 = vpack.c.b16 %v2440, %v2432
  %v3297 = vpack.c.b16 %v2441, %v2433
  %v3298 = vpack.c.b16 %v2442, %v2434
  %v3299 = vpack.c.b16 %v2443, %v2435
  %v3300 = vpack.c.b16 %v2444, %v2436
  %v3301 = vpack.c.b16 %v2445, %v2437
  %v3302 = vpack.c.b16 %v2446, %v2438
  %v3303 = vpack.c.b16 %v2455, %v2447
  %v3304 = vpack.c.b16 %v2456, %v2448
  %v3305 = vpack.c.b16 %v2457, %v2449
  %v3306 = vpack.c.b16 %v2458, %v2450
  %v3307 = vpack.c.b16 %v2459, %v2451
  %v3308 = vpack.c.b16 %v2460, %v2452
  %v3309 = vpack.c.b16 %v2461, %v2453
  %v3310 = vpack.c.b16 %v2462, %v2454
  %v3311 = vpack.c.b16 %v2471, %v2463
  %v3312 = vpack.c.b16 %v2472, %v2464
  %v3313 = vpack.c.b16 %v2473, %v2465
  %v3314 = vpack.c.b16 %v2474, %v2466
  %v3315 = vpack.c.b16 %v2475, %v2467
  %v3316 = vpack.c.b16 %v2476, %v2468
  %v3317 = vpack.c.b16 %v2477, %v2469
  %v3318 = vpack.c.b16 %v2478, %v2470
  %v3319 = vpack.c.b16 %v2487, %v2479
  %v3320 = vpack.c.b16 %v2488, %v2480
  %v3321 = vpack.c.b16 %v2489, %v2481
  %v3322 = vpack.c.b16 %v2490, %v2482
  %v3323 = vpack.c.b16 %v2491, %v2483
  %v3324 = vpack.c.b16 %v2492, %v2484
  %v3325 = vpack.c.b16 %v2493, %v2485
  %v3326 = vpack.c.b16 %v2494, %v2486
  %v3327 = vpack.c.b16 %v2503, %v2495
  %v3328 = vpack.c.b16 %v2504, %v2496
  %v3329 = vpack.c.b16 %v2505, %v2497
  %v3330 = vpack.c.b16 %v2506, %v2498
  %v3331 = vpack.c.b16 %v2507, %v2499
  %v3332 = vpack.c.b16 %v2508, %v2500
  %v3333 = vpack.c.b16 %v2509, %v2501
  %v3334 = vpack.c.b16 %v2510, %v2502
  %v3335 = vpack.c.b16 %v2519, %v2511
  %v3336 = vpack.c.b16 %v2520, %v2512
  %v3337 = vpack.c.b16 %v2521, %v2513
  %v3338 = vpack.c.b16 %v2522, %v2514
  %v3339 = vpack.c.b16 %v2523, %v2515
  %v3340 = vpack.c.b16 %v2524, %v2516
  %v3341 = vpack.c.b16 %v2525, %v2517
  %v3342 = vpack.c.b16 %v2526, %v2518
  %v3343 = vpack.c.b16 %v2535, %v2527
  %v3344 = vpack.c.b16 %v2536, %v2528
  %v3345 = vpack.c.b16 %v2537, %v2529
  %v3346 = vpack.c.b16 %v2538, %v2530
  %v3347 = vpack.c.b16 %v2539, %v2531
  %v3348 = vpack.c.b16 %v2540, %v2532
  %v3349 = vpack.c.b16 %v2541, %v2533
  %v3350 = vpack.c.b16 %v2542, %v2534
  %v3351 = vpack.c.b16 %v2551, %v2543
  %v3352 = vpack.c.b16 %v2552, %v2544
  %v3353 = vpack.c.b16 %v2553, %v2545
  %v3354 = vpack.c.b16 %v2554, %v2546
  %v3355 = vpack.c.b16 %v2555, %v2547
  %v3356 = vpack.c.b16 %v2556, %v2548
  %v3357 = vpack.c.b16 %v2557, %v2549
  %v3358 = vpack.c.b16 %v2558, %v2550
  %v3359 = vpack.c.b16 %v2567, %v2559
  %v3360 = vpack.c.b16 %v2568, %v2560
  %v3361 = vpack.c.b16 %v2569, %v2561
  %v3362 = vpack.c.b16 %v2570, %v2562
  %v3363 = vpack.c.b16 %v2571, %v2563
  %v3364 = vpack.c.b16 %v2572, %v2564
  %v3365 = vpack.c.b16 %v2573, %v2565
  %v3366 = vpack.c.b16 %v2574, %v2566
  %v3367 = vpack.c.b16 %v2583, %v2575
  %v3368 = vpack.c.b16 %v2584, %v2576
  %v3369 = vpack.c.b16 %v2585, %v2577
  %v3370 = vpack.c.b16 %v2586, %v2578
  %v3371 = vpack.c.b16 %v2587, %v2579
  %v3372 = vpack.c.b16 %v2588, %v2580
  %v3373 = vpack.c.b16 %v2589, %v2581
  %v3374 = vpack.c.b16 %v2590, %v2582
  %v3375 = vpack.c.b16 %v2599, %v2591
  %v3376 = vpack.c.b16 %v2600, %v2592
  %v3377 = vpack.c.b16 %v2601, %v2593
  %v3378 = vpack.c.b16 %v2602, %v2594
  %v3379 = vpack.c.b16 %v2603, %v2595
  %v3380 = vpack.c.b16 %v2604, %v2596
  %v3381 = vpack.c.b16 %v2605, %v2597
  %v3382 = vpack.c.b16 %v2606, %v2598
  %v3383 = vpack.c.b16 %v2615, %v2607
  %v3384 = vpack.c.b16 %v2616, %v2608
  %v3385 = vpack.c.b16 %v2617, %v2609
  %v3386 = vpack.c.b16 %v2618, %v2610
  %v3387 = vpack.c.b16 %v2619, %v2611
  %v3388 = vpack.c.b16 %v2620, %v2612
  %v3389 = vpack.c.b16 %v2621, %v2613
  %v3390 = vpack.c.b16 %v2622, %v2614
  %v3391 = vpack.c.b16 %v2631, %v2623
  %v3392 = vpack.c.b16 %v2632, %v2624
  %v3393 = vpack.c.b16 %v2633, %v2625
  %v3394 = vpack.c.b16 %v2634, %v2626
  %v3395 = vpack.c.b16 %v2635, %v2627
  %v3396 = vpack.c.b16 %v2636, %v2628
  %v3397 = vpack.c.b16 %v2637, %v2629
  %v3398 = vpack.c.b16 %v2638, %v2630
  %v3399 = vpack.c.b16 %v2647, %v2639
  %v3400 = vpack.c.b16 %v2648, %v2640
  %v3401 = vpack.c.b16 %v2649, %v2641
  %v3402 = vpack.c.b16 %v2650, %v2642
  %v3403 = vpack.c.b16 %v2651, %v2643
  %v3404 = vpack.c.b16 %v2652, %v2644
  %v3405 = vpack.c.b16 %v2653, %v2645
  %v3406 = vpack.c.b16 %v2654, %v2646
  %v3407 = vpack.c.b16 %v2663, %v2655
  %v3408 = vpack.c.b16 %v2664, %v2656
  %v3409 = vpack.c.b16 %v2665, %v2657
  %v3410 = vpack.c.b16 %v2666, %v2658
  %v3411 = vpack.c.b16 %v2667, %v2659
  %v3412 = vpack.c.b16 %v2668, %v2660
  %v3413 = vpack.c.b16 %v2669, %v2661
  %v3414 = vpack.c.b16 %v2670, %v2662
  %v3415 = vpack.c.b16 %v2679, %v2671
  %v3416 = vpack.c.b16 %v2680, %v2672
  %v3417 = vpack.c.b16 %v2681, %v2673
  %v3418 = vpack.c.b16 %v2682, %v2674
  %v3419 = vpack.c.b16 %v2683, %v2675
  %v3420 = vpack.c.b16 %v2684, %v2676
  %v3421 = vpack.c.b16 %v2685, %v2677
  %v3422 = vpack.c.b16 %v2686, %v2678
  %v3423 = vpack.c.b16 %v2695, %v2687
  %v3424 = vpack.c.b16 %v2696, %v2688
  %v3425 = vpack.c.b16 %v2697, %v2689
  %v3426 = vpack.c.b16 %v2698, %v2690
  %v3427 = vpack.c.b16 %v2699, %v2691
  %v3428 = vpack.c.b16 %v2700, %v2692
  %v3429 = vpack.c.b16 %v2701, %v2693
  %v3430 = vpack.c.b16 %v2702, %v2694
  %v3431 = vpack.c.b16 %v2711, %v2703
  %v3432 = vpack.c.b16 %v2712, %v2704
  %v3433 = vpack.c.b16 %v2713, %v2705
  %v3434 = vpack.c.b16 %v2714, %v2706
  %v3435 = vpack.c.b16 %v2715, %v2707
  %v3436 = vpack.c.b16 %v2716, %v2708
  %v3437 = vpack.c.b16 %v2717, %v2709
  %v3438 = vpack.c.b16 %v2718, %v2710
  %v3439 = vpack.c.b16 %v2727, %v2719
  %v3440 = vpack.c.b16 %v2728, %v2720
  %v3441 = vpack.c.b16 %v2729, %v2721
  %v3442 = vpack.c.b16 %v2730, %v2722
  %v3443 = vpack.c.b16 %v2731, %v2723
  %v3444 = vpack.c.b16 %v2732, %v2724
  %v3445 = vpack.c.b16 %v2733, %v2725
  %v3446 = vpack.c.b16 %v2734, %v2726
  %v3447 = vpack.c.b16 %v2743, %v2735
  %v3448 = vpack.c.b16 %v2744, %v2736
  %v3449 = vpack.c.b16 %v2745, %v2737
  %v3450 = vpack.c.b16 %v2746, %v2738
  %v3451 = vpack.c.b16 %v2747, %v2739
  %v3452 = vpack.c.b16 %v2748, %v2740
  %v3453 = vpack.c.b16 %v2749, %v2741
  %v3454 = vpack.c.b16 %v2750, %v2742
  %v3455 = vpack.c.b16 %v2759, %v2751
  %v3456 = vpack.c.b16 %v2760, %v2752
  %v3457 = vpack.c.b16 %v2761, %v2753
  %v3458 = vpack.c.b16 %v2762, %v2754
  %v3459 = vpack.c.b16 %v2763, %v2755
  %v3460 = vpack.c.b16 %v2764, %v2756
  %v3461 = vpack.c.b16 %v2765, %v2757
  %v3462 = vpack.c.b16 %v2766, %v2758
  %v3463 = vpack.c.b16 %v2775, %v2767
  %v3464 = vpack.c.b16 %v2776, %v2768
  %v3465 = vpack.c.b16 %v2777, %v2769
  %v3466 = vpack.c.b16 %v2778, %v2770
  %v3467 = vpack.c.b16 %v2779, %v2771
  %v3468 = vpack.c.b16 %v2780, %v2772
  %v3469 = vpack.c.b16 %v2781, %v2773
  %v3470 = vpack.c.b16 %v2782, %v2774
  %v3471 = vpack.c.b16 %v2791, %v2783
  %v3472 = vpack.c.b16 %v2792, %v2784
  %v3473 = vpack.c.b16 %v2793, %v2785
  %v3474 = vpack.c.b16 %v2794, %v2786
  %v3475 = vpack.c.b16 %v2795, %v2787
  %v3476 = vpack.c.b16 %v2796, %v2788
  %v3477 = vpack.c.b16 %v2797, %v2789
  %v3478 = vpack.c.b16 %v2798, %v2790
  %v3479 = vpack.c.b16 %v2807, %v2799
  %v3480 = vpack.c.b16 %v2808, %v2800
  %v3481 = vpack.c.b16 %v2809, %v2801
  %v3482 = vpack.c.b16 %v2810, %v2802
  %v3483 = vpack.c.b16 %v2811, %v2803
  %v3484 = vpack.c.b16 %v2812, %v2804
  %v3485 = vpack.c.b16 %v2813, %v2805
  %v3486 = vpack.c.b16 %v2814, %v2806
  %v3487 = vpack.c.b16 %v2823, %v2815
  %v3488 = vpack.c.b16 %v2824, %v2816
  %v3489 = vpack.c.b16 %v2825, %v2817
  %v3490 = vpack.c.b16 %v2826, %v2818
  %v3491 = vpack.c.b16 %v2827, %v2819
  %v3492 = vpack.c.b16 %v2828, %v2820
  %v3493 = vpack.c.b16 %v2829, %v2821
  %v3494 = vpack.c.b16 %v2830, %v2822
  %v3495 = vpack.c.b16 %v2839, %v2831
  %v3496 = vpack.c.b16 %v2840, %v2832
  %v3497 = vpack.c.b16 %v2841, %v2833
  %v3498 = vpack.c.b16 %v2842, %v2834
  %v3499 = vpack.c.b16 %v2843, %v2835
  %v3500 = vpack.c.b16 %v2844, %v2836
  %v3501 = vpack.c.b16 %v2845, %v2837
  %v3502 = vpack.c.b16 %v2846, %v2838
  %v3503 = vpack.c.b16 %v2855, %v2847
  %v3504 = vpack.c.b16 %v2856, %v2848
  %v3505 = vpack.c.b16 %v2857, %v2849
  %v3506 = vpack.c.b16 %v2858, %v2850
  %v3507 = vpack.c.b16 %v2859, %v2851
  %v3508 = vpack.c.b16 %v2860, %v2852
  %v3509 = vpack.c.b16 %v2861, %v2853
  %v3510 = vpack.c.b16 %v2862, %v2854
  %v3511 = vpack.c.b16 %v2871, %v2863
  %v3512 = vpack.c.b16 %v2872, %v2864
  %v3513 = vpack.c.b16 %v2873, %v2865
  %v3514 = vpack.c.b16 %v2874, %v2866
  %v3515 = vpack.c.b16 %v2875, %v2867
  %v3516 = vpack.c.b16 %v2876, %v2868
  %v3517 = vpack.c.b16 %v2877, %v2869
  %v3518 = vpack.c.b16 %v2878, %v2870
  %v3519 = vpack.c.b16 %v2887, %v2879
  %v3520 = vpack.c.b16 %v2888, %v2880
  %v3521 = vpack.c.b16 %v2889, %v2881
  %v3522 = vpack.c.b16 %v2890, %v2882
  %v3523 = vpack.c.b16 %v2891, %v2883
  %v3524 = vpack.c.b16 %v2892, %v2884
  %v3525 = vpack.c.b16 %v2893, %v2885
  %v3526 = vpack.c.b16 %v2894, %v2886
  %v3527 = vpack.c.b16 %v2903, %v2895
  %v3528 = vpack.c.b16 %v2904, %v2896
  %v3529 = vpack.c.b16 %v2905, %v2897
  %v3530 = vpack.c.b16 %v2906, %v2898
  %v3531 = vpack.c.b16 %v2907, %v2899
  %v3532 = vpack.c.b16 %v2908, %v2900
  %v3533 = vpack.c.b16 %v2909, %v2901
  %v3534 = vpack.c.b16 %v2910, %v2902
  %v3535 = vpack.c.b16 %v2919, %v2911
  %v3536 = vpack.c.b16 %v2920, %v2912
  %v3537 = vpack.c.b16 %v2921, %v2913
  %v3538 = vpack.c.b16 %v2922, %v2914
  %v3539 = vpack.c.b16 %v2923, %v2915
  %v3540 = vpack.c.b16 %v2924, %v2916
  %v3541 = vpack.c.b16 %v2925, %v2917
  %v3542 = vpack.c.b16 %v2926, %v2918
  %v3543 = vpack.c.b16 %v2935, %v2927
  %v3544 = vpack.c.b16 %v2936, %v2928
  %v3545 = vpack.c.b16 %v2937, %v2929
  %v3546 = vpack.c.b16 %v2938, %v2930
  %v3547 = vpack.c.b16 %v2939, %v2931
  %v3548 = vpack.c.b16 %v2940, %v2932
  %v3549 = vpack.c.b16 %v2941, %v2933
  %v3550 = vpack.c.b16 %v2942, %v2934
  %v3551 = vpack.c.b16 %v2951, %v2943
  %v3552 = vpack.c.b16 %v2952, %v2944
  %v3553 = vpack.c.b16 %v2953, %v2945
  %v3554 = vpack.c.b16 %v2954, %v2946
  %v3555 = vpack.c.b16 %v2955, %v2947
  %v3556 = vpack.c.b16 %v2956, %v2948
  %v3557 = vpack.c.b16 %v2957, %v2949
  %v3558 = vpack.c.b16 %v2958, %v2950
  %v3559 = vpack.c.b16 %v2967, %v2959
  %v3560 = vpack.c.b16 %v2968, %v2960
  %v3561 = vpack.c.b16 %v2969, %v2961
  %v3562 = vpack.c.b16 %v2970, %v2962
  %v3563 = vpack.c.b16 %v2971, %v2963
  %v3564 = vpack.c.b16 %v2972, %v2964
  %v3565 = vpack.c.b16 %v2973, %v2965
  %v3566 = vpack.c.b16 %v2974, %v2966
  %v3567 = vpack.c.b16 %v2983, %v2975
  %v3568 = vpack.c.b16 %v2984, %v2976
  %v3569 = vpack.c.b16 %v2985, %v2977
  %v3570 = vpack.c.b16 %v2986, %v2978
  %v3571 = vpack.c.b16 %v2987, %v2979
  %v3572 = vpack.c.b16 %v2988, %v2980
  %v3573 = vpack.c.b16 %v2989, %v2981
  %v3574 = vpack.c.b16 %v2990, %v2982
  %v3575 = vpack.c.b16 %v2999, %v2991
  %v3576 = vpack.c.b16 %v3000, %v2992
  %v3577 = vpack.c.b16 %v3001, %v2993
  %v3578 = vpack.c.b16 %v3002, %v2994
  %v3579 = vpack.c.b16 %v3003, %v2995
  %v3580 = vpack.c.b16 %v3004, %v2996
  %v3581 = vpack.c.b16 %v3005, %v2997
  %v3582 = vpack.c.b16 %v3006, %v2998
  %v3583 = vpack.c.b16 %v3015, %v3007
  %v3584 = vpack.c.b16 %v3016, %v3008
  %v3585 = vpack.c.b16 %v3017, %v3009
  %v3586 = vpack.c.b16 %v3018, %v3010
  %v3587 = vpack.c.b16 %v3019, %v3011
  %v3588 = vpack.c.b16 %v3020, %v3012
  %v3589 = vpack.c.b16 %v3021, %v3013
  %v3590 = vpack.c.b16 %v3022, %v3014
  %v3591 = vpack.c.b16 %v3031, %v3023
  %v3592 = vpack.c.b16 %v3032, %v3024
  %v3593 = vpack.c.b16 %v3033, %v3025
  %v3594 = vpack.c.b16 %v3034, %v3026
  %v3595 = vpack.c.b16 %v3035, %v3027
  %v3596 = vpack.c.b16 %v3036, %v3028
  %v3597 = vpack.c.b16 %v3037, %v3029
  %v3598 = vpack.c.b16 %v3038, %v3030
  %v3599 = vpack.c.b16 %v3047, %v3039
  %v3600 = vpack.c.b16 %v3048, %v3040
  %v3601 = vpack.c.b16 %v3049, %v3041
  %v3602 = vpack.c.b16 %v3050, %v3042
  %v3603 = vpack.c.b16 %v3051, %v3043
  %v3604 = vpack.c.b16 %v3052, %v3044
  %v3605 = vpack.c.b16 %v3053, %v3045
  %v3606 = vpack.c.b16 %v3054, %v3046
  %v3607 = vpack.c.b16 %v3063, %v3055
  %v3608 = vpack.c.b16 %v3064, %v3056
  %v3609 = vpack.c.b16 %v3065, %v3057
  %v3610 = vpack.c.b16 %v3066, %v3058
  %v3611 = vpack.c.b16 %v3067, %v3059
  %v3612 = vpack.c.b16 %v3068, %v3060
  %v3613 = vpack.c.b16 %v3069, %v3061
  %v3614 = vpack.c.b16 %v3070, %v3062
  %v3615 = vpack.c.b16 %v3079, %v3071
  %v3616 = vpack.c.b16 %v3080, %v3072
  %v3617 = vpack.c.b16 %v3081, %v3073
  %v3618 = vpack.c.b16 %v3082, %v3074
  %v3619 = vpack.c.b16 %v3083, %v3075
  %v3620 = vpack.c.b16 %v3084, %v3076
  %v3621 = vpack.c.b16 %v3085, %v3077
  %v3622 = vpack.c.b16 %v3086, %v3078
  %v3623 = vpack.c.b16 %v3095, %v3087
  %v3624 = vpack.c.b16 %v3096, %v3088
  %v3625 = vpack.c.b16 %v3097, %v3089
  %v3626 = vpack.c.b16 %v3098, %v3090
  %v3627 = vpack.c.b16 %v3099, %v3091
  %v3628 = vpack.c.b16 %v3100, %v3092
  %v3629 = vpack.c.b16 %v3101, %v3093
  %v3630 = vpack.c.b16 %v3102, %v3094
  %v3631 = vpack.c.b16 %v3111, %v3103
  %v3632 = vpack.c.b16 %v3112, %v3104
  %v3633 = vpack.c.b16 %v3113, %v3105
  %v3634 = vpack.c.b16 %v3114, %v3106
  %v3635 = vpack.c.b16 %v3115, %v3107
  %v3636 = vpack.c.b16 %v3116, %v3108
  %v3637 = vpack.c.b16 %v3117, %v3109
  %v3638 = vpack.c.b16 %v3118, %v3110
  %v3639 = vpack.c.b16 %v3127, %v3119
  %v3640 = vpack.c.b16 %v3128, %v3120
  %v3641 = vpack.c.b16 %v3129, %v3121
  %v3642 = vpack.c.b16 %v3130, %v3122
  %v3643 = vpack.c.b16 %v3131, %v3123
  %v3644 = vpack.c.b16 %v3132, %v3124
  %v3645 = vpack.c.b16 %v3133, %v3125
  %v3646 = vpack.c.b16 %v3134, %v3126
  %4159 = vmatprep.subr.bf16.mxu0 %v3136
  %4160 = vmatpush1.bf16.msra.mxu0 %v3135
  %4161 = vmatprep.subr.bf16.mxu0 %v3144
  %4162 = vmatpush1.bf16.msra.mxu0 %v3143
  %4163 = vmatprep.subr.bf16.mxu0 %v3152
  %4164 = vmatpush1.bf16.msra.mxu0 %v3151
  %4165 = vmatprep.subr.bf16.mxu0 %v3160
  %4166 = vmatpush1.bf16.msra.mxu0 %v3159
  %4167 = vmatprep.subr.bf16.mxu0 %v3168
  %4168 = vmatpush1.bf16.msra.mxu0 %v3167
  %4169 = vmatprep.subr.bf16.mxu0 %v3176
  %4170 = vmatpush1.bf16.msra.mxu0 %v3175
  %4171 = vmatprep.subr.bf16.mxu0 %v3184
  %4172 = vmatpush1.bf16.msra.mxu0 %v3183
  %4173 = vmatprep.subr.bf16.mxu0 %v3192
  %4174 = vmatpush1.bf16.msra.mxu0 %v3191
  %4175 = vmatprep.subr.bf16.mxu0 %v3200
  %4176 = vmatpush1.bf16.msra.mxu0 %v3199
  %4177 = vmatprep.subr.bf16.mxu0 %v3208
  %4178 = vmatpush1.bf16.msra.mxu0 %v3207
  %4179 = vmatprep.subr.bf16.mxu0 %v3216
  %4180 = vmatpush1.bf16.msra.mxu0 %v3215
  %4181 = vmatprep.subr.bf16.mxu0 %v3224
  %4182 = vmatpush1.bf16.msra.mxu0 %v3223
  %4183 = vmatprep.subr.bf16.mxu0 %v3232
  %4184 = vmatpush1.bf16.msra.mxu0 %v3231
  %4185 = vmatprep.subr.bf16.mxu0 %v3240
  %4186 = vmatpush1.bf16.msra.mxu0 %v3239
  %4187 = vmatprep.subr.bf16.mxu0 %v3248
  %4188 = vmatpush1.bf16.msra.mxu0 %v3247
  %4189 = vmatprep.subr.bf16.mxu0 %v3256
  %4190 = vmatpush1.bf16.msra.mxu0 %v3255
  %4191 = vmatprep.mubr.bf16.mxu0 %v1038
  %4192 = vmatmul.mubr.bf16.gmra.mrb[0].mxu0 %v1037
  %v4193 = vpop.f32.mrb[0].mxu0
  %v4194 = vadd.f32 %v1562, %v4193
  %v4195 = vpop.f32.mrb[0].mxu0
  %v4196 = vadd.f32 %v1566, %v4195
  %v4197 = vpop.f32.mrb[0].mxu0
  %v4198 = vadd.f32 %v1562, %v4197
  %v4199 = vpop.f32.mrb[0].mxu0
  %v4200 = vadd.f32 %v1566, %v4199
  %4201 = vdwg.mxu0
  %4202 = vmatprep.subr.bf16.mxu0 %v3264
  %4203 = vmatpush1.bf16.msra.mxu0 %v3263
  %4204 = vmatprep.subr.bf16.mxu0 %v3272
  %4205 = vmatpush1.bf16.msra.mxu0 %v3271
  %4206 = vmatprep.subr.bf16.mxu0 %v3280
  %4207 = vmatpush1.bf16.msra.mxu0 %v3279
  %4208 = vmatprep.subr.bf16.mxu0 %v3288
  %4209 = vmatpush1.bf16.msra.mxu0 %v3287
  %4210 = vmatprep.subr.bf16.mxu0 %v3296
  %4211 = vmatpush1.bf16.msra.mxu0 %v3295
  %4212 = vmatprep.subr.bf16.mxu0 %v3304
  %4213 = vmatpush1.bf16.msra.mxu0 %v3303
  %4214 = vmatprep.subr.bf16.mxu0 %v3312
  %4215 = vmatpush1.bf16.msra.mxu0 %v3311
  %4216 = vmatprep.subr.bf16.mxu0 %v3320
  %4217 = vmatpush1.bf16.msra.mxu0 %v3319
  %4218 = vmatprep.subr.bf16.mxu0 %v3328
  %4219 = vmatpush1.bf16.msra.mxu0 %v3327
  %4220 = vmatprep.subr.bf16.mxu0 %v3336
  %4221 = vmatpush1.bf16.msra.mxu0 %v3335
  %4222 = vmatprep.subr.bf16.mxu0 %v3344
  %4223 = vmatpush1.bf16.msra.mxu0 %v3343
  %4224 = vmatprep.subr.bf16.mxu0 %v3352
  %4225 = vmatpush1.bf16.msra.mxu0 %v3351
  %4226 = vmatprep.subr.bf16.mxu0 %v3360
  %4227 = vmatpush1.bf16.msra.mxu0 %v3359
  %4228 = vmatprep.subr.bf16.mxu0 %v3368
  %4229 = vmatpush1.bf16.msra.mxu0 %v3367
  %4230 = vmatprep.subr.bf16.mxu0 %v3376
  %4231 = vmatpush1.bf16.msra.mxu0 %v3375
  %4232 = vmatprep.subr.bf16.mxu0 %v3384
  %4233 = vmatpush1.bf16.msra.mxu0 %v3383
  %4234 = vmatprep.mubr.bf16.mxu0 %v1040
  %4235 = vmatmul.mubr.bf16.gmra.mrb[0].mxu0 %v1039
  %v4236 = vpop.f32.mrb[0].mxu0
  %v4237 = vadd.f32 %v4194, %v4236
  %v4238 = vpop.f32.mrb[0].mxu0
  %v4239 = vadd.f32 %v4196, %v4238
  %v4240 = vpop.f32.mrb[0].mxu0
  %v4241 = vadd.f32 %v4198, %v4240
  %v4242 = vpop.f32.mrb[0].mxu0
  %v4243 = vadd.f32 %v4200, %v4242
  %4244 = vdwg.mxu0
  %4245 = vmatprep.subr.bf16.mxu0 %v3392
  %4246 = vmatpush1.bf16.msra.mxu0 %v3391
  %4247 = vmatprep.subr.bf16.mxu0 %v3400
  %4248 = vmatpush1.bf16.msra.mxu0 %v3399
  %4249 = vmatprep.subr.bf16.mxu0 %v3408
  %4250 = vmatpush1.bf16.msra.mxu0 %v3407
  %4251 = vmatprep.subr.bf16.mxu0 %v3416
  %4252 = vmatpush1.bf16.msra.mxu0 %v3415
  %4253 = vmatprep.subr.bf16.mxu0 %v3424
  %4254 = vmatpush1.bf16.msra.mxu0 %v3423
  %4255 = vmatprep.subr.bf16.mxu0 %v3432
  %4256 = vmatpush1.bf16.msra.mxu0 %v3431
  %4257 = vmatprep.subr.bf16.mxu0 %v3440
  %4258 = vmatpush1.bf16.msra.mxu0 %v3439
  %4259 = vmatprep.subr.bf16.mxu0 %v3448
  %4260 = vmatpush1.bf16.msra.mxu0 %v3447
  %4261 = vmatprep.subr.bf16.mxu0 %v3456
  %4262 = vmatpush1.bf16.msra.mxu0 %v3455
  %4263 = vmatprep.subr.bf16.mxu0 %v3464
  %4264 = vmatpush1.bf16.msra.mxu0 %v3463
  %4265 = vmatprep.subr.bf16.mxu0 %v3472
  %4266 = vmatpush1.bf16.msra.mxu0 %v3471
  %4267 = vmatprep.subr.bf16.mxu0 %v3480
  %4268 = vmatpush1.bf16.msra.mxu0 %v3479
  %4269 = vmatprep.subr.bf16.mxu0 %v3488
  %4270 = vmatpush1.bf16.msra.mxu0 %v3487
  %4271 = vmatprep.subr.bf16.mxu0 %v3496
  %4272 = vmatpush1.bf16.msra.mxu0 %v3495
  %4273 = vmatprep.subr.bf16.mxu0 %v3504
  %4274 = vmatpush1.bf16.msra.mxu0 %v3503
  %4275 = vmatprep.subr.bf16.mxu0 %v3512
  %4276 = vmatpush1.bf16.msra.mxu0 %v3511
  %4277 = vmatprep.mubr.bf16.mxu0 %v1042
  %4278 = vmatmul.mubr.bf16.gmra.mrb[0].mxu0 %v1041
  %v4279 = vpop.f32.mrb[0].mxu0
  %v4280 = vadd.f32 %v4237, %v4279
  %v4281 = vpop.f32.mrb[0].mxu0
  %v4282 = vadd.f32 %v4239, %v4281
  %v4283 = vpop.f32.mrb[0].mxu0
  %v4284 = vadd.f32 %v4241, %v4283
  %v4285 = vpop.f32.mrb[0].mxu0
  %v4286 = vadd.f32 %v4243, %v4285
  %4287 = vdwg.mxu0
  %4288 = vmatprep.subr.bf16.mxu0 %v3520
  %4289 = vmatpush1.bf16.msra.mxu0 %v3519
  %4290 = vmatprep.subr.bf16.mxu0 %v3528
  %4291 = vmatpush1.bf16.msra.mxu0 %v3527
  %4292 = vmatprep.subr.bf16.mxu0 %v3536
  %4293 = vmatpush1.bf16.msra.mxu0 %v3535
  %4294 = vmatprep.subr.bf16.mxu0 %v3544
  %4295 = vmatpush1.bf16.msra.mxu0 %v3543
  %4296 = vmatprep.subr.bf16.mxu0 %v3552
  %4297 = vmatpush1.bf16.msra.mxu0 %v3551
  %4298 = vmatprep.subr.bf16.mxu0 %v3560
  %4299 = vmatpush1.bf16.msra.mxu0 %v3559
  %4300 = vmatprep.subr.bf16.mxu0 %v3568
  %4301 = vmatpush1.bf16.msra.mxu0 %v3567
  %4302 = vmatprep.subr.bf16.mxu0 %v3576
  %4303 = vmatpush1.bf16.msra.mxu0 %v3575
  %4304 = vmatprep.subr.bf16.mxu0 %v3584
  %4305 = vmatpush1.bf16.msra.mxu0 %v3583
  %4306 = vmatprep.subr.bf16.mxu0 %v3592
  %4307 = vmatpush1.bf16.msra.mxu0 %v3591
  %4308 = vmatprep.subr.bf16.mxu0 %v3600
  %4309 = vmatpush1.bf16.msra.mxu0 %v3599
  %4310 = vmatprep.subr.bf16.mxu0 %v3608
  %4311 = vmatpush1.bf16.msra.mxu0 %v3607
  %4312 = vmatprep.subr.bf16.mxu0 %v3616
  %4313 = vmatpush1.bf16.msra.mxu0 %v3615
  %4314 = vmatprep.subr.bf16.mxu0 %v3624
  %4315 = vmatpush1.bf16.msra.mxu0 %v3623
  %4316 = vmatprep.subr.bf16.mxu0 %v3632
  %4317 = vmatpush1.bf16.msra.mxu0 %v3631
  %4318 = vmatprep.subr.bf16.mxu0 %v3640
  %4319 = vmatpush1.bf16.msra.mxu0 %v3639
  %4320 = vmatprep.mubr.bf16.mxu0 %v1044
  %4321 = vmatmul.mubr.bf16.gmra.mrb[0].mxu0 %v1043
  %v4322 = vpop.f32.mrb[0].mxu0
  %v4323 = vadd.f32 %v4280, %v4322
  %v4324 = vpop.f32.mrb[0].mxu0
  %v4325 = vadd.f32 %v4282, %v4324
  %v4326 = vpop.f32.mrb[0].mxu0
  %v4327 = vadd.f32 %v4284, %v4326
  %v4328 = vpop.f32.mrb[0].mxu0
  %v4329 = vadd.f32 %v4286, %v4328
  %4330 = vdwg.mxu0
  %4331 = vmatprep.subr.bf16.mxu0 %v3138
  %4332 = vmatpush1.bf16.msra.mxu0 %v3137
  %4333 = vmatprep.subr.bf16.mxu0 %v3146
  %4334 = vmatpush1.bf16.msra.mxu0 %v3145
  %4335 = vmatprep.subr.bf16.mxu0 %v3154
  %4336 = vmatpush1.bf16.msra.mxu0 %v3153
  %4337 = vmatprep.subr.bf16.mxu0 %v3162
  %4338 = vmatpush1.bf16.msra.mxu0 %v3161
  %4339 = vmatprep.subr.bf16.mxu0 %v3170
  %4340 = vmatpush1.bf16.msra.mxu0 %v3169
  %4341 = vmatprep.subr.bf16.mxu0 %v3178
  %4342 = vmatpush1.bf16.msra.mxu0 %v3177
  %4343 = vmatprep.subr.bf16.mxu0 %v3186
  %4344 = vmatpush1.bf16.msra.mxu0 %v3185
  %4345 = vmatprep.subr.bf16.mxu0 %v3194
  %4346 = vmatpush1.bf16.msra.mxu0 %v3193
  %4347 = vmatprep.subr.bf16.mxu0 %v3202
  %4348 = vmatpush1.bf16.msra.mxu0 %v3201
  %4349 = vmatprep.subr.bf16.mxu0 %v3210
  %4350 = vmatpush1.bf16.msra.mxu0 %v3209
  %4351 = vmatprep.subr.bf16.mxu0 %v3218
  %4352 = vmatpush1.bf16.msra.mxu0 %v3217
  %4353 = vmatprep.subr.bf16.mxu0 %v3226
  %4354 = vmatpush1.bf16.msra.mxu0 %v3225
  %4355 = vmatprep.subr.bf16.mxu0 %v3234
  %4356 = vmatpush1.bf16.msra.mxu0 %v3233
  %4357 = vmatprep.subr.bf16.mxu0 %v3242
  %4358 = vmatpush1.bf16.msra.mxu0 %v3241
  %4359 = vmatprep.subr.bf16.mxu0 %v3250
  %4360 = vmatpush1.bf16.msra.mxu0 %v3249
  %4361 = vmatprep.subr.bf16.mxu0 %v3258
  %4362 = vmatpush1.bf16.msra.mxu0 %v3257
  %4363 = vmatprep.mubr.bf16.mxu0 %v1038
  %4364 = vmatmul.mubr.bf16.gmra.mrb[0].mxu0 %v1037
  %v4365 = vpop.f32.mrb[0].mxu0
  %v4366 = vadd.f32 %v1570, %v4365
  %v4367 = vpop.f32.mrb[0].mxu0
  %v4368 = vadd.f32 %v1574, %v4367
  %v4369 = vpop.f32.mrb[0].mxu0
  %v4370 = vadd.f32 %v1570, %v4369
  %v4371 = vpop.f32.mrb[0].mxu0
  %v4372 = vadd.f32 %v1574, %v4371
  %4373 = vdwg.mxu0
  %4374 = vmatprep.subr.bf16.mxu0 %v3266
  %4375 = vmatpush1.bf16.msra.mxu0 %v3265
  %4376 = vmatprep.subr.bf16.mxu0 %v3274
  %4377 = vmatpush1.bf16.msra.mxu0 %v3273
  %4378 = vmatprep.subr.bf16.mxu0 %v3282
  %4379 = vmatpush1.bf16.msra.mxu0 %v3281
  %4380 = vmatprep.subr.bf16.mxu0 %v3290
  %4381 = vmatpush1.bf16.msra.mxu0 %v3289
  %4382 = vmatprep.subr.bf16.mxu0 %v3298
  %4383 = vmatpush1.bf16.msra.mxu0 %v3297
  %4384 = vmatprep.subr.bf16.mxu0 %v3306
  %4385 = vmatpush1.bf16.msra.mxu0 %v3305
  %4386 = vmatprep.subr.bf16.mxu0 %v3314
  %4387 = vmatpush1.bf16.msra.mxu0 %v3313
  %4388 = vmatprep.subr.bf16.mxu0 %v3322
  %4389 = vmatpush1.bf16.msra.mxu0 %v3321
  %4390 = vmatprep.subr.bf16.mxu0 %v3330
  %4391 = vmatpush1.bf16.msra.mxu0 %v3329
  %4392 = vmatprep.subr.bf16.mxu0 %v3338
  %4393 = vmatpush1.bf16.msra.mxu0 %v3337
  %4394 = vmatprep.subr.bf16.mxu0 %v3346
  %4395 = vmatpush1.bf16.msra.mxu0 %v3345
  %4396 = vmatprep.subr.bf16.mxu0 %v3354
  %4397 = vmatpush1.bf16.msra.mxu0 %v3353
  %4398 = vmatprep.subr.bf16.mxu0 %v3362
  %4399 = vmatpush1.bf16.msra.mxu0 %v3361
  %4400 = vmatprep.subr.bf16.mxu0 %v3370
  %4401 = vmatpush1.bf16.msra.mxu0 %v3369
  %4402 = vmatprep.subr.bf16.mxu0 %v3378
  %4403 = vmatpush1.bf16.msra.mxu0 %v3377
  %4404 = vmatprep.subr.bf16.mxu0 %v3386
  %4405 = vmatpush1.bf16.msra.mxu0 %v3385
  %4406 = vmatprep.mubr.bf16.mxu0 %v1040
  %4407 = vmatmul.mubr.bf16.gmra.mrb[0].mxu0 %v1039
  %v4408 = vpop.f32.mrb[0].mxu0
  %v4409 = vadd.f32 %v4366, %v4408
  %v4410 = vpop.f32.mrb[0].mxu0
  %v4411 = vadd.f32 %v4368, %v4410
  %v4412 = vpop.f32.mrb[0].mxu0
  %v4413 = vadd.f32 %v4370, %v4412
  %v4414 = vpop.f32.mrb[0].mxu0
  %v4415 = vadd.f32 %v4372, %v4414
  %4416 = vdwg.mxu0
  %4417 = vmatprep.subr.bf16.mxu0 %v3394
  %4418 = vmatpush1.bf16.msra.mxu0 %v3393
  %4419 = vmatprep.subr.bf16.mxu0 %v3402
  %4420 = vmatpush1.bf16.msra.mxu0 %v3401
  %4421 = vmatprep.subr.bf16.mxu0 %v3410
  %4422 = vmatpush1.bf16.msra.mxu0 %v3409
  %4423 = vmatprep.subr.bf16.mxu0 %v3418
  %4424 = vmatpush1.bf16.msra.mxu0 %v3417
  %4425 = vmatprep.subr.bf16.mxu0 %v3426
  %4426 = vmatpush1.bf16.msra.mxu0 %v3425
  %4427 = vmatprep.subr.bf16.mxu0 %v3434
  %4428 = vmatpush1.bf16.msra.mxu0 %v3433
  %4429 = vmatprep.subr.bf16.mxu0 %v3442
  %4430 = vmatpush1.bf16.msra.mxu0 %v3441
  %4431 = vmatprep.subr.bf16.mxu0 %v3450
  %4432 = vmatpush1.bf16.msra.mxu0 %v3449
  %4433 = vmatprep.subr.bf16.mxu0 %v3458
  %4434 = vmatpush1.bf16.msra.mxu0 %v3457
  %4435 = vmatprep.subr.bf16.mxu0 %v3466
  %4436 = vmatpush1.bf16.msra.mxu0 %v3465
  %4437 = vmatprep.subr.bf16.mxu0 %v3474
  %4438 = vmatpush1.bf16.msra.mxu0 %v3473
  %4439 = vmatprep.subr.bf16.mxu0 %v3482
  %4440 = vmatpush1.bf16.msra.mxu0 %v3481
  %4441 = vmatprep.subr.bf16.mxu0 %v3490
  %4442 = vmatpush1.bf16.msra.mxu0 %v3489
  %4443 = vmatprep.subr.bf16.mxu0 %v3498
  %4444 = vmatpush1.bf16.msra.mxu0 %v3497
  %4445 = vmatprep.subr.bf16.mxu0 %v3506
  %4446 = vmatpush1.bf16.msra.mxu0 %v3505
  %4447 = vmatprep.subr.bf16.mxu0 %v3514
  %4448 = vmatpush1.bf16.msra.mxu0 %v3513
  %4449 = vmatprep.mubr.bf16.mxu0 %v1042
  %4450 = vmatmul.mubr.bf16.gmra.mrb[0].mxu0 %v1041
  %v4451 = vpop.f32.mrb[0].mxu0
  %v4452 = vadd.f32 %v4409, %v4451
  %v4453 = vpop.f32.mrb[0].mxu0
  %v4454 = vadd.f32 %v4411, %v4453
  %v4455 = vpop.f32.mrb[0].mxu0
  %v4456 = vadd.f32 %v4413, %v4455
  %v4457 = vpop.f32.mrb[0].mxu0
  %v4458 = vadd.f32 %v4415, %v4457
  %4459 = vdwg.mxu0
  %4460 = vmatprep.subr.bf16.mxu0 %v3522
  %4461 = vmatpush1.bf16.msra.mxu0 %v3521
  %4462 = vmatprep.subr.bf16.mxu0 %v3530
  %4463 = vmatpush1.bf16.msra.mxu0 %v3529
  %4464 = vmatprep.subr.bf16.mxu0 %v3538
  %4465 = vmatpush1.bf16.msra.mxu0 %v3537
  %4466 = vmatprep.subr.bf16.mxu0 %v3546
  %4467 = vmatpush1.bf16.msra.mxu0 %v3545
  %4468 = vmatprep.subr.bf16.mxu0 %v3554
  %4469 = vmatpush1.bf16.msra.mxu0 %v3553
  %4470 = vmatprep.subr.bf16.mxu0 %v3562
  %4471 = vmatpush1.bf16.msra.mxu0 %v3561
  %4472 = vmatprep.subr.bf16.mxu0 %v3570
  %4473 = vmatpush1.bf16.msra.mxu0 %v3569
  %4474 = vmatprep.subr.bf16.mxu0 %v3578
  %4475 = vmatpush1.bf16.msra.mxu0 %v3577
  %4476 = vmatprep.subr.bf16.mxu0 %v3586
  %4477 = vmatpush1.bf16.msra.mxu0 %v3585
  %4478 = vmatprep.subr.bf16.mxu0 %v3594
  %4479 = vmatpush1.bf16.msra.mxu0 %v3593
  %4480 = vmatprep.subr.bf16.mxu0 %v3602
  %4481 = vmatpush1.bf16.msra.mxu0 %v3601
  %4482 = vmatprep.subr.bf16.mxu0 %v3610
  %4483 = vmatpush1.bf16.msra.mxu0 %v3609
  %4484 = vmatprep.subr.bf16.mxu0 %v3618
  %4485 = vmatpush1.bf16.msra.mxu0 %v3617
  %4486 = vmatprep.subr.bf16.mxu0 %v3626
  %4487 = vmatpush1.bf16.msra.mxu0 %v3625
  %4488 = vmatprep.subr.bf16.mxu0 %v3634
  %4489 = vmatpush1.bf16.msra.mxu0 %v3633
  %4490 = vmatprep.subr.bf16.mxu0 %v3642
  %4491 = vmatpush1.bf16.msra.mxu0 %v3641
  %4492 = vmatprep.mubr.bf16.mxu0 %v1044
  %4493 = vmatmul.mubr.bf16.gmra.mrb[0].mxu0 %v1043
  %v4494 = vpop.f32.mrb[0].mxu0
  %v4495 = vadd.f32 %v4452, %v4494
  %v4496 = vpop.f32.mrb[0].mxu0
  %v4497 = vadd.f32 %v4454, %v4496
  %v4498 = vpop.f32.mrb[0].mxu0
  %v4499 = vadd.f32 %v4456, %v4498
  %v4500 = vpop.f32.mrb[0].mxu0
  %v4501 = vadd.f32 %v4458, %v4500
  %4502 = vdwg.mxu0
  %4503 = vmatprep.subr.bf16.mxu0 %v3140
  %4504 = vmatpush1.bf16.msra.mxu0 %v3139
  %4505 = vmatprep.subr.bf16.mxu0 %v3148
  %4506 = vmatpush1.bf16.msra.mxu0 %v3147
  %4507 = vmatprep.subr.bf16.mxu0 %v3156
  %4508 = vmatpush1.bf16.msra.mxu0 %v3155
  %4509 = vmatprep.subr.bf16.mxu0 %v3164
  %4510 = vmatpush1.bf16.msra.mxu0 %v3163
  %4511 = vmatprep.subr.bf16.mxu0 %v3172
  %4512 = vmatpush1.bf16.msra.mxu0 %v3171
  %4513 = vmatprep.subr.bf16.mxu0 %v3180
  %4514 = vmatpush1.bf16.msra.mxu0 %v3179
  %4515 = vmatprep.subr.bf16.mxu0 %v3188
  %4516 = vmatpush1.bf16.msra.mxu0 %v3187
  %4517 = vmatprep.subr.bf16.mxu0 %v3196
  %4518 = vmatpush1.bf16.msra.mxu0 %v3195
  %4519 = vmatprep.subr.bf16.mxu0 %v3204
  %4520 = vmatpush1.bf16.msra.mxu0 %v3203
  %4521 = vmatprep.subr.bf16.mxu0 %v3212
  %4522 = vmatpush1.bf16.msra.mxu0 %v3211
  %4523 = vmatprep.subr.bf16.mxu0 %v3220
  %4524 = vmatpush1.bf16.msra.mxu0 %v3219
  %4525 = vmatprep.subr.bf16.mxu0 %v3228
  %4526 = vmatpush1.bf16.msra.mxu0 %v3227
  %4527 = vmatprep.subr.bf16.mxu0 %v3236
  %4528 = vmatpush1.bf16.msra.mxu0 %v3235
  %4529 = vmatprep.subr.bf16.mxu0 %v3244
  %4530 = vmatpush1.bf16.msra.mxu0 %v3243
  %4531 = vmatprep.subr.bf16.mxu0 %v3252
  %4532 = vmatpush1.bf16.msra.mxu0 %v3251
  %4533 = vmatprep.subr.bf16.mxu0 %v3260
  %4534 = vmatpush1.bf16.msra.mxu0 %v3259
  %4535 = vmatprep.mubr.bf16.mxu0 %v1038
  %4536 = vmatmul.mubr.bf16.gmra.mrb[0].mxu0 %v1037
  %v4537 = vpop.f32.mrb[0].mxu0
  %v4538 = vadd.f32 %v1578, %v4537
  %v4539 = vpop.f32.mrb[0].mxu0
  %v4540 = vadd.f32 %v1582, %v4539
  %v4541 = vpop.f32.mrb[0].mxu0
  %v4542 = vadd.f32 %v1578, %v4541
  %v4543 = vpop.f32.mrb[0].mxu0
  %v4544 = vadd.f32 %v1582, %v4543
  %4545 = vdwg.mxu0
  %4546 = vmatprep.subr.bf16.mxu0 %v3268
  %4547 = vmatpush1.bf16.msra.mxu0 %v3267
  %4548 = vmatprep.subr.bf16.mxu0 %v3276
  %4549 = vmatpush1.bf16.msra.mxu0 %v3275
  %4550 = vmatprep.subr.bf16.mxu0 %v3284
  %4551 = vmatpush1.bf16.msra.mxu0 %v3283
  %4552 = vmatprep.subr.bf16.mxu0 %v3292
  %4553 = vmatpush1.bf16.msra.mxu0 %v3291
  %4554 = vmatprep.subr.bf16.mxu0 %v3300
  %4555 = vmatpush1.bf16.msra.mxu0 %v3299
  %4556 = vmatprep.subr.bf16.mxu0 %v3308
  %4557 = vmatpush1.bf16.msra.mxu0 %v3307
  %4558 = vmatprep.subr.bf16.mxu0 %v3316
  %4559 = vmatpush1.bf16.msra.mxu0 %v3315
  %4560 = vmatprep.subr.bf16.mxu0 %v3324
  %4561 = vmatpush1.bf16.msra.mxu0 %v3323
  %4562 = vmatprep.subr.bf16.mxu0 %v3332
  %4563 = vmatpush1.bf16.msra.mxu0 %v3331
  %4564 = vmatprep.subr.bf16.mxu0 %v3340
  %4565 = vmatpush1.bf16.msra.mxu0 %v3339
  %4566 = vmatprep.subr.bf16.mxu0 %v3348
  %4567 = vmatpush1.bf16.msra.mxu0 %v3347
  %4568 = vmatprep.subr.bf16.mxu0 %v3356
  %4569 = vmatpush1.bf16.msra.mxu0 %v3355
  %4570 = vmatprep.subr.bf16.mxu0 %v3364
  %4571 = vmatpush1.bf16.msra.mxu0 %v3363
  %4572 = vmatprep.subr.bf16.mxu0 %v3372
  %4573 = vmatpush1.bf16.msra.mxu0 %v3371
  %4574 = vmatprep.subr.bf16.mxu0 %v3380
  %4575 = vmatpush1.bf16.msra.mxu0 %v3379
  %4576 = vmatprep.subr.bf16.mxu0 %v3388
  %4577 = vmatpush1.bf16.msra.mxu0 %v3387
  %4578 = vmatprep.mubr.bf16.mxu0 %v1040
  %4579 = vmatmul.mubr.bf16.gmra.mrb[0].mxu0 %v1039
  %v4580 = vpop.f32.mrb[0].mxu0
  %v4581 = vadd.f32 %v4538, %v4580
  %v4582 = vpop.f32.mrb[0].mxu0
  %v4583 = vadd.f32 %v4540, %v4582
  %v4584 = vpop.f32.mrb[0].mxu0
  %v4585 = vadd.f32 %v4542, %v4584
  %v4586 = vpop.f32.mrb[0].mxu0
  %v4587 = vadd.f32 %v4544, %v4586
  %4588 = vdwg.mxu0
  %4589 = vmatprep.subr.bf16.mxu0 %v3396
  %4590 = vmatpush1.bf16.msra.mxu0 %v3395
  %4591 = vmatprep.subr.bf16.mxu0 %v3404
  %4592 = vmatpush1.bf16.msra.mxu0 %v3403
  %4593 = vmatprep.subr.bf16.mxu0 %v3412
  %4594 = vmatpush1.bf16.msra.mxu0 %v3411
  %4595 = vmatprep.subr.bf16.mxu0 %v3420
  %4596 = vmatpush1.bf16.msra.mxu0 %v3419
  %4597 = vmatprep.subr.bf16.mxu0 %v3428
  %4598 = vmatpush1.bf16.msra.mxu0 %v3427
  %4599 = vmatprep.subr.bf16.mxu0 %v3436
  %4600 = vmatpush1.bf16.msra.mxu0 %v3435
  %4601 = vmatprep.subr.bf16.mxu0 %v3444
  %4602 = vmatpush1.bf16.msra.mxu0 %v3443
  %4603 = vmatprep.subr.bf16.mxu0 %v3452
  %4604 = vmatpush1.bf16.msra.mxu0 %v3451
  %4605 = vmatprep.subr.bf16.mxu0 %v3460
  %4606 = vmatpush1.bf16.msra.mxu0 %v3459
  %4607 = vmatprep.subr.bf16.mxu0 %v3468
  %4608 = vmatpush1.bf16.msra.mxu0 %v3467
  %4609 = vmatprep.subr.bf16.mxu0 %v3476
  %4610 = vmatpush1.bf16.msra.mxu0 %v3475
  %4611 = vmatprep.subr.bf16.mxu0 %v3484
  %4612 = vmatpush1.bf16.msra.mxu0 %v3483
  %4613 = vmatprep.subr.bf16.mxu0 %v3492
  %4614 = vmatpush1.bf16.msra.mxu0 %v3491
  %4615 = vmatprep.subr.bf16.mxu0 %v3500
  %4616 = vmatpush1.bf16.msra.mxu0 %v3499
  %4617 = vmatprep.subr.bf16.mxu0 %v3508
  %4618 = vmatpush1.bf16.msra.mxu0 %v3507
  %4619 = vmatprep.subr.bf16.mxu0 %v3516
  %4620 = vmatpush1.bf16.msra.mxu0 %v3515
  %4621 = vmatprep.mubr.bf16.mxu0 %v1042
  %4622 = vmatmul.mubr.bf16.gmra.mrb[0].mxu0 %v1041
  %v4623 = vpop.f32.mrb[0].mxu0
  %v4624 = vadd.f32 %v4581, %v4623
  %v4625 = vpop.f32.mrb[0].mxu0
  %v4626 = vadd.f32 %v4583, %v4625
  %v4627 = vpop.f32.mrb[0].mxu0
  %v4628 = vadd.f32 %v4585, %v4627
  %v4629 = vpop.f32.mrb[0].mxu0
  %v4630 = vadd.f32 %v4587, %v4629
  %4631 = vdwg.mxu0
  %4632 = vmatprep.subr.bf16.mxu0 %v3524
  %4633 = vmatpush1.bf16.msra.mxu0 %v3523
  %4634 = vmatprep.subr.bf16.mxu0 %v3532
  %4635 = vmatpush1.bf16.msra.mxu0 %v3531
  %4636 = vmatprep.subr.bf16.mxu0 %v3540
  %4637 = vmatpush1.bf16.msra.mxu0 %v3539
  %4638 = vmatprep.subr.bf16.mxu0 %v3548
  %4639 = vmatpush1.bf16.msra.mxu0 %v3547
  %4640 = vmatprep.subr.bf16.mxu0 %v3556
  %4641 = vmatpush1.bf16.msra.mxu0 %v3555
  %4642 = vmatprep.subr.bf16.mxu0 %v3564
  %4643 = vmatpush1.bf16.msra.mxu0 %v3563
  %4644 = vmatprep.subr.bf16.mxu0 %v3572
  %4645 = vmatpush1.bf16.msra.mxu0 %v3571
  %4646 = vmatprep.subr.bf16.mxu0 %v3580
  %4647 = vmatpush1.bf16.msra.mxu0 %v3579
  %4648 = vmatprep.subr.bf16.mxu0 %v3588
  %4649 = vmatpush1.bf16.msra.mxu0 %v3587
  %4650 = vmatprep.subr.bf16.mxu0 %v3596
  %4651 = vmatpush1.bf16.msra.mxu0 %v3595
  %4652 = vmatprep.subr.bf16.mxu0 %v3604
  %4653 = vmatpush1.bf16.msra.mxu0 %v3603
  %4654 = vmatprep.subr.bf16.mxu0 %v3612
  %4655 = vmatpush1.bf16.msra.mxu0 %v3611
  %4656 = vmatprep.subr.bf16.mxu0 %v3620
  %4657 = vmatpush1.bf16.msra.mxu0 %v3619
  %4658 = vmatprep.subr.bf16.mxu0 %v3628
  %4659 = vmatpush1.bf16.msra.mxu0 %v3627
  %4660 = vmatprep.subr.bf16.mxu0 %v3636
  %4661 = vmatpush1.bf16.msra.mxu0 %v3635
  %4662 = vmatprep.subr.bf16.mxu0 %v3644
  %4663 = vmatpush1.bf16.msra.mxu0 %v3643
  %4664 = vmatprep.mubr.bf16.mxu0 %v1044
  %4665 = vmatmul.mubr.bf16.gmra.mrb[0].mxu0 %v1043
  %v4666 = vpop.f32.mrb[0].mxu0
  %v4667 = vadd.f32 %v4624, %v4666
  %v4668 = vpop.f32.mrb[0].mxu0
  %v4669 = vadd.f32 %v4626, %v4668
  %v4670 = vpop.f32.mrb[0].mxu0
  %v4671 = vadd.f32 %v4628, %v4670
  %v4672 = vpop.f32.mrb[0].mxu0
  %v4673 = vadd.f32 %v4630, %v4672
  %4674 = vdwg.mxu0
  %4675 = vmatprep.subr.bf16.mxu0 %v3142
  %4676 = vmatpush1.bf16.msra.mxu0 %v3141
  %4677 = vmatprep.subr.bf16.mxu0 %v3150
  %4678 = vmatpush1.bf16.msra.mxu0 %v3149
  %4679 = vmatprep.subr.bf16.mxu0 %v3158
  %4680 = vmatpush1.bf16.msra.mxu0 %v3157
  %4681 = vmatprep.subr.bf16.mxu0 %v3166
  %4682 = vmatpush1.bf16.msra.mxu0 %v3165
  %4683 = vmatprep.subr.bf16.mxu0 %v3174
  %4684 = vmatpush1.bf16.msra.mxu0 %v3173
  %4685 = vmatprep.subr.bf16.mxu0 %v3182
  %4686 = vmatpush1.bf16.msra.mxu0 %v3181
  %4687 = vmatprep.subr.bf16.mxu0 %v3190
  %4688 = vmatpush1.bf16.msra.mxu0 %v3189
  %4689 = vmatprep.subr.bf16.mxu0 %v3198
  %4690 = vmatpush1.bf16.msra.mxu0 %v3197
  %4691 = vmatprep.subr.bf16.mxu0 %v3206
  %4692 = vmatpush1.bf16.msra.mxu0 %v3205
  %4693 = vmatprep.subr.bf16.mxu0 %v3214
  %4694 = vmatpush1.bf16.msra.mxu0 %v3213
  %4695 = vmatprep.subr.bf16.mxu0 %v3222
  %4696 = vmatpush1.bf16.msra.mxu0 %v3221
  %4697 = vmatprep.subr.bf16.mxu0 %v3230
  %4698 = vmatpush1.bf16.msra.mxu0 %v3229
  %4699 = vmatprep.subr.bf16.mxu0 %v3238
  %4700 = vmatpush1.bf16.msra.mxu0 %v3237
  %4701 = vmatprep.subr.bf16.mxu0 %v3246
  %4702 = vmatpush1.bf16.msra.mxu0 %v3245
  %4703 = vmatprep.subr.bf16.mxu0 %v3254
  %4704 = vmatpush1.bf16.msra.mxu0 %v3253
  %4705 = vmatprep.subr.bf16.mxu0 %v3262
  %4706 = vmatpush1.bf16.msra.mxu0 %v3261
  %4707 = vmatprep.mubr.bf16.mxu0 %v1038
  %4708 = vmatmul.mubr.bf16.gmra.mrb[0].mxu0 %v1037
  %v4709 = vpop.f32.mrb[0].mxu0
  %v4710 = vadd.f32 %v1586, %v4709
  %v4711 = vpop.f32.mrb[0].mxu0
  %v4712 = vadd.f32 %v1590, %v4711
  %v4713 = vpop.f32.mrb[0].mxu0
  %v4714 = vadd.f32 %v1586, %v4713
  %v4715 = vpop.f32.mrb[0].mxu0
  %v4716 = vadd.f32 %v1590, %v4715
  %4717 = vdwg.mxu0
  %4718 = vmatprep.subr.bf16.mxu0 %v3270
  %4719 = vmatpush1.bf16.msra.mxu0 %v3269
  %4720 = vmatprep.subr.bf16.mxu0 %v3278
  %4721 = vmatpush1.bf16.msra.mxu0 %v3277
  %4722 = vmatprep.subr.bf16.mxu0 %v3286
  %4723 = vmatpush1.bf16.msra.mxu0 %v3285
  %4724 = vmatprep.subr.bf16.mxu0 %v3294
  %4725 = vmatpush1.bf16.msra.mxu0 %v3293
  %4726 = vmatprep.subr.bf16.mxu0 %v3302
  %4727 = vmatpush1.bf16.msra.mxu0 %v3301
  %4728 = vmatprep.subr.bf16.mxu0 %v3310
  %4729 = vmatpush1.bf16.msra.mxu0 %v3309
  %4730 = vmatprep.subr.bf16.mxu0 %v3318
  %4731 = vmatpush1.bf16.msra.mxu0 %v3317
  %4732 = vmatprep.subr.bf16.mxu0 %v3326
  %4733 = vmatpush1.bf16.msra.mxu0 %v3325
  %4734 = vmatprep.subr.bf16.mxu0 %v3334
  %4735 = vmatpush1.bf16.msra.mxu0 %v3333
  %4736 = vmatprep.subr.bf16.mxu0 %v3342
  %4737 = vmatpush1.bf16.msra.mxu0 %v3341
  %4738 = vmatprep.subr.bf16.mxu0 %v3350
  %4739 = vmatpush1.bf16.msra.mxu0 %v3349
  %4740 = vmatprep.subr.bf16.mxu0 %v3358
  %4741 = vmatpush1.bf16.msra.mxu0 %v3357
  %4742 = vmatprep.subr.bf16.mxu0 %v3366
  %4743 = vmatpush1.bf16.msra.mxu0 %v3365
  %4744 = vmatprep.subr.bf16.mxu0 %v3374
  %4745 = vmatpush1.bf16.msra.mxu0 %v3373
  %4746 = vmatprep.subr.bf16.mxu0 %v3382
  %4747 = vmatpush1.bf16.msra.mxu0 %v3381
  %4748 = vmatprep.subr.bf16.mxu0 %v3390
  %4749 = vmatpush1.bf16.msra.mxu0 %v3389
  %4750 = vmatprep.mubr.bf16.mxu0 %v1040
  %4751 = vmatmul.mubr.bf16.gmra.mrb[0].mxu0 %v1039
  %v4752 = vpop.f32.mrb[0].mxu0
  %v4753 = vadd.f32 %v4710, %v4752
  %v4754 = vpop.f32.mrb[0].mxu0
  %v4755 = vadd.f32 %v4712, %v4754
  %v4756 = vpop.f32.mrb[0].mxu0
  %v4757 = vadd.f32 %v4714, %v4756
  %v4758 = vpop.f32.mrb[0].mxu0
  %v4759 = vadd.f32 %v4716, %v4758
  %4760 = vdwg.mxu0
  %4761 = vmatprep.subr.bf16.mxu0 %v3398
  %4762 = vmatpush1.bf16.msra.mxu0 %v3397
  %4763 = vmatprep.subr.bf16.mxu0 %v3406
  %4764 = vmatpush1.bf16.msra.mxu0 %v3405
  %4765 = vmatprep.subr.bf16.mxu0 %v3414
  %4766 = vmatpush1.bf16.msra.mxu0 %v3413
  %4767 = vmatprep.subr.bf16.mxu0 %v3422
  %4768 = vmatpush1.bf16.msra.mxu0 %v3421
  %4769 = vmatprep.subr.bf16.mxu0 %v3430
  %4770 = vmatpush1.bf16.msra.mxu0 %v3429
  %4771 = vmatprep.subr.bf16.mxu0 %v3438
  %4772 = vmatpush1.bf16.msra.mxu0 %v3437
  %4773 = vmatprep.subr.bf16.mxu0 %v3446
  %4774 = vmatpush1.bf16.msra.mxu0 %v3445
  %4775 = vmatprep.subr.bf16.mxu0 %v3454
  %4776 = vmatpush1.bf16.msra.mxu0 %v3453
  %4777 = vmatprep.subr.bf16.mxu0 %v3462
  %4778 = vmatpush1.bf16.msra.mxu0 %v3461
  %4779 = vmatprep.subr.bf16.mxu0 %v3470
  %4780 = vmatpush1.bf16.msra.mxu0 %v3469
  %4781 = vmatprep.subr.bf16.mxu0 %v3478
  %4782 = vmatpush1.bf16.msra.mxu0 %v3477
  %4783 = vmatprep.subr.bf16.mxu0 %v3486
  %4784 = vmatpush1.bf16.msra.mxu0 %v3485
  %4785 = vmatprep.subr.bf16.mxu0 %v3494
  %4786 = vmatpush1.bf16.msra.mxu0 %v3493
  %4787 = vmatprep.subr.bf16.mxu0 %v3502
  %4788 = vmatpush1.bf16.msra.mxu0 %v3501
  %4789 = vmatprep.subr.bf16.mxu0 %v3510
  %4790 = vmatpush1.bf16.msra.mxu0 %v3509
  %4791 = vmatprep.subr.bf16.mxu0 %v3518
  %4792 = vmatpush1.bf16.msra.mxu0 %v3517
  %4793 = vmatprep.mubr.bf16.mxu0 %v1042
  %4794 = vmatmul.mubr.bf16.gmra.mrb[0].mxu0 %v1041
  %v4795 = vpop.f32.mrb[0].mxu0
  %v4796 = vadd.f32 %v4753, %v4795
  %v4797 = vpop.f32.mrb[0].mxu0
  %v4798 = vadd.f32 %v4755, %v4797
  %v4799 = vpop.f32.mrb[0].mxu0
  %v4800 = vadd.f32 %v4757, %v4799
  %v4801 = vpop.f32.mrb[0].mxu0
  %v4802 = vadd.f32 %v4759, %v4801
  %4803 = vdwg.mxu0
  %4804 = vmatprep.subr.bf16.mxu0 %v3526
  %4805 = vmatpush1.bf16.msra.mxu0 %v3525
  %4806 = vmatprep.subr.bf16.mxu0 %v3534
  %4807 = vmatpush1.bf16.msra.mxu0 %v3533
  %4808 = vmatprep.subr.bf16.mxu0 %v3542
  %4809 = vmatpush1.bf16.msra.mxu0 %v3541
  %4810 = vmatprep.subr.bf16.mxu0 %v3550
  %4811 = vmatpush1.bf16.msra.mxu0 %v3549
  %4812 = vmatprep.subr.bf16.mxu0 %v3558
  %4813 = vmatpush1.bf16.msra.mxu0 %v3557
  %4814 = vmatprep.subr.bf16.mxu0 %v3566
  %4815 = vmatpush1.bf16.msra.mxu0 %v3565
  %4816 = vmatprep.subr.bf16.mxu0 %v3574
  %4817 = vmatpush1.bf16.msra.mxu0 %v3573
  %4818 = vmatprep.subr.bf16.mxu0 %v3582
  %4819 = vmatpush1.bf16.msra.mxu0 %v3581
  %4820 = vmatprep.subr.bf16.mxu0 %v3590
  %4821 = vmatpush1.bf16.msra.mxu0 %v3589
  %4822 = vmatprep.subr.bf16.mxu0 %v3598
  %4823 = vmatpush1.bf16.msra.mxu0 %v3597
  %4824 = vmatprep.subr.bf16.mxu0 %v3606
  %4825 = vmatpush1.bf16.msra.mxu0 %v3605
  %4826 = vmatprep.subr.bf16.mxu0 %v3614
  %4827 = vmatpush1.bf16.msra.mxu0 %v3613
  %4828 = vmatprep.subr.bf16.mxu0 %v3622
  %4829 = vmatpush1.bf16.msra.mxu0 %v3621
  %4830 = vmatprep.subr.bf16.mxu0 %v3630
  %4831 = vmatpush1.bf16.msra.mxu0 %v3629
  %4832 = vmatprep.subr.bf16.mxu0 %v3638
  %4833 = vmatpush1.bf16.msra.mxu0 %v3637
  %4834 = vmatprep.subr.bf16.mxu0 %v3646
  %4835 = vmatpush1.bf16.msra.mxu0 %v3645
  %4836 = vmatprep.mubr.bf16.mxu0 %v1044
  %4837 = vmatmul.mubr.bf16.gmra.mrb[0].mxu0 %v1043
  %v4838 = vpop.f32.mrb[0].mxu0
  %v4839 = vadd.f32 %v4796, %v4838
  %v4840 = vpop.f32.mrb[0].mxu0
  %v4841 = vadd.f32 %v4798, %v4840
  %v4842 = vpop.f32.mrb[0].mxu0
  %v4843 = vadd.f32 %v4800, %v4842
  %v4844 = vpop.f32.mrb[0].mxu0
  %v4845 = vadd.f32 %v4802, %v4844
  %4846 = vdwg.mxu0
  %v4847 = vmax.f32 %v4323, 0.0
  %v4848 = vmax.f32 %v4325, 0.0
  %v4849 = vmax.f32 %v4495, 0.0
  %v4850 = vmax.f32 %v4497, 0.0
  %v4851 = vmax.f32 %v4667, 0.0
  %v4852 = vmax.f32 %v4669, 0.0
  %v4853 = vmax.f32 %v4839, 0.0
  %v4854 = vmax.f32 %v4841, 0.0
  %v4855 = vmax.f32 %v4327, 0.0
  %v4856 = vmax.f32 %v4329, 0.0
  %v4857 = vmax.f32 %v4499, 0.0
  %v4858 = vmax.f32 %v4501, 0.0
  %v4859 = vmax.f32 %v4671, 0.0
  %v4860 = vmax.f32 %v4673, 0.0
  %v4861 = vmax.f32 %v4843, 0.0
  %v4862 = vmax.f32 %v4845, 0.0
  %v4863 = vpack.c.bf16 %v4855, %v4847
  %v4864 = vpack.c.bf16 %v4856, %v4848
  %v4865 = vpack.c.bf16 %v4857, %v4849
  %v4866 = vpack.c.bf16 %v4858, %v4850
  %v4867 = vpack.c.bf16 %v4859, %v4851
  %v4868 = vpack.c.bf16 %v4860, %v4852
  %v4869 = vpack.c.bf16 %v4861, %v4853
  %v4870 = vpack.c.bf16 %v4862, %v4854
  %v4871 = vld [vmem:[%s5] sm:$0xf]
  %v4872 = vld [vmem:[%s5 + $0x4] sm:$0xf]
  %v4873 = vld [vmem:[%s5 + $0x8] sm:$0xf]
  %v4874 = vld [vmem:[%s5 + $0xc] sm:$0xf]
  %v4875 = vld [vmem:[%s5 + $0x10] sm:$0xf]
  %v4876 = vld [vmem:[%s5 + $0x14] sm:$0xf]
  %v4877 = vld [vmem:[%s5 + $0x18] sm:$0xf]
  %v4878 = vld [vmem:[%s5 + $0x1c] sm:$0xf]
  %v4879 = vld [vmem:[%s5 + $0x20] sm:$0xf]
  %v4880 = vld [vmem:[%s5 + $0x24] sm:$0xf]
  %v4881 = vld [vmem:[%s5 + $0x28] sm:$0xf]
  %v4882 = vld [vmem:[%s5 + $0x2c] sm:$0xf]
  %v4883 = vld [vmem:[%s5 + $0x30] sm:$0xf]
  %v4884 = vld [vmem:[%s5 + $0x34] sm:$0xf]
  %v4885 = vld [vmem:[%s5 + $0x38] sm:$0xf]
  %v4886 = vld [vmem:[%s5 + $0x3c] sm:$0xf]
  %v4887 = vld [vmem:[%s5 + $0x40] sm:$0xf]
  %v4888 = vld [vmem:[%s5 + $0x44] sm:$0xf]
  %v4889 = vld [vmem:[%s5 + $0x48] sm:$0xf]
  %v4890 = vld [vmem:[%s5 + $0x4c] sm:$0xf]
  %v4891 = vld [vmem:[%s5 + $0x50] sm:$0xf]
  %v4892 = vld [vmem:[%s5 + $0x54] sm:$0xf]
  %v4893 = vld [vmem:[%s5 + $0x58] sm:$0xf]
  %v4894 = vld [vmem:[%s5 + $0x5c] sm:$0xf]
  %v4895 = vld [vmem:[%s5 + $0x60] sm:$0xf]
  %v4896 = vld [vmem:[%s5 + $0x64] sm:$0xf]
  %v4897 = vld [vmem:[%s5 + $0x68] sm:$0xf]
  %v4898 = vld [vmem:[%s5 + $0x6c] sm:$0xf]
  %v4899 = vld [vmem:[%s5 + $0x70] sm:$0xf]
  %v4900 = vld [vmem:[%s5 + $0x74] sm:$0xf]
  %v4901 = vld [vmem:[%s5 + $0x78] sm:$0xf]
  %v4902 = vld [vmem:[%s5 + $0x7c] sm:$0xf]
  %v4903 = vld [vmem:[%s5 + $0x80] sm:$0xf]
  %v4904 = vld [vmem:[%s5 + $0x84] sm:$0xf]
  %v4905 = vld [vmem:[%s5 + $0x88] sm:$0xf]
  %v4906 = vld [vmem:[%s5 + $0x8c] sm:$0xf]
  %v4907 = vld [vmem:[%s5 + $0x90] sm:$0xf]
  %v4908 = vld [vmem:[%s5 + $0x94] sm:$0xf]
  %v4909 = vld [vmem:[%s5 + $0x98] sm:$0xf]
  %v4910 = vld [vmem:[%s5 + $0x9c] sm:$0xf]
  %v4911 = vld [vmem:[%s5 + $0xa0] sm:$0xf]
  %v4912 = vld [vmem:[%s5 + $0xa4] sm:$0xf]
  %v4913 = vld [vmem:[%s5 + $0xa8] sm:$0xf]
  %v4914 = vld [vmem:[%s5 + $0xac] sm:$0xf]
  %v4915 = vld [vmem:[%s5 + $0xb0] sm:$0xf]
  %v4916 = vld [vmem:[%s5 + $0xb4] sm:$0xf]
  %v4917 = vld [vmem:[%s5 + $0xb8] sm:$0xf]
  %v4918 = vld [vmem:[%s5 + $0xbc] sm:$0xf]
  %v4919 = vld [vmem:[%s5 + $0xc0] sm:$0xf]
  %v4920 = vld [vmem:[%s5 + $0xc4] sm:$0xf]
  %v4921 = vld [vmem:[%s5 + $0xc8] sm:$0xf]
  %v4922 = vld [vmem:[%s5 + $0xcc] sm:$0xf]
  %v4923 = vld [vmem:[%s5 + $0xd0] sm:$0xf]
  %v4924 = vld [vmem:[%s5 + $0xd4] sm:$0xf]
  %v4925 = vld [vmem:[%s5 + $0xd8] sm:$0xf]
  %v4926 = vld [vmem:[%s5 + $0xdc] sm:$0xf]
  %v4927 = vld [vmem:[%s5 + $0xe0] sm:$0xf]
  %v4928 = vld [vmem:[%s5 + $0xe4] sm:$0xf]
  %v4929 = vld [vmem:[%s5 + $0xe8] sm:$0xf]
  %v4930 = vld [vmem:[%s5 + $0xec] sm:$0xf]
  %v4931 = vld [vmem:[%s5 + $0xf0] sm:$0xf]
  %v4932 = vld [vmem:[%s5 + $0xf4] sm:$0xf]
  %v4933 = vld [vmem:[%s5 + $0xf8] sm:$0xf]
  %v4934 = vld [vmem:[%s5 + $0xfc] sm:$0xf]
  %v4935 = vld [vmem:[%s5 + $0x100] sm:$0xf]
  %v4936 = vld [vmem:[%s5 + $0x104] sm:$0xf]
  %v4937 = vld [vmem:[%s5 + $0x108] sm:$0xf]
  %v4938 = vld [vmem:[%s5 + $0x10c] sm:$0xf]
  %v4939 = vld [vmem:[%s5 + $0x110] sm:$0xf]
  %v4940 = vld [vmem:[%s5 + $0x114] sm:$0xf]
  %v4941 = vld [vmem:[%s5 + $0x118] sm:$0xf]
  %v4942 = vld [vmem:[%s5 + $0x11c] sm:$0xf]
  %v4943 = vld [vmem:[%s5 + $0x120] sm:$0xf]
  %v4944 = vld [vmem:[%s5 + $0x124] sm:$0xf]
  %v4945 = vld [vmem:[%s5 + $0x128] sm:$0xf]
  %v4946 = vld [vmem:[%s5 + $0x12c] sm:$0xf]
  %v4947 = vld [vmem:[%s5 + $0x130] sm:$0xf]
  %v4948 = vld [vmem:[%s5 + $0x134] sm:$0xf]
  %v4949 = vld [vmem:[%s5 + $0x138] sm:$0xf]
  %v4950 = vld [vmem:[%s5 + $0x13c] sm:$0xf]
  %v4951 = vld [vmem:[%s5 + $0x140] sm:$0xf]
  %v4952 = vld [vmem:[%s5 + $0x144] sm:$0xf]
  %v4953 = vld [vmem:[%s5 + $0x148] sm:$0xf]
  %v4954 = vld [vmem:[%s5 + $0x14c] sm:$0xf]
  %v4955 = vld [vmem:[%s5 + $0x150] sm:$0xf]
  %v4956 = vld [vmem:[%s5 + $0x154] sm:$0xf]
  %v4957 = vld [vmem:[%s5 + $0x158] sm:$0xf]
  %v4958 = vld [vmem:[%s5 + $0x15c] sm:$0xf]
  %v4959 = vld [vmem:[%s5 + $0x160] sm:$0xf]
  %v4960 = vld [vmem:[%s5 + $0x164] sm:$0xf]
  %v4961 = vld [vmem:[%s5 + $0x168] sm:$0xf]
  %v4962 = vld [vmem:[%s5 + $0x16c] sm:$0xf]
  %v4963 = vld [vmem:[%s5 + $0x170] sm:$0xf]
  %v4964 = vld [vmem:[%s5 + $0x174] sm:$0xf]
  %v4965 = vld [vmem:[%s5 + $0x178] sm:$0xf]
  %v4966 = vld [vmem:[%s5 + $0x17c] sm:$0xf]
  %v4967 = vld [vmem:[%s5 + $0x180] sm:$0xf]
  %v4968 = vld [vmem:[%s5 + $0x184] sm:$0xf]
  %v4969 = vld [vmem:[%s5 + $0x188] sm:$0xf]
  %v4970 = vld [vmem:[%s5 + $0x18c] sm:$0xf]
  %v4971 = vld [vmem:[%s5 + $0x190] sm:$0xf]
  %v4972 = vld [vmem:[%s5 + $0x194] sm:$0xf]
  %v4973 = vld [vmem:[%s5 + $0x198] sm:$0xf]
  %v4974 = vld [vmem:[%s5 + $0x19c] sm:$0xf]
  %v4975 = vld [vmem:[%s5 + $0x1a0] sm:$0xf]
  %v4976 = vld [vmem:[%s5 + $0x1a4] sm:$0xf]
  %v4977 = vld [vmem:[%s5 + $0x1a8] sm:$0xf]
  %v4978 = vld [vmem:[%s5 + $0x1ac] sm:$0xf]
  %v4979 = vld [vmem:[%s5 + $0x1b0] sm:$0xf]
  %v4980 = vld [vmem:[%s5 + $0x1b4] sm:$0xf]
  %v4981 = vld [vmem:[%s5 + $0x1b8] sm:$0xf]
  %v4982 = vld [vmem:[%s5 + $0x1bc] sm:$0xf]
  %v4983 = vld [vmem:[%s5 + $0x1c0] sm:$0xf]
  %v4984 = vld [vmem:[%s5 + $0x1c4] sm:$0xf]
  %v4985 = vld [vmem:[%s5 + $0x1c8] sm:$0xf]
  %v4986 = vld [vmem:[%s5 + $0x1cc] sm:$0xf]
  %v4987 = vld [vmem:[%s5 + $0x1d0] sm:$0xf]
  %v4988 = vld [vmem:[%s5 + $0x1d4] sm:$0xf]
  %v4989 = vld [vmem:[%s5 + $0x1d8] sm:$0xf]
  %v4990 = vld [vmem:[%s5 + $0x1dc] sm:$0xf]
  %v4991 = vld [vmem:[%s5 + $0x1e0] sm:$0xf]
  %v4992 = vld [vmem:[%s5 + $0x1e4] sm:$0xf]
  %v4993 = vld [vmem:[%s5 + $0x1e8] sm:$0xf]
  %v4994 = vld [vmem:[%s5 + $0x1ec] sm:$0xf]
  %v4995 = vld [vmem:[%s5 + $0x1f0] sm:$0xf]
  %v4996 = vld [vmem:[%s5 + $0x1f4] sm:$0xf]
  %v4997 = vld [vmem:[%s5 + $0x1f8] sm:$0xf]
  %v4998 = vld [vmem:[%s5 + $0x1fc] sm:$0xf]
  %v4999 = vld [vmem:[%s6] sm:$0x1]
  %v5001 = vlaneseq
  %v5002 = vshrl.u32 %v5001, 7
  %v5003 = vsub.s32 0, %v5002
  %v5004 = vrot.slane %v4999, %v5003
  %v5134 = vunpack.c.l.b16 %v4871
  %v5135 = vunpack.c.l.b16 %v4872
  %v5136 = vunpack.c.l.b16 %v4873
  %v5137 = vunpack.c.l.b16 %v4874
  %v5138 = vunpack.c.l.b16 %v4875
  %v5139 = vunpack.c.l.b16 %v4876
  %v5140 = vunpack.c.l.b16 %v4877
  %v5141 = vunpack.c.l.b16 %v4878
  %v5142 = vunpack.c.l.b16 %v4879
  %v5143 = vunpack.c.l.b16 %v4880
  %v5144 = vunpack.c.l.b16 %v4881
  %v5145 = vunpack.c.l.b16 %v4882
  %v5146 = vunpack.c.l.b16 %v4883
  %v5147 = vunpack.c.l.b16 %v4884
  %v5148 = vunpack.c.l.b16 %v4885
  %v5149 = vunpack.c.l.b16 %v4886
  %v5150 = vunpack.c.l.b16 %v4887
  %v5151 = vunpack.c.l.b16 %v4888
  %v5152 = vunpack.c.l.b16 %v4889
  %v5153 = vunpack.c.l.b16 %v4890
  %v5154 = vunpack.c.l.b16 %v4891
  %v5155 = vunpack.c.l.b16 %v4892
  %v5156 = vunpack.c.l.b16 %v4893
  %v5157 = vunpack.c.l.b16 %v4894
  %v5158 = vunpack.c.l.b16 %v4895
  %v5159 = vunpack.c.l.b16 %v4896
  %v5160 = vunpack.c.l.b16 %v4897
  %v5161 = vunpack.c.l.b16 %v4898
  %v5162 = vunpack.c.l.b16 %v4899
  %v5163 = vunpack.c.l.b16 %v4900
  %v5164 = vunpack.c.l.b16 %v4901
  %v5165 = vunpack.c.l.b16 %v4902
  %v5166 = vunpack.c.l.b16 %v4903
  %v5167 = vunpack.c.l.b16 %v4904
  %v5168 = vunpack.c.l.b16 %v4905
  %v5169 = vunpack.c.l.b16 %v4906
  %v5170 = vunpack.c.l.b16 %v4907
  %v5171 = vunpack.c.l.b16 %v4908
  %v5172 = vunpack.c.l.b16 %v4909
  %v5173 = vunpack.c.l.b16 %v4910
  %v5174 = vunpack.c.l.b16 %v4911
  %v5175 = vunpack.c.l.b16 %v4912
  %v5176 = vunpack.c.l.b16 %v4913
  %v5177 = vunpack.c.l.b16 %v4914
  %v5178 = vunpack.c.l.b16 %v4915
  %v5179 = vunpack.c.l.b16 %v4916
  %v5180 = vunpack.c.l.b16 %v4917
  %v5181 = vunpack.c.l.b16 %v4918
  %v5182 = vunpack.c.l.b16 %v4919
  %v5183 = vunpack.c.l.b16 %v4920
  %v5184 = vunpack.c.l.b16 %v4921
  %v5185 = vunpack.c.l.b16 %v4922
  %v5186 = vunpack.c.l.b16 %v4923
  %v5187 = vunpack.c.l.b16 %v4924
  %v5188 = vunpack.c.l.b16 %v4925
  %v5189 = vunpack.c.l.b16 %v4926
  %v5190 = vunpack.c.l.b16 %v4927
  %v5191 = vunpack.c.l.b16 %v4928
  %v5192 = vunpack.c.l.b16 %v4929
  %v5193 = vunpack.c.l.b16 %v4930
  %v5194 = vunpack.c.l.b16 %v4931
  %v5195 = vunpack.c.l.b16 %v4932
  %v5196 = vunpack.c.l.b16 %v4933
  %v5197 = vunpack.c.l.b16 %v4934
  %v5198 = vunpack.c.l.b16 %v4935
  %v5199 = vunpack.c.l.b16 %v4936
  %v5200 = vunpack.c.l.b16 %v4937
  %v5201 = vunpack.c.l.b16 %v4938
  %v5202 = vunpack.c.l.b16 %v4939
  %v5203 = vunpack.c.l.b16 %v4940
  %v5204 = vunpack.c.l.b16 %v4941
  %v5205 = vunpack.c.l.b16 %v4942
  %v5206 = vunpack.c.l.b16 %v4943
  %v5207 = vunpack.c.l.b16 %v4944
  %v5208 = vunpack.c.l.b16 %v4945
  %v5209 = vunpack.c.l.b16 %v4946
  %v5210 = vunpack.c.l.b16 %v4947
  %v5211 = vunpack.c.l.b16 %v4948
  %v5212 = vunpack.c.l.b16 %v4949
  %v5213 = vunpack.c.l.b16 %v4950
  %v5214 = vunpack.c.l.b16 %v4951
  %v5215 = vunpack.c.l.b16 %v4952
  %v5216 = vunpack.c.l.b16 %v4953
  %v5217 = vunpack.c.l.b16 %v4954
  %v5218 = vunpack.c.l.b16 %v4955
  %v5219 = vunpack.c.l.b16 %v4956
  %v5220 = vunpack.c.l.b16 %v4957
  %v5221 = vunpack.c.l.b16 %v4958
  %v5222 = vunpack.c.l.b16 %v4959
  %v5223 = vunpack.c.l.b16 %v4960
  %v5224 = vunpack.c.l.b16 %v4961
  %v5225 = vunpack.c.l.b16 %v4962
  %v5226 = vunpack.c.l.b16 %v4963
  %v5227 = vunpack.c.l.b16 %v4964
  %v5228 = vunpack.c.l.b16 %v4965
  %v5229 = vunpack.c.l.b16 %v4966
  %v5230 = vunpack.c.l.b16 %v4967
  %v5231 = vunpack.c.l.b16 %v4968
  %v5232 = vunpack.c.l.b16 %v4969
  %v5233 = vunpack.c.l.b16 %v4970
  %v5234 = vunpack.c.l.b16 %v4971
  %v5235 = vunpack.c.l.b16 %v4972
  %v5236 = vunpack.c.l.b16 %v4973
  %v5237 = vunpack.c.l.b16 %v4974
  %v5238 = vunpack.c.l.b16 %v4975
  %v5239 = vunpack.c.l.b16 %v4976
  %v5240 = vunpack.c.l.b16 %v4977
  %v5241 = vunpack.c.l.b16 %v4978
  %v5242 = vunpack.c.l.b16 %v4979
  %v5243 = vunpack.c.l.b16 %v4980
  %v5244 = vunpack.c.l.b16 %v4981
  %v5245 = vunpack.c.l.b16 %v4982
  %v5246 = vunpack.c.l.b16 %v4983
  %v5247 = vunpack.c.l.b16 %v4984
  %v5248 = vunpack.c.l.b16 %v4985
  %v5249 = vunpack.c.l.b16 %v4986
  %v5250 = vunpack.c.l.b16 %v4987
  %v5251 = vunpack.c.l.b16 %v4988
  %v5252 = vunpack.c.l.b16 %v4989
  %v5253 = vunpack.c.l.b16 %v4990
  %v5254 = vunpack.c.l.b16 %v4991
  %v5255 = vunpack.c.l.b16 %v4992
  %v5256 = vunpack.c.l.b16 %v4993
  %v5257 = vunpack.c.l.b16 %v4994
  %v5258 = vunpack.c.l.b16 %v4995
  %v5259 = vunpack.c.l.b16 %v4996
  %v5260 = vunpack.c.l.b16 %v4997
  %v5261 = vunpack.c.l.b16 %v4998
  %v5262 = vpack.c.b16 %v5135, %v5134
  %v5263 = vpack.c.b16 %v5137, %v5136
  %v5264 = vpack.c.b16 %v5139, %v5138
  %v5265 = vpack.c.b16 %v5141, %v5140
  %v5266 = vpack.c.b16 %v5143, %v5142
  %v5267 = vpack.c.b16 %v5145, %v5144
  %v5268 = vpack.c.b16 %v5147, %v5146
  %v5269 = vpack.c.b16 %v5149, %v5148
  %v5270 = vpack.c.b16 %v5151, %v5150
  %v5271 = vpack.c.b16 %v5153, %v5152
  %v5272 = vpack.c.b16 %v5155, %v5154
  %v5273 = vpack.c.b16 %v5157, %v5156
  %v5274 = vpack.c.b16 %v5159, %v5158
  %v5275 = vpack.c.b16 %v5161, %v5160
  %v5276 = vpack.c.b16 %v5163, %v5162
  %v5277 = vpack.c.b16 %v5165, %v5164
  %v5278 = vpack.c.b16 %v5167, %v5166
  %v5279 = vpack.c.b16 %v5169, %v5168
  %v5280 = vpack.c.b16 %v5171, %v5170
  %v5281 = vpack.c.b16 %v5173, %v5172
  %v5282 = vpack.c.b16 %v5175, %v5174
  %v5283 = vpack.c.b16 %v5177, %v5176
  %v5284 = vpack.c.b16 %v5179, %v5178
  %v5285 = vpack.c.b16 %v5181, %v5180
  %v5286 = vpack.c.b16 %v5183, %v5182
  %v5287 = vpack.c.b16 %v5185, %v5184
  %v5288 = vpack.c.b16 %v5187, %v5186
  %v5289 = vpack.c.b16 %v5189, %v5188
  %v5290 = vpack.c.b16 %v5191, %v5190
  %v5291 = vpack.c.b16 %v5193, %v5192
  %v5292 = vpack.c.b16 %v5195, %v5194
  %v5293 = vpack.c.b16 %v5197, %v5196
  %v5294 = vpack.c.b16 %v5199, %v5198
  %v5295 = vpack.c.b16 %v5201, %v5200
  %v5296 = vpack.c.b16 %v5203, %v5202
  %v5297 = vpack.c.b16 %v5205, %v5204
  %v5298 = vpack.c.b16 %v5207, %v5206
  %v5299 = vpack.c.b16 %v5209, %v5208
  %v5300 = vpack.c.b16 %v5211, %v5210
  %v5301 = vpack.c.b16 %v5213, %v5212
  %v5302 = vpack.c.b16 %v5215, %v5214
  %v5303 = vpack.c.b16 %v5217, %v5216
  %v5304 = vpack.c.b16 %v5219, %v5218
  %v5305 = vpack.c.b16 %v5221, %v5220
  %v5306 = vpack.c.b16 %v5223, %v5222
  %v5307 = vpack.c.b16 %v5225, %v5224
  %v5308 = vpack.c.b16 %v5227, %v5226
  %v5309 = vpack.c.b16 %v5229, %v5228
  %v5310 = vpack.c.b16 %v5231, %v5230
  %v5311 = vpack.c.b16 %v5233, %v5232
  %v5312 = vpack.c.b16 %v5235, %v5234
  %v5313 = vpack.c.b16 %v5237, %v5236
  %v5314 = vpack.c.b16 %v5239, %v5238
  %v5315 = vpack.c.b16 %v5241, %v5240
  %v5316 = vpack.c.b16 %v5243, %v5242
  %v5317 = vpack.c.b16 %v5245, %v5244
  %v5318 = vpack.c.b16 %v5247, %v5246
  %v5319 = vpack.c.b16 %v5249, %v5248
  %v5320 = vpack.c.b16 %v5251, %v5250
  %v5321 = vpack.c.b16 %v5253, %v5252
  %v5322 = vpack.c.b16 %v5255, %v5254
  %v5323 = vpack.c.b16 %v5257, %v5256
  %v5324 = vpack.c.b16 %v5259, %v5258
  %v5325 = vpack.c.b16 %v5261, %v5260
  %5390 = vmatprep.subr.bf16.mxu0 0
  %5391 = vmatpush1.bf16.msra.mxu0 %v5262
  %5392 = vmatprep.subr.bf16.mxu0 0
  %5393 = vmatpush1.bf16.msra.mxu0 %v5263
  %5394 = vmatprep.subr.bf16.mxu0 0
  %5395 = vmatpush1.bf16.msra.mxu0 %v5264
  %5396 = vmatprep.subr.bf16.mxu0 0
  %5397 = vmatpush1.bf16.msra.mxu0 %v5265
  %5398 = vmatprep.subr.bf16.mxu0 0
  %5399 = vmatpush1.bf16.msra.mxu0 %v5266
  %5400 = vmatprep.subr.bf16.mxu0 0
  %5401 = vmatpush1.bf16.msra.mxu0 %v5267
  %5402 = vmatprep.subr.bf16.mxu0 0
  %5403 = vmatpush1.bf16.msra.mxu0 %v5268
  %5404 = vmatprep.subr.bf16.mxu0 0
  %5405 = vmatpush1.bf16.msra.mxu0 %v5269
  %5406 = vmatprep.subr.bf16.mxu0 0
  %5407 = vmatpush1.bf16.msra.mxu0 %v5270
  %5408 = vmatprep.subr.bf16.mxu0 0
  %5409 = vmatpush1.bf16.msra.mxu0 %v5271
  %5410 = vmatprep.subr.bf16.mxu0 0
  %5411 = vmatpush1.bf16.msra.mxu0 %v5272
  %5412 = vmatprep.subr.bf16.mxu0 0
  %5413 = vmatpush1.bf16.msra.mxu0 %v5273
  %5414 = vmatprep.subr.bf16.mxu0 0
  %5415 = vmatpush1.bf16.msra.mxu0 %v5274
  %5416 = vmatprep.subr.bf16.mxu0 0
  %5417 = vmatpush1.bf16.msra.mxu0 %v5275
  %5418 = vmatprep.subr.bf16.mxu0 0
  %5419 = vmatpush1.bf16.msra.mxu0 %v5276
  %5420 = vmatprep.subr.bf16.mxu0 0
  %5421 = vmatpush1.bf16.msra.mxu0 %v5277
  %5422 = vmatprep.mubr.bf16.mxu0 %v4864
  %5423 = vmatmul.mubr.bf16.gmra.mrb[0].mxu0 %v4863
  %v5424 = vpop.f32.mrb[0].mxu0
  %v5425 = vadd.f32 %v5004, %v5424
  %v5426 = vpop.f32.mrb[0].mxu0
  %v5427 = vpop.f32.mrb[0].mxu0
  %v5428 = vadd.f32 %v5004, %v5427
  %v5429 = vpop.f32.mrb[0].mxu0
  %5430 = vdwg.mxu0
  %5431 = vmatprep.subr.bf16.mxu0 0
  %5432 = vmatpush1.bf16.msra.mxu0 %v5278
  %5433 = vmatprep.subr.bf16.mxu0 0
  %5434 = vmatpush1.bf16.msra.mxu0 %v5279
  %5435 = vmatprep.subr.bf16.mxu0 0
  %5436 = vmatpush1.bf16.msra.mxu0 %v5280
  %5437 = vmatprep.subr.bf16.mxu0 0
  %5438 = vmatpush1.bf16.msra.mxu0 %v5281
  %5439 = vmatprep.subr.bf16.mxu0 0
  %5440 = vmatpush1.bf16.msra.mxu0 %v5282
  %5441 = vmatprep.subr.bf16.mxu0 0
  %5442 = vmatpush1.bf16.msra.mxu0 %v5283
  %5443 = vmatprep.subr.bf16.mxu0 0
  %5444 = vmatpush1.bf16.msra.mxu0 %v5284
  %5445 = vmatprep.subr.bf16.mxu0 0
  %5446 = vmatpush1.bf16.msra.mxu0 %v5285
  %5447 = vmatprep.subr.bf16.mxu0 0
  %5448 = vmatpush1.bf16.msra.mxu0 %v5286
  %5449 = vmatprep.subr.bf16.mxu0 0
  %5450 = vmatpush1.bf16.msra.mxu0 %v5287
  %5451 = vmatprep.subr.bf16.mxu0 0
  %5452 = vmatpush1.bf16.msra.mxu0 %v5288
  %5453 = vmatprep.subr.bf16.mxu0 0
  %5454 = vmatpush1.bf16.msra.mxu0 %v5289
  %5455 = vmatprep.subr.bf16.mxu0 0
  %5456 = vmatpush1.bf16.msra.mxu0 %v5290
  %5457 = vmatprep.subr.bf16.mxu0 0
  %5458 = vmatpush1.bf16.msra.mxu0 %v5291
  %5459 = vmatprep.subr.bf16.mxu0 0
  %5460 = vmatpush1.bf16.msra.mxu0 %v5292
  %5461 = vmatprep.subr.bf16.mxu0 0
  %5462 = vmatpush1.bf16.msra.mxu0 %v5293
  %5463 = vmatprep.mubr.bf16.mxu0 %v4866
  %5464 = vmatmul.mubr.bf16.gmra.mrb[0].mxu0 %v4865
  %v5465 = vpop.f32.mrb[0].mxu0
  %v5466 = vadd.f32 %v5425, %v5465
  %v5467 = vpop.f32.mrb[0].mxu0
  %v5468 = vpop.f32.mrb[0].mxu0
  %v5469 = vadd.f32 %v5428, %v5468
  %v5470 = vpop.f32.mrb[0].mxu0
  %5471 = vdwg.mxu0
  %5472 = vmatprep.subr.bf16.mxu0 0
  %5473 = vmatpush1.bf16.msra.mxu0 %v5294
  %5474 = vmatprep.subr.bf16.mxu0 0
  %5475 = vmatpush1.bf16.msra.mxu0 %v5295
  %5476 = vmatprep.subr.bf16.mxu0 0
  %5477 = vmatpush1.bf16.msra.mxu0 %v5296
  %5478 = vmatprep.subr.bf16.mxu0 0
  %5479 = vmatpush1.bf16.msra.mxu0 %v5297
  %5480 = vmatprep.subr.bf16.mxu0 0
  %5481 = vmatpush1.bf16.msra.mxu0 %v5298
  %5482 = vmatprep.subr.bf16.mxu0 0
  %5483 = vmatpush1.bf16.msra.mxu0 %v5299
  %5484 = vmatprep.subr.bf16.mxu0 0
  %5485 = vmatpush1.bf16.msra.mxu0 %v5300
  %5486 = vmatprep.subr.bf16.mxu0 0
  %5487 = vmatpush1.bf16.msra.mxu0 %v5301
  %5488 = vmatprep.subr.bf16.mxu0 0
  %5489 = vmatpush1.bf16.msra.mxu0 %v5302
  %5490 = vmatprep.subr.bf16.mxu0 0
  %5491 = vmatpush1.bf16.msra.mxu0 %v5303
  %5492 = vmatprep.subr.bf16.mxu0 0
  %5493 = vmatpush1.bf16.msra.mxu0 %v5304
  %5494 = vmatprep.subr.bf16.mxu0 0
  %5495 = vmatpush1.bf16.msra.mxu0 %v5305
  %5496 = vmatprep.subr.bf16.mxu0 0
  %5497 = vmatpush1.bf16.msra.mxu0 %v5306
  %5498 = vmatprep.subr.bf16.mxu0 0
  %5499 = vmatpush1.bf16.msra.mxu0 %v5307
  %5500 = vmatprep.subr.bf16.mxu0 0
  %5501 = vmatpush1.bf16.msra.mxu0 %v5308
  %5502 = vmatprep.subr.bf16.mxu0 0
  %5503 = vmatpush1.bf16.msra.mxu0 %v5309
  %5504 = vmatprep.mubr.bf16.mxu0 %v4868
  %5505 = vmatmul.mubr.bf16.gmra.mrb[0].mxu0 %v4867
  %v5506 = vpop.f32.mrb[0].mxu0
  %v5507 = vadd.f32 %v5466, %v5506
  %v5508 = vpop.f32.mrb[0].mxu0
  %v5509 = vpop.f32.mrb[0].mxu0
  %v5510 = vadd.f32 %v5469, %v5509
  %v5511 = vpop.f32.mrb[0].mxu0
  %5512 = vdwg.mxu0
  %5513 = vmatprep.subr.bf16.mxu0 0
  %5514 = vmatpush1.bf16.msra.mxu0 %v5310
  %5515 = vmatprep.subr.bf16.mxu0 0
  %5516 = vmatpush1.bf16.msra.mxu0 %v5311
  %5517 = vmatprep.subr.bf16.mxu0 0
  %5518 = vmatpush1.bf16.msra.mxu0 %v5312
  %5519 = vmatprep.subr.bf16.mxu0 0
  %5520 = vmatpush1.bf16.msra.mxu0 %v5313
  %5521 = vmatprep.subr.bf16.mxu0 0
  %5522 = vmatpush1.bf16.msra.mxu0 %v5314
  %5523 = vmatprep.subr.bf16.mxu0 0
  %5524 = vmatpush1.bf16.msra.mxu0 %v5315
  %5525 = vmatprep.subr.bf16.mxu0 0
  %5526 = vmatpush1.bf16.msra.mxu0 %v5316
  %5527 = vmatprep.subr.bf16.mxu0 0
  %5528 = vmatpush1.bf16.msra.mxu0 %v5317
  %5529 = vmatprep.subr.bf16.mxu0 0
  %5530 = vmatpush1.bf16.msra.mxu0 %v5318
  %5531 = vmatprep.subr.bf16.mxu0 0
  %5532 = vmatpush1.bf16.msra.mxu0 %v5319
  %5533 = vmatprep.subr.bf16.mxu0 0
  %5534 = vmatpush1.bf16.msra.mxu0 %v5320
  %5535 = vmatprep.subr.bf16.mxu0 0
  %5536 = vmatpush1.bf16.msra.mxu0 %v5321
  %5537 = vmatprep.subr.bf16.mxu0 0
  %5538 = vmatpush1.bf16.msra.mxu0 %v5322
  %5539 = vmatprep.subr.bf16.mxu0 0
  %5540 = vmatpush1.bf16.msra.mxu0 %v5323
  %5541 = vmatprep.subr.bf16.mxu0 0
  %5542 = vmatpush1.bf16.msra.mxu0 %v5324
  %5543 = vmatprep.subr.bf16.mxu0 0
  %5544 = vmatpush1.bf16.msra.mxu0 %v5325
  %5545 = vmatprep.mubr.bf16.mxu0 %v4870
  %5546 = vmatmul.mubr.bf16.gmra.mrb[0].mxu0 %v4869
  %v5547 = vpop.f32.mrb[0].mxu0
  %v5548 = vadd.f32 %v5507, %v5547
  %v5549 = vpop.f32.mrb[0].mxu0
  %v5550 = vpop.f32.mrb[0].mxu0
  %v5551 = vadd.f32 %v5510, %v5550
  %v5552 = vpop.f32.mrb[0].mxu0
  %5553 = vdwg.mxu0
  %5554 = vst [vmem:[%s7] sm:$0xff] %v5548
  %5555 = vst [vmem:[%s7 + $0x8] sm:$0xff] %v5551
  // Predicated region
  $region30: #{deep_q_forward.7} parent=0 // pred_check
    _
  $region31: #{deep_q_forward.7} parent=0 // pred_check_branch
    %5557 = sbr.rel (0) target = $region33
  $region32: #{deep_q_forward.7} parent=0 // pred_region
    _
  $region33: #{deep_q_forward.7} parent=0 // pred_fallthru
    _
  // Predicated region
  $region34: #{deep_q_forward.7} parent=0 // pred_check
    _
  $region35: #{deep_q_forward.7} parent=0 // pred_check_branch
    %5559 = sbr.rel (0) target = $region37
  $region36: #{deep_q_forward.7} parent=0 // pred_region
    _
  $region37: #{deep_q_forward.7} parent=0 // pred_fallthru
    _

</llo_original>
